<compile_context>
chip_gen: v5e
topology: v5e:2x2
jax: 0.10.0
libtpu: 0.0.40
codegen_flags: <defaults>
</compile_context>

<pallas_src>
import functools

import jax
import jax.numpy as jnp
from jax.experimental import pallas as pl
from jax.experimental.pallas import tpu as pltpu


# ------------------------------- constants --------------------------------

X_DIM = 28 * 28      # 784 (torch x.view(-1, 784))
X_PAD = 896          # 784 padded up to a multiple of 128
ZP = 128             # padded lane width per latent head (mu / log_var)
H1 = 512
H2 = 256


# ----------------------------- Pallas kernel ------------------------------

def _vae_fused_kernel(x_ref, eps_ref,
                      w1_ref, b1_ref, w2_ref, b2_ref,
                      wh_ref, bh_ref,
                      w4_ref, b4_ref, w5_ref, b5_ref, w6_ref, b6_ref,
                      recon_ref, heads_ref):
    """Full VAE forward for one batch tile.

    Weights are bf16 (MXU native); accumulation / bias / activations are f32.
    Outputs:
      recon_ref : (BT, X_PAD)   sigmoid probabilities (cols >= 784 are junk pad)
      heads_ref : (BT, 2*ZP)    cols [0:z) = mu, cols [ZP:ZP+z) = log_var
    """
    bf16 = jnp.bfloat16
    f32 = jnp.float32

    # ---- encoder ----
    x = x_ref[...].astype(bf16)
    h = jnp.dot(x, w1_ref[...], preferred_element_type=f32) + b1_ref[...]
    h = jnp.maximum(h, 0.0).astype(bf16)
    h = jnp.dot(h, w2_ref[...], preferred_element_type=f32) + b2_ref[...]
    h = jnp.maximum(h, 0.0).astype(bf16)

    # fused mu / log_var heads (single lane-dense matmul, 2*ZP output lanes)
    heads = jnp.dot(h, wh_ref[...], preferred_element_type=f32) + bh_ref[...]
    heads_ref[...] = heads

    # ---- reparameterization: z = mu + eps * exp(0.5 * log_var) ----
    mu = heads[:, :ZP]          # lane-tile aligned slices
    log_var = heads[:, ZP:]
    # padded columns: mu=0, log_var=0, eps=0 -> z padding stays 0
    z = mu + eps_ref[...] * jnp.exp(0.5 * log_var)

    # ---- decoder ----
    d = jnp.dot(z.astype(bf16), w4_ref[...], preferred_element_type=f32) + b4_ref[...]
    d = jnp.maximum(d, 0.0).astype(bf16)
    d = jnp.dot(d, w5_ref[...], preferred_element_type=f32) + b5_ref[...]
    d = jnp.maximum(d, 0.0).astype(bf16)
    logits = jnp.dot(d, w6_ref[...], preferred_element_type=f32) + b6_ref[...]
    recon_ref[...] = jax.nn.sigmoid(logits)


def _vae_pallas_call(pp, x_p, eps_p, *, bt):
    """Invoke the fused kernel over batch tiles of size `bt`."""
    b_pad = x_p.shape[0]
    grid = (b_pad // bt,)

    row = lambda i: (i, 0)     # batch-tiled operands
    full = lambda i: (0, 0)    # resident weights / biases

    in_specs = [
        pl.BlockSpec((bt, X_PAD), row),
        pl.BlockSpec((bt, ZP), row),
    ]
    operands = [x_p, eps_p]
    for name, (fin, fout) in (("fc1", (X_PAD, H1)), ("fc2", (H1, H2)),
                              ("heads", (H2, 2 * ZP)), ("fc4", (ZP, H2)),
                              ("fc5", (H2, H1)), ("fc6", (H1, X_PAD))):
        w, b = pp[name]
        in_specs.append(pl.BlockSpec((fin, fout), full))
        in_specs.append(pl.BlockSpec((1, fout), full))
        operands.extend([w, b])

    return pl.pallas_call(
        _vae_fused_kernel,
        out_shape=(jax.ShapeDtypeStruct((b_pad, X_PAD), jnp.float32),
                   jax.ShapeDtypeStruct((b_pad, 2 * ZP), jnp.float32)),
        grid_spec=pltpu.PrefetchScalarGridSpec(
            num_scalar_prefetch=0,
            grid=grid,
            in_specs=in_specs,
            out_specs=[pl.BlockSpec((bt, X_PAD), row),
                       pl.BlockSpec((bt, 2 * ZP), row)],
        ),
        compiler_params=pltpu.CompilerParams(
            dimension_semantics=("parallel",)),
    )(*operands)


# ------------------------------ parameters --------------------------------

def init_params(key, image_size=28, channel_num=1, z_size=2):
    """nn.Linear-style init (U[-1/sqrt(fan_in), +1/sqrt(fan_in)]), f32,
    weights stored as (in, out) so forward is x @ w + b."""
    x_dim = image_size * image_size * channel_num
    dims = [
        ("fc1", x_dim, H1), ("fc2", H1, H2),
        ("fc31", H2, z_size), ("fc32", H2, z_size),
        ("fc4", z_size, H2), ("fc5", H2, H1), ("fc6", H1, x_dim),
    ]
    params = {}
    keys = jax.random.split(key, len(dims) * 2)
    for i, (name, fin, fout) in enumerate(dims):
        bound = 1.0 / jnp.sqrt(jnp.float32(fin))
        w = jax.random.uniform(keys[2 * i], (fin, fout), jnp.float32,
                               minval=-bound, maxval=bound)
        b = jax.random.uniform(keys[2 * i + 1], (fout,), jnp.float32,
                               minval=-bound, maxval=bound)
        params[name] = (w, b)
    return params


def prepare_padded_params(params, z_size=2):
    """Cast weights to bf16, zero-pad lane dims to multiples of 128, and fuse
    the fc31/fc32 heads into one (H2, 2*ZP) weight."""
    bf = lambda w: w.astype(jnp.bfloat16)

    w1, b1 = params["fc1"]
    w1p = jnp.zeros((X_PAD, H1), jnp.bfloat16).at[:X_DIM, :].set(bf(w1))

    w2, b2 = params["fc2"]

    w31, b31 = params["fc31"]
    w32, b32 = params["fc32"]
    wh = jnp.zeros((H2, 2 * ZP), jnp.bfloat16)
    wh = wh.at[:, :z_size].set(bf(w31)).at[:, ZP:ZP + z_size].set(bf(w32))
    bh = jnp.zeros((1, 2 * ZP), jnp.float32)
    bh = bh.at[0, :z_size].set(b31).at[0, ZP:ZP + z_size].set(b32)

    w4, b4 = params["fc4"]
    w4p = jnp.zeros((ZP, H2), jnp.bfloat16).at[:z_size, :].set(bf(w4))

    w5, b5 = params["fc5"]

    w6, b6 = params["fc6"]
    w6p = jnp.zeros((H1, X_PAD), jnp.bfloat16).at[:, :X_DIM].set(bf(w6))
    b6p = jnp.zeros((1, X_PAD), jnp.float32).at[0, :X_DIM].set(b6)

    return {
        "fc1": (w1p, b1.reshape(1, H1)),
        "fc2": (bf(w2), b2.reshape(1, H2)),
        "heads": (wh, bh),
        "fc4": (w4p, b4.reshape(1, H2)),
        "fc5": (bf(w5), b5.reshape(1, H1)),
        "fc6": (w6p, b6p),
    }


# ------------------------------ VAE forward -------------------------------

@functools.partial(jax.jit, static_argnames=("z_size",))
def forward(pp, x, eps, z_size=2):
    """x: (B, C, H, W) NCHW (flattened like torch x.view(-1, 784)).
    eps: (B, z_size) external standard-normal noise (torch.randn_like(std))."""
    b = x.shape[0]
    x_flat = x.reshape(b, -1).astype(jnp.float32)

    bt = 8 if b <= 8 else 128                    # batch tile (sublane multiple)
    b_pad = ((b + bt - 1) // bt) * bt

    x_p = jnp.zeros((b_pad, X_PAD), jnp.float32).at[:b, :X_DIM].set(x_flat)
    eps_p = jnp.zeros((b_pad, ZP), jnp.float32).at[:b, :z_size].set(eps)

    recon_p, heads = _vae_pallas_call(pp, x_p, eps_p, bt=bt)

    recon = recon_p[:b, :X_DIM]
    mu = heads[:b, :z_size]
    log_var = heads[:b, ZP:ZP + z_size]
    return recon, mu, log_var


def reference_forward(params, x_flat, eps):
    """Pure-JAX reference with the same bf16-weight / f32-accum math."""
    bf16, f32 = jnp.bfloat16, jnp.float32

    def lin(h, name):
        w, b = params[name]
        return jnp.dot(h.astype(bf16), w.astype(bf16),
                       preferred_element_type=f32) + b

    h = jnp.maximum(lin(x_flat, "fc1"), 0.0)
    h = jnp.maximum(lin(h, "fc2"), 0.0)
    mu = lin(h, "fc31")
    log_var = lin(h, "fc32")
    z = mu + eps * jnp.exp(0.5 * log_var)
    d = jnp.maximum(lin(z, "fc4"), 0.0)
    d = jnp.maximum(lin(d, "fc5"), 0.0)
    recon = jax.nn.sigmoid(lin(d, "fc6"))
    return recon, mu, log_var


# --------------------------------- main ------------------------------------

if __name__ == "__main__":
    key = jax.random.PRNGKey(0)
    k_param, k_x, k_eps = jax.random.split(key, 3)

    B, C, H, W = 2, 1, 28, 28
    z_size = 2

    params = init_params(k_param, image_size=H, channel_num=C, z_size=z_size)
    pp = prepare_padded_params(params, z_size=z_size)

    x = jax.random.normal(k_x, (B, C, H, W), dtype=jnp.float32)
    eps = jax.random.normal(k_eps, (B, z_size), dtype=jnp.float32)

    recon, mu, log_var = forward(pp, x, eps, z_size=z_size)
    jax.block_until_ready((recon, mu, log_var))

    assert recon.shape == (B, C * H * W)
    assert mu.shape == (B, z_size)
    assert log_var.shape == (B, z_size)
    assert bool(jnp.all(jnp.isfinite(recon)))
    assert bool(jnp.all((recon >= 0.0) & (recon <= 1.0)))   # sigmoid output

    # correctness vs. pure-JAX reference (same bf16 weights, f32 accumulation)
    r_recon, r_mu, r_lv = reference_forward(params, x.reshape(B, -1), eps)
    assert bool(jnp.allclose(recon, r_recon, atol=2e-3, rtol=2e-3))
    assert bool(jnp.allclose(mu, r_mu, atol=2e-3, rtol=2e-3))
    assert bool(jnp.allclose(log_var, r_lv, atol=2e-3, rtol=2e-3))

    print("KERNEL_OK")
</pallas_src>

<mosaic_0001>
module attributes {stable_mosaic.version = 11 : i64} {
  func.func @_vae_fused_kernel(%arg0: i32, %arg1: memref<8x896xf32, #tpu.memory_space<vmem>>, %arg2: memref<8x128xf32, #tpu.memory_space<vmem>>, %arg3: memref<896x512xbf16, #tpu.memory_space<vmem>>, %arg4: memref<1x512xf32, #tpu.memory_space<vmem>>, %arg5: memref<512x256xbf16, #tpu.memory_space<vmem>>, %arg6: memref<1x256xf32, #tpu.memory_space<vmem>>, %arg7: memref<256x256xbf16, #tpu.memory_space<vmem>>, %arg8: memref<1x256xf32, #tpu.memory_space<vmem>>, %arg9: memref<128x256xbf16, #tpu.memory_space<vmem>>, %arg10: memref<1x256xf32, #tpu.memory_space<vmem>>, %arg11: memref<256x512xbf16, #tpu.memory_space<vmem>>, %arg12: memref<1x512xf32, #tpu.memory_space<vmem>>, %arg13: memref<512x896xbf16, #tpu.memory_space<vmem>>, %arg14: memref<1x896xf32, #tpu.memory_space<vmem>>, %arg15: memref<8x896xf32, #tpu.memory_space<vmem>>, %arg16: memref<8x256xf32, #tpu.memory_space<vmem>>) attributes {dimension_semantics = [#tpu.dimension_semantics<parallel>], iteration_bounds = array<i64: 1>, scalar_prefetch = 0 : i64, scratch_operands = 0 : i64, tpu.core_type = #tpu.core_type<tc>, window_params = [{transform_indices = @transform_0, window_bounds = array<i64: 8, 896>}, {transform_indices = @transform_1, window_bounds = array<i64: 8, 128>}, {pipeline_mode = #tpu.pipeline_mode<synchronous>, transform_indices = @transform_2, window_bounds = array<i64: 896, 512>}, {pipeline_mode = #tpu.pipeline_mode<synchronous>, transform_indices = @transform_3, window_bounds = array<i64: 1, 512>}, {pipeline_mode = #tpu.pipeline_mode<synchronous>, transform_indices = @transform_4, window_bounds = array<i64: 512, 256>}, {pipeline_mode = #tpu.pipeline_mode<synchronous>, transform_indices = @transform_5, window_bounds = array<i64: 1, 256>}, {pipeline_mode = #tpu.pipeline_mode<synchronous>, transform_indices = @transform_6, window_bounds = array<i64: 256, 256>}, {pipeline_mode = #tpu.pipeline_mode<synchronous>, transform_indices = @transform_7, window_bounds = array<i64: 1, 256>}, {pipeline_mode = #tpu.pipeline_mode<synchronous>, transform_indices = @transform_8, window_bounds = array<i64: 128, 256>}, {pipeline_mode = #tpu.pipeline_mode<synchronous>, transform_indices = @transform_9, window_bounds = array<i64: 1, 256>}, {pipeline_mode = #tpu.pipeline_mode<synchronous>, transform_indices = @transform_10, window_bounds = array<i64: 256, 512>}, {pipeline_mode = #tpu.pipeline_mode<synchronous>, transform_indices = @transform_11, window_bounds = array<i64: 1, 512>}, {pipeline_mode = #tpu.pipeline_mode<synchronous>, transform_indices = @transform_12, window_bounds = array<i64: 512, 896>}, {pipeline_mode = #tpu.pipeline_mode<synchronous>, transform_indices = @transform_13, window_bounds = array<i64: 1, 896>}, {transform_indices = @transform_14, window_bounds = array<i64: 8, 896>}, {transform_indices = @transform_15, window_bounds = array<i64: 8, 256>}]} {
    %c0 = arith.constant 0 : index
    %c0_0 = arith.constant 0 : index
    %0 = vector.load %arg1[%c0, %c0_0] : memref<8x896xf32, #tpu.memory_space<vmem>>, vector<8x896xf32>
    %1 = arith.truncf %0 : vector<8x896xf32> to vector<8x896xbf16>
    %c0_1 = arith.constant 0 : index
    %c0_2 = arith.constant 0 : index
    %2 = vector.load %arg3[%c0_1, %c0_2] : memref<896x512xbf16, #tpu.memory_space<vmem>>, vector<896x512xbf16>
    %cst = arith.constant dense<0.000000e+00> : vector<8x512xf32>
    %3 = tpu.matmul %1, %2, %cst {dimension_numbers = #tpu.dot_dimension_numbers<[1], [0], [0], [1], [0, 0, 1, 1], [], []>} : vector<8x896xbf16>, vector<896x512xbf16>, vector<8x512xf32> -> vector<8x512xf32>
    %c0_3 = arith.constant 0 : index
    %c0_4 = arith.constant 0 : index
    %4 = vector.load %arg4[%c0_3, %c0_4] : memref<1x512xf32, #tpu.memory_space<vmem>>, vector<1x512xf32>
    %5 = vector.broadcast %4 : vector<1x512xf32> to vector<8x512xf32>
    %6 = arith.addf %3, %5 : vector<8x512xf32>
    %cst_5 = arith.constant 0.000000e+00 : f32
    %7 = vector.broadcast %cst_5 : f32 to vector<8x512xf32>
    %8 = arith.maximumf %6, %7 : vector<8x512xf32>
    %9 = arith.truncf %8 : vector<8x512xf32> to vector<8x512xbf16>
    %c0_6 = arith.constant 0 : index
    %c0_7 = arith.constant 0 : index
    %10 = vector.load %arg5[%c0_6, %c0_7] : memref<512x256xbf16, #tpu.memory_space<vmem>>, vector<512x256xbf16>
    %cst_8 = arith.constant dense<0.000000e+00> : vector<8x256xf32>
    %11 = tpu.matmul %9, %10, %cst_8 {dimension_numbers = #tpu.dot_dimension_numbers<[1], [0], [0], [1], [0, 0, 1, 1], [], []>} : vector<8x512xbf16>, vector<512x256xbf16>, vector<8x256xf32> -> vector<8x256xf32>
    %c0_9 = arith.constant 0 : index
    %c0_10 = arith.constant 0 : index
    %12 = vector.load %arg6[%c0_9, %c0_10] : memref<1x256xf32, #tpu.memory_space<vmem>>, vector<1x256xf32>
    %13 = vector.broadcast %12 : vector<1x256xf32> to vector<8x256xf32>
    %14 = arith.addf %11, %13 : vector<8x256xf32>
    %cst_11 = arith.constant 0.000000e+00 : f32
    %15 = vector.broadcast %cst_11 : f32 to vector<8x256xf32>
    %16 = arith.maximumf %14, %15 : vector<8x256xf32>
    %17 = arith.truncf %16 : vector<8x256xf32> to vector<8x256xbf16>
    %c0_12 = arith.constant 0 : index
    %c0_13 = arith.constant 0 : index
    %18 = vector.load %arg7[%c0_12, %c0_13] : memref<256x256xbf16, #tpu.memory_space<vmem>>, vector<256x256xbf16>
    %cst_14 = arith.constant dense<0.000000e+00> : vector<8x256xf32>
    %19 = tpu.matmul %17, %18, %cst_14 {dimension_numbers = #tpu.dot_dimension_numbers<[1], [0], [0], [1], [0, 0, 1, 1], [], []>} : vector<8x256xbf16>, vector<256x256xbf16>, vector<8x256xf32> -> vector<8x256xf32>
    %c0_15 = arith.constant 0 : index
    %c0_16 = arith.constant 0 : index
    %20 = vector.load %arg8[%c0_15, %c0_16] : memref<1x256xf32, #tpu.memory_space<vmem>>, vector<1x256xf32>
    %21 = vector.broadcast %20 : vector<1x256xf32> to vector<8x256xf32>
    %22 = arith.addf %19, %21 : vector<8x256xf32>
    %c0_17 = arith.constant 0 : index
    %c0_18 = arith.constant 0 : index
    %23 = vector.load %arg16[%c0_17, %c0_18] : memref<8x256xf32, #tpu.memory_space<vmem>>, vector<8x256xf32>
    tpu.vector_store %arg16[%c0_17, %c0_18], %22 {strides = array<i32>} : memref<8x256xf32, #tpu.memory_space<vmem>>, vector<8x256xf32>,
    %24 = vector.extract_strided_slice %22 {offsets = [0, 0], sizes = [8, 128], strides = [1, 1]} : vector<8x256xf32> to vector<8x128xf32>
    %25 = vector.extract_strided_slice %22 {offsets = [0, 128], sizes = [8, 128], strides = [1, 1]} : vector<8x256xf32> to vector<8x128xf32>
    %c0_19 = arith.constant 0 : index
    %c0_20 = arith.constant 0 : index
    %26 = vector.load %arg2[%c0_19, %c0_20] : memref<8x128xf32, #tpu.memory_space<vmem>>, vector<8x128xf32>
    %cst_21 = arith.constant 5.000000e-01 : f32
    %27 = vector.broadcast %cst_21 : f32 to vector<8x128xf32>
    %28 = arith.mulf %27, %25 : vector<8x128xf32>
    %29 = math.exp %28 : vector<8x128xf32>
    %30 = arith.mulf %26, %29 : vector<8x128xf32>
    %31 = arith.addf %24, %30 : vector<8x128xf32>
    %32 = arith.truncf %31 : vector<8x128xf32> to vector<8x128xbf16>
    %c0_22 = arith.constant 0 : index
    %c0_23 = arith.constant 0 : index
    %33 = vector.load %arg9[%c0_22, %c0_23] : memref<128x256xbf16, #tpu.memory_space<vmem>>, vector<128x256xbf16>
    %cst_24 = arith.constant dense<0.000000e+00> : vector<8x256xf32>
    %34 = tpu.matmul %32, %33, %cst_24 {dimension_numbers = #tpu.dot_dimension_numbers<[1], [0], [0], [1], [0, 0, 1, 1], [], []>} : vector<8x128xbf16>, vector<128x256xbf16>, vector<8x256xf32> -> vector<8x256xf32>
    %c0_25 = arith.constant 0 : index
    %c0_26 = arith.constant 0 : index
    %35 = vector.load %arg10[%c0_25, %c0_26] : memref<1x256xf32, #tpu.memory_space<vmem>>, vector<1x256xf32>
    %36 = vector.broadcast %35 : vector<1x256xf32> to vector<8x256xf32>
    %37 = arith.addf %34, %36 : vector<8x256xf32>
    %cst_27 = arith.constant 0.000000e+00 : f32
    %38 = vector.broadcast %cst_27 : f32 to vector<8x256xf32>
    %39 = arith.maximumf %37, %38 : vector<8x256xf32>
    %40 = arith.truncf %39 : vector<8x256xf32> to vector<8x256xbf16>
    %c0_28 = arith.constant 0 : index
    %c0_29 = arith.constant 0 : index
    %41 = vector.load %arg11[%c0_28, %c0_29] : memref<256x512xbf16, #tpu.memory_space<vmem>>, vector<256x512xbf16>
    %cst_30 = arith.constant dense<0.000000e+00> : vector<8x512xf32>
    %42 = tpu.matmul %40, %41, %cst_30 {dimension_numbers = #tpu.dot_dimension_numbers<[1], [0], [0], [1], [0, 0, 1, 1], [], []>} : vector<8x256xbf16>, vector<256x512xbf16>, vector<8x512xf32> -> vector<8x512xf32>
    %c0_31 = arith.constant 0 : index
    %c0_32 = arith.constant 0 : index
    %43 = vector.load %arg12[%c0_31, %c0_32] : memref<1x512xf32, #tpu.memory_space<vmem>>, vector<1x512xf32>
    %44 = vector.broadcast %43 : vector<1x512xf32> to vector<8x512xf32>
    %45 = arith.addf %42, %44 : vector<8x512xf32>
    %cst_33 = arith.constant 0.000000e+00 : f32
    %46 = vector.broadcast %cst_33 : f32 to vector<8x512xf32>
    %47 = arith.maximumf %45, %46 : vector<8x512xf32>
    %48 = arith.truncf %47 : vector<8x512xf32> to vector<8x512xbf16>
    %c0_34 = arith.constant 0 : index
    %c0_35 = arith.constant 0 : index
    %49 = vector.load %arg13[%c0_34, %c0_35] : memref<512x896xbf16, #tpu.memory_space<vmem>>, vector<512x896xbf16>
    %cst_36 = arith.constant dense<0.000000e+00> : vector<8x896xf32>
    %50 = tpu.matmul %48, %49, %cst_36 {dimension_numbers = #tpu.dot_dimension_numbers<[1], [0], [0], [1], [0, 0, 1, 1], [], []>} : vector<8x512xbf16>, vector<512x896xbf16>, vector<8x896xf32> -> vector<8x896xf32>
    %c0_37 = arith.constant 0 : index
    %c0_38 = arith.constant 0 : index
    %51 = vector.load %arg14[%c0_37, %c0_38] : memref<1x896xf32, #tpu.memory_space<vmem>>, vector<1x896xf32>
    %52 = vector.broadcast %51 : vector<1x896xf32> to vector<8x896xf32>
    %53 = arith.addf %50, %52 : vector<8x896xf32>
    %54 = arith.negf %53 : vector<8x896xf32>
    %55 = math.exp %54 : vector<8x896xf32>
    %cst_39 = arith.constant 1.000000e+00 : f32
    %56 = vector.broadcast %cst_39 : f32 to vector<8x896xf32>
    %57 = arith.addf %56, %55 : vector<8x896xf32>
    %58 = arith.divf %56, %57 : vector<8x896xf32>
    %c0_40 = arith.constant 0 : index
    %c0_41 = arith.constant 0 : index
    %59 = vector.load %arg15[%c0_40, %c0_41] : memref<8x896xf32, #tpu.memory_space<vmem>>, vector<8x896xf32>
    tpu.vector_store %arg15[%c0_40, %c0_41], %58 {strides = array<i32>} : memref<8x896xf32, #tpu.memory_space<vmem>>, vector<8x896xf32>,
    return
  }
  func.func @transform_0(%arg0: i32) -> (i32, i32) {
    %c0_i32 = arith.constant 0 : i32
    %c0_i32_0 = arith.constant 0 : i32
    return %arg0, %c0_i32 : i32, i32
  }
  func.func @transform_1(%arg0: i32) -> (i32, i32) {
    %c0_i32 = arith.constant 0 : i32
    %c0_i32_0 = arith.constant 0 : i32
    return %arg0, %c0_i32 : i32, i32
  }
  func.func @transform_2(%arg0: i32) -> (i32, i32) {
    %c0_i32 = arith.constant 0 : i32
    %c0_i32_0 = arith.constant 0 : i32
    %c0_i32_1 = arith.constant 0 : i32
    return %c0_i32, %c0_i32_0 : i32, i32
  }
  func.func @transform_3(%arg0: i32) -> (i32, i32) {
    %c0_i32 = arith.constant 0 : i32
    %c0_i32_0 = arith.constant 0 : i32
    %c0_i32_1 = arith.constant 0 : i32
    return %c0_i32, %c0_i32_0 : i32, i32
  }
  func.func @transform_4(%arg0: i32) -> (i32, i32) {
    %c0_i32 = arith.constant 0 : i32
    %c0_i32_0 = arith.constant 0 : i32
    %c0_i32_1 = arith.constant 0 : i32
    return %c0_i32, %c0_i32_0 : i32, i32
  }
  func.func @transform_5(%arg0: i32) -> (i32, i32) {
    %c0_i32 = arith.constant 0 : i32
    %c0_i32_0 = arith.constant 0 : i32
    %c0_i32_1 = arith.constant 0 : i32
    return %c0_i32, %c0_i32_0 : i32, i32
  }
  func.func @transform_6(%arg0: i32) -> (i32, i32) {
    %c0_i32 = arith.constant 0 : i32
    %c0_i32_0 = arith.constant 0 : i32
    %c0_i32_1 = arith.constant 0 : i32
    return %c0_i32, %c0_i32_0 : i32, i32
  }
  func.func @transform_7(%arg0: i32) -> (i32, i32) {
    %c0_i32 = arith.constant 0 : i32
    %c0_i32_0 = arith.constant 0 : i32
    %c0_i32_1 = arith.constant 0 : i32
    return %c0_i32, %c0_i32_0 : i32, i32
  }
  func.func @transform_8(%arg0: i32) -> (i32, i32) {
    %c0_i32 = arith.constant 0 : i32
    %c0_i32_0 = arith.constant 0 : i32
    %c0_i32_1 = arith.constant 0 : i32
    return %c0_i32, %c0_i32_0 : i32, i32
  }
  func.func @transform_9(%arg0: i32) -> (i32, i32) {
    %c0_i32 = arith.constant 0 : i32
    %c0_i32_0 = arith.constant 0 : i32
    %c0_i32_1 = arith.constant 0 : i32
    return %c0_i32, %c0_i32_0 : i32, i32
  }
  func.func @transform_10(%arg0: i32) -> (i32, i32) {
    %c0_i32 = arith.constant 0 : i32
    %c0_i32_0 = arith.constant 0 : i32
    %c0_i32_1 = arith.constant 0 : i32
    return %c0_i32, %c0_i32_0 : i32, i32
  }
  func.func @transform_11(%arg0: i32) -> (i32, i32) {
    %c0_i32 = arith.constant 0 : i32
    %c0_i32_0 = arith.constant 0 : i32
    %c0_i32_1 = arith.constant 0 : i32
    return %c0_i32, %c0_i32_0 : i32, i32
  }
  func.func @transform_12(%arg0: i32) -> (i32, i32) {
    %c0_i32 = arith.constant 0 : i32
    %c0_i32_0 = arith.constant 0 : i32
    %c0_i32_1 = arith.constant 0 : i32
    return %c0_i32, %c0_i32_0 : i32, i32
  }
  func.func @transform_13(%arg0: i32) -> (i32, i32) {
    %c0_i32 = arith.constant 0 : i32
    %c0_i32_0 = arith.constant 0 : i32
    %c0_i32_1 = arith.constant 0 : i32
    return %c0_i32, %c0_i32_0 : i32, i32
  }
  func.func @transform_14(%arg0: i32) -> (i32, i32) {
    %c0_i32 = arith.constant 0 : i32
    %c0_i32_0 = arith.constant 0 : i32
    return %arg0, %c0_i32 : i32, i32
  }
  func.func @transform_15(%arg0: i32) -> (i32, i32) {
    %c0_i32 = arith.constant 0 : i32
    %c0_i32_0 = arith.constant 0 : i32
    return %arg0, %c0_i32 : i32, i32
  }
}

</mosaic_0001>

<llo_original>
// kernel: forward.1
$region0: #{forward.1}
  #allocation0 [shape = 'u32[]', space=smem, size = 0x4, offset = 0x4, fixed_abs, tag = 'smem constant byte address 0x4 - core index']
  #allocation1 [shape = 'u32[72,128]{1,0:T(1,128)}', space=vmem, size = 0x9000, scoped, tag = 'internal scratch']
  %s0 = inlined_call_operand.vmem [shape: f32[8,896], index: 0, kind: input, shape index: {}]
  %s1 = inlined_call_operand.vmem [shape: f32[8,128], index: 1, kind: input, shape index: {}]
  %s2 = inlined_call_operand.hbm [shape: bf16[896,512], index: 2, kind: input, shape index: {}]
  %s3 = inlined_call_operand.vmem [shape: f32[1,512], index: 3, kind: input, shape index: {}]
  %s4 = inlined_call_operand.hbm [shape: bf16[512,256], index: 4, kind: input, shape index: {}]
  %s5 = inlined_call_operand.vmem [shape: f32[1,256], index: 5, kind: input, shape index: {}]
  %s6 = inlined_call_operand.vmem [shape: bf16[256,256], index: 6, kind: input, shape index: {}]
  %s7 = inlined_call_operand.vmem [shape: f32[1,256], index: 7, kind: input, shape index: {}]
  %s8 = inlined_call_operand.hbm [shape: bf16[128,256], index: 8, kind: input, shape index: {}]
  %s9 = inlined_call_operand.vmem [shape: f32[1,256], index: 9, kind: input, shape index: {}]
  %s10 = inlined_call_operand.hbm [shape: bf16[256,512], index: 10, kind: input, shape index: {}]
  %s11 = inlined_call_operand.vmem [shape: f32[1,512], index: 11, kind: input, shape index: {}]
  %s12 = inlined_call_operand.hbm [shape: bf16[512,896], index: 12, kind: input, shape index: {}]
  %s13 = inlined_call_operand.vmem [shape: f32[1,896], index: 13, kind: input, shape index: {}]
  %s14 = inlined_call_operand.vmem [shape: f32[8,896], index: 14, kind: output, shape index: {0}]
  %s15 = inlined_call_operand.vmem [shape: f32[8,256], index: 15, kind: output, shape index: {1}]
  %16 = xla_tuple %s14, %s15
  %s17 = sld [smem:[#allocation0]]
  $region94: #{forward.1} parent=0
    _
  %s19 = ssub.s32 1, %s17
  %s20 = scalar_select 0, %s19, %s17
  $region1: #{forward.1} parent=0
    #allocation2 [shape = 'u8[917504]{0}', space=vmem, size = 0xe0000, scoped, tag = 'input window, operand 2, single buffered']
    #allocation3 [shape = 's32[1]{0}', space=sflag, size = 0x4, scoped, tag = 'scoped memory for forward.1']
    #allocation4 [shape = 'u8[262144]{0}', space=vmem, size = 0x40000, scoped, tag = 'input window, operand 4, single buffered']
    #allocation5 [shape = 's32[1]{0}', space=sflag, size = 0x4, scoped, tag = 'scoped memory for forward.1']
    #allocation6 [shape = 'u8[65536]{0}', space=vmem, size = 0x10000, scoped, tag = 'input window, operand 8, single buffered']
    #allocation7 [shape = 'u8[262144]{0}', space=vmem, size = 0x40000, scoped, tag = 'input window, operand 10, single buffered']
    #allocation8 [shape = 's32[1]{0}', space=sflag, size = 0x4, scoped, tag = 'scoped memory for forward.1']
    #allocation9 [shape = 'u8[917504]{0}', space=vmem, size = 0xe0000, scoped, tag = 'input window, operand 12, single buffered']
    %21 = vsyncpa [#allocation3], 0
    %22 = vsyncpa [#allocation5], 0
    %23 = vsyncpa [#allocation8], 0
    // Predicated region
    $region2: #{forward.1} parent=1 // pred_check
      _
    $region3: #{forward.1} parent=1 // pred_check_branch
      %25 = sbr.rel (0) target = $region5
    $region4: #{forward.1} parent=1 // pred_region
      _
    $region5: #{forward.1} parent=1 // pred_fallthru
      _
    // Predicated region
    $region6: #{forward.1} parent=1 // pred_check
      _
    $region7: #{forward.1} parent=1 // pred_check_branch
      %27 = sbr.rel (0) target = $region9
    $region8: #{forward.1} parent=1 // pred_region
      _
    $region9: #{forward.1} parent=1 // pred_fallthru
      _
    // Predicated region
    $region10: #{forward.1} parent=1 // pred_check
      _
    $region11: #{forward.1} parent=1 // pred_check_branch
      %29 = sbr.rel (0) target = $region13
    $region12: #{forward.1} parent=1 // pred_region
      %31 = vsyncadd [#allocation3], 0
      %s32 = sshll.u32 %s2, 4
      %s33 = int_to_ptr.hbm [resolvable:$true] %s32
      %s34 = sshll.u32 [#allocation2], 4
      %s35 = int_to_ptr.vmem [resolvable:$true] %s34
      %40 = dma.hbm_to_vmem [thread:$0]  %s33, 28672, %s35, [#allocation3], 256, 256, 16
    $region13: #{forward.1} parent=1 // pred_fallthru
      _
    // Predicated region
    $region14: #{forward.1} parent=1 // pred_check
      _
    $region15: #{forward.1} parent=1 // pred_check_branch
      %42 = sbr.rel (0) target = $region17
    $region16: #{forward.1} parent=1 // pred_region
      _
    $region17: #{forward.1} parent=1 // pred_fallthru
      _
    // Predicated region
    $region18: #{forward.1} parent=1 // pred_check
      _
    $region19: #{forward.1} parent=1 // pred_check_branch
      %44 = sbr.rel (0) target = $region21
    $region20: #{forward.1} parent=1 // pred_region
      %46 = vsyncadd [#allocation5], 0
      %s47 = sshll.u32 %s4, 4
      %s48 = int_to_ptr.hbm [resolvable:$true] %s47
      %s49 = sshll.u32 [#allocation4], 4
      %s50 = int_to_ptr.vmem [resolvable:$true] %s49
      %55 = dma.hbm_to_vmem [thread:$0]  %s48, 8192, %s50, [#allocation5], 128, 128, 8
    $region21: #{forward.1} parent=1 // pred_fallthru
      _
    // Predicated region
    $region22: #{forward.1} parent=1 // pred_check
      _
    $region23: #{forward.1} parent=1 // pred_check_branch
      %57 = sbr.rel (0) target = $region25
    $region24: #{forward.1} parent=1 // pred_region
      _
    $region25: #{forward.1} parent=1 // pred_fallthru
      _
    // Predicated region
    $region26: #{forward.1} parent=1 // pred_check
      _
    $region27: #{forward.1} parent=1 // pred_check_branch
      %59 = sbr.rel (0) target = $region29
    $region28: #{forward.1} parent=1 // pred_region
      _
    $region29: #{forward.1} parent=1 // pred_fallthru
      _
    // Predicated region
    $region30: #{forward.1} parent=1 // pred_check
      _
    $region31: #{forward.1} parent=1 // pred_check_branch
      %61 = sbr.rel (0) target = $region33
    $region32: #{forward.1} parent=1 // pred_region
      _
    $region33: #{forward.1} parent=1 // pred_fallthru
      _
    // Predicated region
    $region34: #{forward.1} parent=1 // pred_check
      _
    $region35: #{forward.1} parent=1 // pred_check_branch
      %63 = sbr.rel (0) target = $region37
    $region36: #{forward.1} parent=1 // pred_region
      %65 = vsyncadd [#allocation5], 0
      %s66 = sshll.u32 %s8, 4
      %s67 = int_to_ptr.hbm [resolvable:$true] %s66
      %s68 = sshll.u32 [#allocation6], 4
      %s69 = int_to_ptr.vmem [resolvable:$true] %s68
      %74 = dma.hbm_to_vmem [thread:$0]  %s67, 2048, %s69, [#allocation5], 128, 128, 8
    $region37: #{forward.1} parent=1 // pred_fallthru
      _
    // Predicated region
    $region38: #{forward.1} parent=1 // pred_check
      _
    $region39: #{forward.1} parent=1 // pred_check_branch
      %76 = sbr.rel (0) target = $region41
    $region40: #{forward.1} parent=1 // pred_region
      _
    $region41: #{forward.1} parent=1 // pred_fallthru
      _
    // Predicated region
    $region42: #{forward.1} parent=1 // pred_check
      _
    $region43: #{forward.1} parent=1 // pred_check_branch
      %78 = sbr.rel (0) target = $region45
    $region44: #{forward.1} parent=1 // pred_region
      %80 = vsyncadd [#allocation8], 0
      %s81 = sshll.u32 %s10, 4
      %s82 = int_to_ptr.hbm [resolvable:$true] %s81
      %s83 = sshll.u32 [#allocation7], 4
      %s84 = int_to_ptr.vmem [resolvable:$true] %s83
      %89 = dma.hbm_to_vmem [thread:$0]  %s82, 8192, %s84, [#allocation8], 256, 256, 16
    $region45: #{forward.1} parent=1 // pred_fallthru
      _
    // Predicated region
    $region46: #{forward.1} parent=1 // pred_check
      _
    $region47: #{forward.1} parent=1 // pred_check_branch
      %91 = sbr.rel (0) target = $region49
    $region48: #{forward.1} parent=1 // pred_region
      _
    $region49: #{forward.1} parent=1 // pred_fallthru
      _
    // Predicated region
    $region50: #{forward.1} parent=1 // pred_check
      _
    $region51: #{forward.1} parent=1 // pred_check_branch
      %93 = sbr.rel (0) target = $region53
    $region52: #{forward.1} parent=1 // pred_region
      %95 = vsyncadd [#allocation8], 0
      %s96 = sshll.u32 %s12, 4
      %s97 = int_to_ptr.hbm [resolvable:$true] %s96
      %s98 = sshll.u32 [#allocation9], 4
      %s99 = int_to_ptr.vmem [resolvable:$true] %s98
      %104 = dma.hbm_to_vmem [thread:$0]  %s97, 28672, %s99, [#allocation8], 448, 448, 28
    $region53: #{forward.1} parent=1 // pred_fallthru
      _
    // Predicated region
    $region54: #{forward.1} parent=1 // pred_check
      _
    $region55: #{forward.1} parent=1 // pred_check_branch
      %106 = sbr.rel (0) target = $region57
    $region56: #{forward.1} parent=1 // pred_region
      _
    $region57: #{forward.1} parent=1 // pred_fallthru
      _
    // Predicated region
    $region58: #{forward.1} parent=1 // pred_check
      _
    $region59: #{forward.1} parent=1 // pred_check_branch
      %108 = sbr.rel (0) target = $region61
    $region60: #{forward.1} parent=1 // pred_region
      %110 = dma.done [#allocation3], 28672
    $region61: #{forward.1} parent=1 // pred_fallthru
      _
    // Predicated region
    $region62: #{forward.1} parent=1 // pred_check
      _
    $region63: #{forward.1} parent=1 // pred_check_branch
      %112 = sbr.rel (0) target = $region65
    $region64: #{forward.1} parent=1 // pred_region
      %114 = dma.done [#allocation5], 8192
    $region65: #{forward.1} parent=1 // pred_fallthru
      _
    // Predicated region
    $region66: #{forward.1} parent=1 // pred_check
      _
    $region67: #{forward.1} parent=1 // pred_check_branch
      %116 = sbr.rel (0) target = $region69
    $region68: #{forward.1} parent=1 // pred_region
      %118 = dma.done [#allocation5], 2048
    $region69: #{forward.1} parent=1 // pred_fallthru
      _
    // Predicated region
    $region70: #{forward.1} parent=1 // pred_check
      _
    $region71: #{forward.1} parent=1 // pred_check_branch
      %120 = sbr.rel (0) target = $region73
    $region72: #{forward.1} parent=1 // pred_region
      %122 = dma.done [#allocation8], 8192
    $region73: #{forward.1} parent=1 // pred_fallthru
      _
    // Predicated region
    $region74: #{forward.1} parent=1 // pred_check
      _
    $region75: #{forward.1} parent=1 // pred_check_branch
      %124 = sbr.rel (0) target = $region77
    $region76: #{forward.1} parent=1 // pred_region
      %126 = dma.done [#allocation8], 28672
    $region77: #{forward.1} parent=1 // pred_fallthru
      _
    %v127 = vld [vmem:[%s0] sm:$0xff]
    %v128 = vld [vmem:[%s0 + $0x8] sm:$0xff]
    %v129 = vld [vmem:[%s0 + $0x10] sm:$0xff]
    %v130 = vld [vmem:[%s0 + $0x18] sm:$0xff]
    %v131 = vld [vmem:[%s0 + $0x20] sm:$0xff]
    %v132 = vld [vmem:[%s0 + $0x28] sm:$0xff]
    %v133 = vld [vmem:[%s0 + $0x30] sm:$0xff]
    %v134 = vpack.c.bf16 %v127, %v127
    %v135 = vpack.c.bf16 %v128, %v128
    %v136 = vpack.c.bf16 %v129, %v129
    %v137 = vpack.c.bf16 %v130, %v130
    %v138 = vpack.c.bf16 %v131, %v131
    %v139 = vpack.c.bf16 %v132, %v132
    %v140 = vpack.c.bf16 %v133, %v133
    %v141 = vld [vmem:[#allocation2] sm:$0xff]
    %v142 = vld [vmem:[#allocation2 + $0x8] sm:$0xff]
    %v143 = vld [vmem:[#allocation2 + $0x10] sm:$0xff]
    %v144 = vld [vmem:[#allocation2 + $0x18] sm:$0xff]
    %v145 = vld [vmem:[#allocation2 + $0x20] sm:$0xff]
    %v146 = vld [vmem:[#allocation2 + $0x28] sm:$0xff]
    %v147 = vld [vmem:[#allocation2 + $0x30] sm:$0xff]
    %v148 = vld [vmem:[#allocation2 + $0x38] sm:$0xff]
    %v149 = vld [vmem:[#allocation2 + $0x40] sm:$0xff]
    %v150 = vld [vmem:[#allocation2 + $0x48] sm:$0xff]
    %v151 = vld [vmem:[#allocation2 + $0x50] sm:$0xff]
    %v152 = vld [vmem:[#allocation2 + $0x58] sm:$0xff]
    %v153 = vld [vmem:[#allocation2 + $0x60] sm:$0xff]
    %v154 = vld [vmem:[#allocation2 + $0x68] sm:$0xff]
    %v155 = vld [vmem:[#allocation2 + $0x70] sm:$0xff]
    %v156 = vld [vmem:[#allocation2 + $0x78] sm:$0xff]
    %v157 = vld [vmem:[#allocation2 + $0x80] sm:$0xff]
    %v158 = vld [vmem:[#allocation2 + $0x88] sm:$0xff]
    %v159 = vld [vmem:[#allocation2 + $0x90] sm:$0xff]
    %v160 = vld [vmem:[#allocation2 + $0x98] sm:$0xff]
    %v161 = vld [vmem:[#allocation2 + $0xa0] sm:$0xff]
    %v162 = vld [vmem:[#allocation2 + $0xa8] sm:$0xff]
    %v163 = vld [vmem:[#allocation2 + $0xb0] sm:$0xff]
    %v164 = vld [vmem:[#allocation2 + $0xb8] sm:$0xff]
    %v165 = vld [vmem:[#allocation2 + $0xc0] sm:$0xff]
    %v166 = vld [vmem:[#allocation2 + $0xc8] sm:$0xff]
    %v167 = vld [vmem:[#allocation2 + $0xd0] sm:$0xff]
    %v168 = vld [vmem:[#allocation2 + $0xd8] sm:$0xff]
    %v169 = vld [vmem:[#allocation2 + $0xe0] sm:$0xff]
    %v170 = vld [vmem:[#allocation2 + $0xe8] sm:$0xff]
    %v171 = vld [vmem:[#allocation2 + $0xf0] sm:$0xff]
    %v172 = vld [vmem:[#allocation2 + $0xf8] sm:$0xff]
    %v173 = vld [vmem:[#allocation2 + $0x100] sm:$0xff]
    %v174 = vld [vmem:[#allocation2 + $0x108] sm:$0xff]
    %v175 = vld [vmem:[#allocation2 + $0x110] sm:$0xff]
    %v176 = vld [vmem:[#allocation2 + $0x118] sm:$0xff]
    %v177 = vld [vmem:[#allocation2 + $0x120] sm:$0xff]
    %v178 = vld [vmem:[#allocation2 + $0x128] sm:$0xff]
    %v179 = vld [vmem:[#allocation2 + $0x130] sm:$0xff]
    %v180 = vld [vmem:[#allocation2 + $0x138] sm:$0xff]
    %v181 = vld [vmem:[#allocation2 + $0x140] sm:$0xff]
    %v182 = vld [vmem:[#allocation2 + $0x148] sm:$0xff]
    %v183 = vld [vmem:[#allocation2 + $0x150] sm:$0xff]
    %v184 = vld [vmem:[#allocation2 + $0x158] sm:$0xff]
    %v185 = vld [vmem:[#allocation2 + $0x160] sm:$0xff]
    %v186 = vld [vmem:[#allocation2 + $0x168] sm:$0xff]
    %v187 = vld [vmem:[#allocation2 + $0x170] sm:$0xff]
    %v188 = vld [vmem:[#allocation2 + $0x178] sm:$0xff]
    %v189 = vld [vmem:[#allocation2 + $0x180] sm:$0xff]
    %v190 = vld [vmem:[#allocation2 + $0x188] sm:$0xff]
    %v191 = vld [vmem:[#allocation2 + $0x190] sm:$0xff]
    %v192 = vld [vmem:[#allocation2 + $0x198] sm:$0xff]
    %v193 = vld [vmem:[#allocation2 + $0x1a0] sm:$0xff]
    %v194 = vld [vmem:[#allocation2 + $0x1a8] sm:$0xff]
    %v195 = vld [vmem:[#allocation2 + $0x1b0] sm:$0xff]
    %v196 = vld [vmem:[#allocation2 + $0x1b8] sm:$0xff]
    %v197 = vld [vmem:[#allocation2 + $0x1c0] sm:$0xff]
    %v198 = vld [vmem:[#allocation2 + $0x1c8] sm:$0xff]
    %v199 = vld [vmem:[#allocation2 + $0x1d0] sm:$0xff]
    %v200 = vld [vmem:[#allocation2 + $0x1d8] sm:$0xff]
    %v201 = vld [vmem:[#allocation2 + $0x1e0] sm:$0xff]
    %v202 = vld [vmem:[#allocation2 + $0x1e8] sm:$0xff]
    %v203 = vld [vmem:[#allocation2 + $0x1f0] sm:$0xff]
    %v204 = vld [vmem:[#allocation2 + $0x1f8] sm:$0xff]
    %v205 = vld [vmem:[#allocation2 + $0x200] sm:$0xff]
    %v206 = vld [vmem:[#allocation2 + $0x208] sm:$0xff]
    %v207 = vld [vmem:[#allocation2 + $0x210] sm:$0xff]
    %v208 = vld [vmem:[#allocation2 + $0x218] sm:$0xff]
    %v209 = vld [vmem:[#allocation2 + $0x220] sm:$0xff]
    %v210 = vld [vmem:[#allocation2 + $0x228] sm:$0xff]
    %v211 = vld [vmem:[#allocation2 + $0x230] sm:$0xff]
    %v212 = vld [vmem:[#allocation2 + $0x238] sm:$0xff]
    %v213 = vld [vmem:[#allocation2 + $0x240] sm:$0xff]
    %v214 = vld [vmem:[#allocation2 + $0x248] sm:$0xff]
    %v215 = vld [vmem:[#allocation2 + $0x250] sm:$0xff]
    %v216 = vld [vmem:[#allocation2 + $0x258] sm:$0xff]
    %v217 = vld [vmem:[#allocation2 + $0x260] sm:$0xff]
    %v218 = vld [vmem:[#allocation2 + $0x268] sm:$0xff]
    %v219 = vld [vmem:[#allocation2 + $0x270] sm:$0xff]
    %v220 = vld [vmem:[#allocation2 + $0x278] sm:$0xff]
    %v221 = vld [vmem:[#allocation2 + $0x280] sm:$0xff]
    %v222 = vld [vmem:[#allocation2 + $0x288] sm:$0xff]
    %v223 = vld [vmem:[#allocation2 + $0x290] sm:$0xff]
    %v224 = vld [vmem:[#allocation2 + $0x298] sm:$0xff]
    %v225 = vld [vmem:[#allocation2 + $0x2a0] sm:$0xff]
    %v226 = vld [vmem:[#allocation2 + $0x2a8] sm:$0xff]
    %v227 = vld [vmem:[#allocation2 + $0x2b0] sm:$0xff]
    %v228 = vld [vmem:[#allocation2 + $0x2b8] sm:$0xff]
    %v229 = vld [vmem:[#allocation2 + $0x2c0] sm:$0xff]
    %v230 = vld [vmem:[#allocation2 + $0x2c8] sm:$0xff]
    %v231 = vld [vmem:[#allocation2 + $0x2d0] sm:$0xff]
    %v232 = vld [vmem:[#allocation2 + $0x2d8] sm:$0xff]
    %v233 = vld [vmem:[#allocation2 + $0x2e0] sm:$0xff]
    %v234 = vld [vmem:[#allocation2 + $0x2e8] sm:$0xff]
    %v235 = vld [vmem:[#allocation2 + $0x2f0] sm:$0xff]
    %v236 = vld [vmem:[#allocation2 + $0x2f8] sm:$0xff]
    %v237 = vld [vmem:[#allocation2 + $0x300] sm:$0xff]
    %v238 = vld [vmem:[#allocation2 + $0x308] sm:$0xff]
    %v239 = vld [vmem:[#allocation2 + $0x310] sm:$0xff]
    %v240 = vld [vmem:[#allocation2 + $0x318] sm:$0xff]
    %v241 = vld [vmem:[#allocation2 + $0x320] sm:$0xff]
    %v242 = vld [vmem:[#allocation2 + $0x328] sm:$0xff]
    %v243 = vld [vmem:[#allocation2 + $0x330] sm:$0xff]
    %v244 = vld [vmem:[#allocation2 + $0x338] sm:$0xff]
    %v245 = vld [vmem:[#allocation2 + $0x340] sm:$0xff]
    %v246 = vld [vmem:[#allocation2 + $0x348] sm:$0xff]
    %v247 = vld [vmem:[#allocation2 + $0x350] sm:$0xff]
    %v248 = vld [vmem:[#allocation2 + $0x358] sm:$0xff]
    %v249 = vld [vmem:[#allocation2 + $0x360] sm:$0xff]
    %v250 = vld [vmem:[#allocation2 + $0x368] sm:$0xff]
    %v251 = vld [vmem:[#allocation2 + $0x370] sm:$0xff]
    %v252 = vld [vmem:[#allocation2 + $0x378] sm:$0xff]
    %v253 = vld [vmem:[#allocation2 + $0x380] sm:$0xff]
    %v254 = vld [vmem:[#allocation2 + $0x388] sm:$0xff]
    %v255 = vld [vmem:[#allocation2 + $0x390] sm:$0xff]
    %v256 = vld [vmem:[#allocation2 + $0x398] sm:$0xff]
    %v257 = vld [vmem:[#allocation2 + $0x3a0] sm:$0xff]
    %v258 = vld [vmem:[#allocation2 + $0x3a8] sm:$0xff]
    %v259 = vld [vmem:[#allocation2 + $0x3b0] sm:$0xff]
    %v260 = vld [vmem:[#allocation2 + $0x3b8] sm:$0xff]
    %v261 = vld [vmem:[#allocation2 + $0x3c0] sm:$0xff]
    %v262 = vld [vmem:[#allocation2 + $0x3c8] sm:$0xff]
    %v263 = vld [vmem:[#allocation2 + $0x3d0] sm:$0xff]
    %v264 = vld [vmem:[#allocation2 + $0x3d8] sm:$0xff]
    %v265 = vld [vmem:[#allocation2 + $0x3e0] sm:$0xff]
    %v266 = vld [vmem:[#allocation2 + $0x3e8] sm:$0xff]
    %v267 = vld [vmem:[#allocation2 + $0x3f0] sm:$0xff]
    %v268 = vld [vmem:[#allocation2 + $0x3f8] sm:$0xff]
    %v269 = vld [vmem:[#allocation2 + $0x400] sm:$0xff]
    %v270 = vld [vmem:[#allocation2 + $0x408] sm:$0xff]
    %v271 = vld [vmem:[#allocation2 + $0x410] sm:$0xff]
    %v272 = vld [vmem:[#allocation2 + $0x418] sm:$0xff]
    %v273 = vld [vmem:[#allocation2 + $0x420] sm:$0xff]
    %v274 = vld [vmem:[#allocation2 + $0x428] sm:$0xff]
    %v275 = vld [vmem:[#allocation2 + $0x430] sm:$0xff]
    %v276 = vld [vmem:[#allocation2 + $0x438] sm:$0xff]
    %v277 = vld [vmem:[#allocation2 + $0x440] sm:$0xff]
    %v278 = vld [vmem:[#allocation2 + $0x448] sm:$0xff]
    %v279 = vld [vmem:[#allocation2 + $0x450] sm:$0xff]
    %v280 = vld [vmem:[#allocation2 + $0x458] sm:$0xff]
    %v281 = vld [vmem:[#allocation2 + $0x460] sm:$0xff]
    %v282 = vld [vmem:[#allocation2 + $0x468] sm:$0xff]
    %v283 = vld [vmem:[#allocation2 + $0x470] sm:$0xff]
    %v284 = vld [vmem:[#allocation2 + $0x478] sm:$0xff]
    %v285 = vld [vmem:[#allocation2 + $0x480] sm:$0xff]
    %v286 = vld [vmem:[#allocation2 + $0x488] sm:$0xff]
    %v287 = vld [vmem:[#allocation2 + $0x490] sm:$0xff]
    %v288 = vld [vmem:[#allocation2 + $0x498] sm:$0xff]
    %v289 = vld [vmem:[#allocation2 + $0x4a0] sm:$0xff]
    %v290 = vld [vmem:[#allocation2 + $0x4a8] sm:$0xff]
    %v291 = vld [vmem:[#allocation2 + $0x4b0] sm:$0xff]
    %v292 = vld [vmem:[#allocation2 + $0x4b8] sm:$0xff]
    %v293 = vld [vmem:[#allocation2 + $0x4c0] sm:$0xff]
    %v294 = vld [vmem:[#allocation2 + $0x4c8] sm:$0xff]
    %v295 = vld [vmem:[#allocation2 + $0x4d0] sm:$0xff]
    %v296 = vld [vmem:[#allocation2 + $0x4d8] sm:$0xff]
    %v297 = vld [vmem:[#allocation2 + $0x4e0] sm:$0xff]
    %v298 = vld [vmem:[#allocation2 + $0x4e8] sm:$0xff]
    %v299 = vld [vmem:[#allocation2 + $0x4f0] sm:$0xff]
    %v300 = vld [vmem:[#allocation2 + $0x4f8] sm:$0xff]
    %v301 = vld [vmem:[#allocation2 + $0x500] sm:$0xff]
    %v302 = vld [vmem:[#allocation2 + $0x508] sm:$0xff]
    %v303 = vld [vmem:[#allocation2 + $0x510] sm:$0xff]
    %v304 = vld [vmem:[#allocation2 + $0x518] sm:$0xff]
    %v305 = vld [vmem:[#allocation2 + $0x520] sm:$0xff]
    %v306 = vld [vmem:[#allocation2 + $0x528] sm:$0xff]
    %v307 = vld [vmem:[#allocation2 + $0x530] sm:$0xff]
    %v308 = vld [vmem:[#allocation2 + $0x538] sm:$0xff]
    %v309 = vld [vmem:[#allocation2 + $0x540] sm:$0xff]
    %v310 = vld [vmem:[#allocation2 + $0x548] sm:$0xff]
    %v311 = vld [vmem:[#allocation2 + $0x550] sm:$0xff]
    %v312 = vld [vmem:[#allocation2 + $0x558] sm:$0xff]
    %v313 = vld [vmem:[#allocation2 + $0x560] sm:$0xff]
    %v314 = vld [vmem:[#allocation2 + $0x568] sm:$0xff]
    %v315 = vld [vmem:[#allocation2 + $0x570] sm:$0xff]
    %v316 = vld [vmem:[#allocation2 + $0x578] sm:$0xff]
    %v317 = vld [vmem:[#allocation2 + $0x580] sm:$0xff]
    %v318 = vld [vmem:[#allocation2 + $0x588] sm:$0xff]
    %v319 = vld [vmem:[#allocation2 + $0x590] sm:$0xff]
    %v320 = vld [vmem:[#allocation2 + $0x598] sm:$0xff]
    %v321 = vld [vmem:[#allocation2 + $0x5a0] sm:$0xff]
    %v322 = vld [vmem:[#allocation2 + $0x5a8] sm:$0xff]
    %v323 = vld [vmem:[#allocation2 + $0x5b0] sm:$0xff]
    %v324 = vld [vmem:[#allocation2 + $0x5b8] sm:$0xff]
    %v325 = vld [vmem:[#allocation2 + $0x5c0] sm:$0xff]
    %v326 = vld [vmem:[#allocation2 + $0x5c8] sm:$0xff]
    %v327 = vld [vmem:[#allocation2 + $0x5d0] sm:$0xff]
    %v328 = vld [vmem:[#allocation2 + $0x5d8] sm:$0xff]
    %v329 = vld [vmem:[#allocation2 + $0x5e0] sm:$0xff]
    %v330 = vld [vmem:[#allocation2 + $0x5e8] sm:$0xff]
    %v331 = vld [vmem:[#allocation2 + $0x5f0] sm:$0xff]
    %v332 = vld [vmem:[#allocation2 + $0x5f8] sm:$0xff]
    %v333 = vld [vmem:[#allocation2 + $0x600] sm:$0xff]
    %v334 = vld [vmem:[#allocation2 + $0x608] sm:$0xff]
    %v335 = vld [vmem:[#allocation2 + $0x610] sm:$0xff]
    %v336 = vld [vmem:[#allocation2 + $0x618] sm:$0xff]
    %v337 = vld [vmem:[#allocation2 + $0x620] sm:$0xff]
    %v338 = vld [vmem:[#allocation2 + $0x628] sm:$0xff]
    %v339 = vld [vmem:[#allocation2 + $0x630] sm:$0xff]
    %v340 = vld [vmem:[#allocation2 + $0x638] sm:$0xff]
    %v341 = vld [vmem:[#allocation2 + $0x640] sm:$0xff]
    %v342 = vld [vmem:[#allocation2 + $0x648] sm:$0xff]
    %v343 = vld [vmem:[#allocation2 + $0x650] sm:$0xff]
    %v344 = vld [vmem:[#allocation2 + $0x658] sm:$0xff]
    %v345 = vld [vmem:[#allocation2 + $0x660] sm:$0xff]
    %v346 = vld [vmem:[#allocation2 + $0x668] sm:$0xff]
    %v347 = vld [vmem:[#allocation2 + $0x670] sm:$0xff]
    %v348 = vld [vmem:[#allocation2 + $0x678] sm:$0xff]
    %v349 = vld [vmem:[#allocation2 + $0x680] sm:$0xff]
    %v350 = vld [vmem:[#allocation2 + $0x688] sm:$0xff]
    %v351 = vld [vmem:[#allocation2 + $0x690] sm:$0xff]
    %v352 = vld [vmem:[#allocation2 + $0x698] sm:$0xff]
    %v353 = vld [vmem:[#allocation2 + $0x6a0] sm:$0xff]
    %v354 = vld [vmem:[#allocation2 + $0x6a8] sm:$0xff]
    %v355 = vld [vmem:[#allocation2 + $0x6b0] sm:$0xff]
    %v356 = vld [vmem:[#allocation2 + $0x6b8] sm:$0xff]
    %v357 = vld [vmem:[#allocation2 + $0x6c0] sm:$0xff]
    %v358 = vld [vmem:[#allocation2 + $0x6c8] sm:$0xff]
    %v359 = vld [vmem:[#allocation2 + $0x6d0] sm:$0xff]
    %v360 = vld [vmem:[#allocation2 + $0x6d8] sm:$0xff]
    %v361 = vld [vmem:[#allocation2 + $0x6e0] sm:$0xff]
    %v362 = vld [vmem:[#allocation2 + $0x6e8] sm:$0xff]
    %v363 = vld [vmem:[#allocation2 + $0x6f0] sm:$0xff]
    %v364 = vld [vmem:[#allocation2 + $0x6f8] sm:$0xff]
    %v365 = vld [vmem:[%s3] sm:$0xf]
    %v367 = vperm.slane %v365, 0
    %v368 = vperm.slane %v365, 1
    %v369 = vperm.slane %v365, 2
    %v370 = vperm.slane %v365, 3
    %v599 = vunpack.c.l.b16 %v141
    %v600 = vunpack.c.h.b16 %v141
    %v601 = vunpack.c.l.b16 %v142
    %v602 = vunpack.c.h.b16 %v142
    %v603 = vunpack.c.l.b16 %v143
    %v604 = vunpack.c.h.b16 %v143
    %v605 = vunpack.c.l.b16 %v144
    %v606 = vunpack.c.h.b16 %v144
    %v607 = vunpack.c.l.b16 %v145
    %v608 = vunpack.c.h.b16 %v145
    %v609 = vunpack.c.l.b16 %v146
    %v610 = vunpack.c.h.b16 %v146
    %v611 = vunpack.c.l.b16 %v147
    %v612 = vunpack.c.h.b16 %v147
    %v613 = vunpack.c.l.b16 %v148
    %v614 = vunpack.c.h.b16 %v148
    %v615 = vunpack.c.l.b16 %v149
    %v616 = vunpack.c.h.b16 %v149
    %v617 = vunpack.c.l.b16 %v150
    %v618 = vunpack.c.h.b16 %v150
    %v619 = vunpack.c.l.b16 %v151
    %v620 = vunpack.c.h.b16 %v151
    %v621 = vunpack.c.l.b16 %v152
    %v622 = vunpack.c.h.b16 %v152
    %v623 = vunpack.c.l.b16 %v153
    %v624 = vunpack.c.h.b16 %v153
    %v625 = vunpack.c.l.b16 %v154
    %v626 = vunpack.c.h.b16 %v154
    %v627 = vunpack.c.l.b16 %v155
    %v628 = vunpack.c.h.b16 %v155
    %v629 = vunpack.c.l.b16 %v156
    %v630 = vunpack.c.h.b16 %v156
    %v631 = vunpack.c.l.b16 %v157
    %v632 = vunpack.c.h.b16 %v157
    %v633 = vunpack.c.l.b16 %v158
    %v634 = vunpack.c.h.b16 %v158
    %v635 = vunpack.c.l.b16 %v159
    %v636 = vunpack.c.h.b16 %v159
    %v637 = vunpack.c.l.b16 %v160
    %v638 = vunpack.c.h.b16 %v160
    %v639 = vunpack.c.l.b16 %v161
    %v640 = vunpack.c.h.b16 %v161
    %v641 = vunpack.c.l.b16 %v162
    %v642 = vunpack.c.h.b16 %v162
    %v643 = vunpack.c.l.b16 %v163
    %v644 = vunpack.c.h.b16 %v163
    %v645 = vunpack.c.l.b16 %v164
    %v646 = vunpack.c.h.b16 %v164
    %v647 = vunpack.c.l.b16 %v165
    %v648 = vunpack.c.h.b16 %v165
    %v649 = vunpack.c.l.b16 %v166
    %v650 = vunpack.c.h.b16 %v166
    %v651 = vunpack.c.l.b16 %v167
    %v652 = vunpack.c.h.b16 %v167
    %v653 = vunpack.c.l.b16 %v168
    %v654 = vunpack.c.h.b16 %v168
    %v655 = vunpack.c.l.b16 %v169
    %v656 = vunpack.c.h.b16 %v169
    %v657 = vunpack.c.l.b16 %v170
    %v658 = vunpack.c.h.b16 %v170
    %v659 = vunpack.c.l.b16 %v171
    %v660 = vunpack.c.h.b16 %v171
    %v661 = vunpack.c.l.b16 %v172
    %v662 = vunpack.c.h.b16 %v172
    %v663 = vunpack.c.l.b16 %v173
    %v664 = vunpack.c.h.b16 %v173
    %v665 = vunpack.c.l.b16 %v174
    %v666 = vunpack.c.h.b16 %v174
    %v667 = vunpack.c.l.b16 %v175
    %v668 = vunpack.c.h.b16 %v175
    %v669 = vunpack.c.l.b16 %v176
    %v670 = vunpack.c.h.b16 %v176
    %v671 = vunpack.c.l.b16 %v177
    %v672 = vunpack.c.h.b16 %v177
    %v673 = vunpack.c.l.b16 %v178
    %v674 = vunpack.c.h.b16 %v178
    %v675 = vunpack.c.l.b16 %v179
    %v676 = vunpack.c.h.b16 %v179
    %v677 = vunpack.c.l.b16 %v180
    %v678 = vunpack.c.h.b16 %v180
    %v679 = vunpack.c.l.b16 %v181
    %v680 = vunpack.c.h.b16 %v181
    %v681 = vunpack.c.l.b16 %v182
    %v682 = vunpack.c.h.b16 %v182
    %v683 = vunpack.c.l.b16 %v183
    %v684 = vunpack.c.h.b16 %v183
    %v685 = vunpack.c.l.b16 %v184
    %v686 = vunpack.c.h.b16 %v184
    %v687 = vunpack.c.l.b16 %v185
    %v688 = vunpack.c.h.b16 %v185
    %v689 = vunpack.c.l.b16 %v186
    %v690 = vunpack.c.h.b16 %v186
    %v691 = vunpack.c.l.b16 %v187
    %v692 = vunpack.c.h.b16 %v187
    %v693 = vunpack.c.l.b16 %v188
    %v694 = vunpack.c.h.b16 %v188
    %v695 = vunpack.c.l.b16 %v189
    %v696 = vunpack.c.h.b16 %v189
    %v697 = vunpack.c.l.b16 %v190
    %v698 = vunpack.c.h.b16 %v190
    %v699 = vunpack.c.l.b16 %v191
    %v700 = vunpack.c.h.b16 %v191
    %v701 = vunpack.c.l.b16 %v192
    %v702 = vunpack.c.h.b16 %v192
    %v703 = vunpack.c.l.b16 %v193
    %v704 = vunpack.c.h.b16 %v193
    %v705 = vunpack.c.l.b16 %v194
    %v706 = vunpack.c.h.b16 %v194
    %v707 = vunpack.c.l.b16 %v195
    %v708 = vunpack.c.h.b16 %v195
    %v709 = vunpack.c.l.b16 %v196
    %v710 = vunpack.c.h.b16 %v196
    %v711 = vunpack.c.l.b16 %v197
    %v712 = vunpack.c.h.b16 %v197
    %v713 = vunpack.c.l.b16 %v198
    %v714 = vunpack.c.h.b16 %v198
    %v715 = vunpack.c.l.b16 %v199
    %v716 = vunpack.c.h.b16 %v199
    %v717 = vunpack.c.l.b16 %v200
    %v718 = vunpack.c.h.b16 %v200
    %v719 = vunpack.c.l.b16 %v201
    %v720 = vunpack.c.h.b16 %v201
    %v721 = vunpack.c.l.b16 %v202
    %v722 = vunpack.c.h.b16 %v202
    %v723 = vunpack.c.l.b16 %v203
    %v724 = vunpack.c.h.b16 %v203
    %v725 = vunpack.c.l.b16 %v204
    %v726 = vunpack.c.h.b16 %v204
    %v727 = vunpack.c.l.b16 %v205
    %v728 = vunpack.c.h.b16 %v205
    %v729 = vunpack.c.l.b16 %v206
    %v730 = vunpack.c.h.b16 %v206
    %v731 = vunpack.c.l.b16 %v207
    %v732 = vunpack.c.h.b16 %v207
    %v733 = vunpack.c.l.b16 %v208
    %v734 = vunpack.c.h.b16 %v208
    %v735 = vunpack.c.l.b16 %v209
    %v736 = vunpack.c.h.b16 %v209
    %v737 = vunpack.c.l.b16 %v210
    %v738 = vunpack.c.h.b16 %v210
    %v739 = vunpack.c.l.b16 %v211
    %v740 = vunpack.c.h.b16 %v211
    %v741 = vunpack.c.l.b16 %v212
    %v742 = vunpack.c.h.b16 %v212
    %v743 = vunpack.c.l.b16 %v213
    %v744 = vunpack.c.h.b16 %v213
    %v745 = vunpack.c.l.b16 %v214
    %v746 = vunpack.c.h.b16 %v214
    %v747 = vunpack.c.l.b16 %v215
    %v748 = vunpack.c.h.b16 %v215
    %v749 = vunpack.c.l.b16 %v216
    %v750 = vunpack.c.h.b16 %v216
    %v751 = vunpack.c.l.b16 %v217
    %v752 = vunpack.c.h.b16 %v217
    %v753 = vunpack.c.l.b16 %v218
    %v754 = vunpack.c.h.b16 %v218
    %v755 = vunpack.c.l.b16 %v219
    %v756 = vunpack.c.h.b16 %v219
    %v757 = vunpack.c.l.b16 %v220
    %v758 = vunpack.c.h.b16 %v220
    %v759 = vunpack.c.l.b16 %v221
    %v760 = vunpack.c.h.b16 %v221
    %v761 = vunpack.c.l.b16 %v222
    %v762 = vunpack.c.h.b16 %v222
    %v763 = vunpack.c.l.b16 %v223
    %v764 = vunpack.c.h.b16 %v223
    %v765 = vunpack.c.l.b16 %v224
    %v766 = vunpack.c.h.b16 %v224
    %v767 = vunpack.c.l.b16 %v225
    %v768 = vunpack.c.h.b16 %v225
    %v769 = vunpack.c.l.b16 %v226
    %v770 = vunpack.c.h.b16 %v226
    %v771 = vunpack.c.l.b16 %v227
    %v772 = vunpack.c.h.b16 %v227
    %v773 = vunpack.c.l.b16 %v228
    %v774 = vunpack.c.h.b16 %v228
    %v775 = vunpack.c.l.b16 %v229
    %v776 = vunpack.c.h.b16 %v229
    %v777 = vunpack.c.l.b16 %v230
    %v778 = vunpack.c.h.b16 %v230
    %v779 = vunpack.c.l.b16 %v231
    %v780 = vunpack.c.h.b16 %v231
    %v781 = vunpack.c.l.b16 %v232
    %v782 = vunpack.c.h.b16 %v232
    %v783 = vunpack.c.l.b16 %v233
    %v784 = vunpack.c.h.b16 %v233
    %v785 = vunpack.c.l.b16 %v234
    %v786 = vunpack.c.h.b16 %v234
    %v787 = vunpack.c.l.b16 %v235
    %v788 = vunpack.c.h.b16 %v235
    %v789 = vunpack.c.l.b16 %v236
    %v790 = vunpack.c.h.b16 %v236
    %v791 = vunpack.c.l.b16 %v237
    %v792 = vunpack.c.h.b16 %v237
    %v793 = vunpack.c.l.b16 %v238
    %v794 = vunpack.c.h.b16 %v238
    %v795 = vunpack.c.l.b16 %v239
    %v796 = vunpack.c.h.b16 %v239
    %v797 = vunpack.c.l.b16 %v240
    %v798 = vunpack.c.h.b16 %v240
    %v799 = vunpack.c.l.b16 %v241
    %v800 = vunpack.c.h.b16 %v241
    %v801 = vunpack.c.l.b16 %v242
    %v802 = vunpack.c.h.b16 %v242
    %v803 = vunpack.c.l.b16 %v243
    %v804 = vunpack.c.h.b16 %v243
    %v805 = vunpack.c.l.b16 %v244
    %v806 = vunpack.c.h.b16 %v244
    %v807 = vunpack.c.l.b16 %v245
    %v808 = vunpack.c.h.b16 %v245
    %v809 = vunpack.c.l.b16 %v246
    %v810 = vunpack.c.h.b16 %v246
    %v811 = vunpack.c.l.b16 %v247
    %v812 = vunpack.c.h.b16 %v247
    %v813 = vunpack.c.l.b16 %v248
    %v814 = vunpack.c.h.b16 %v248
    %v815 = vunpack.c.l.b16 %v249
    %v816 = vunpack.c.h.b16 %v249
    %v817 = vunpack.c.l.b16 %v250
    %v818 = vunpack.c.h.b16 %v250
    %v819 = vunpack.c.l.b16 %v251
    %v820 = vunpack.c.h.b16 %v251
    %v821 = vunpack.c.l.b16 %v252
    %v822 = vunpack.c.h.b16 %v252
    %v823 = vunpack.c.l.b16 %v253
    %v824 = vunpack.c.h.b16 %v253
    %v825 = vunpack.c.l.b16 %v254
    %v826 = vunpack.c.h.b16 %v254
    %v827 = vunpack.c.l.b16 %v255
    %v828 = vunpack.c.h.b16 %v255
    %v829 = vunpack.c.l.b16 %v256
    %v830 = vunpack.c.h.b16 %v256
    %v831 = vunpack.c.l.b16 %v257
    %v832 = vunpack.c.h.b16 %v257
    %v833 = vunpack.c.l.b16 %v258
    %v834 = vunpack.c.h.b16 %v258
    %v835 = vunpack.c.l.b16 %v259
    %v836 = vunpack.c.h.b16 %v259
    %v837 = vunpack.c.l.b16 %v260
    %v838 = vunpack.c.h.b16 %v260
    %v839 = vunpack.c.l.b16 %v261
    %v840 = vunpack.c.h.b16 %v261
    %v841 = vunpack.c.l.b16 %v262
    %v842 = vunpack.c.h.b16 %v262
    %v843 = vunpack.c.l.b16 %v263
    %v844 = vunpack.c.h.b16 %v263
    %v845 = vunpack.c.l.b16 %v264
    %v846 = vunpack.c.h.b16 %v264
    %v847 = vunpack.c.l.b16 %v265
    %v848 = vunpack.c.h.b16 %v265
    %v849 = vunpack.c.l.b16 %v266
    %v850 = vunpack.c.h.b16 %v266
    %v851 = vunpack.c.l.b16 %v267
    %v852 = vunpack.c.h.b16 %v267
    %v853 = vunpack.c.l.b16 %v268
    %v854 = vunpack.c.h.b16 %v268
    %v855 = vunpack.c.l.b16 %v269
    %v856 = vunpack.c.h.b16 %v269
    %v857 = vunpack.c.l.b16 %v270
    %v858 = vunpack.c.h.b16 %v270
    %v859 = vunpack.c.l.b16 %v271
    %v860 = vunpack.c.h.b16 %v271
    %v861 = vunpack.c.l.b16 %v272
    %v862 = vunpack.c.h.b16 %v272
    %v863 = vunpack.c.l.b16 %v273
    %v864 = vunpack.c.h.b16 %v273
    %v865 = vunpack.c.l.b16 %v274
    %v866 = vunpack.c.h.b16 %v274
    %v867 = vunpack.c.l.b16 %v275
    %v868 = vunpack.c.h.b16 %v275
    %v869 = vunpack.c.l.b16 %v276
    %v870 = vunpack.c.h.b16 %v276
    %v871 = vunpack.c.l.b16 %v277
    %v872 = vunpack.c.h.b16 %v277
    %v873 = vunpack.c.l.b16 %v278
    %v874 = vunpack.c.h.b16 %v278
    %v875 = vunpack.c.l.b16 %v279
    %v876 = vunpack.c.h.b16 %v279
    %v877 = vunpack.c.l.b16 %v280
    %v878 = vunpack.c.h.b16 %v280
    %v879 = vunpack.c.l.b16 %v281
    %v880 = vunpack.c.h.b16 %v281
    %v881 = vunpack.c.l.b16 %v282
    %v882 = vunpack.c.h.b16 %v282
    %v883 = vunpack.c.l.b16 %v283
    %v884 = vunpack.c.h.b16 %v283
    %v885 = vunpack.c.l.b16 %v284
    %v886 = vunpack.c.h.b16 %v284
    %v887 = vunpack.c.l.b16 %v285
    %v888 = vunpack.c.h.b16 %v285
    %v889 = vunpack.c.l.b16 %v286
    %v890 = vunpack.c.h.b16 %v286
    %v891 = vunpack.c.l.b16 %v287
    %v892 = vunpack.c.h.b16 %v287
    %v893 = vunpack.c.l.b16 %v288
    %v894 = vunpack.c.h.b16 %v288
    %v895 = vunpack.c.l.b16 %v289
    %v896 = vunpack.c.h.b16 %v289
    %v897 = vunpack.c.l.b16 %v290
    %v898 = vunpack.c.h.b16 %v290
    %v899 = vunpack.c.l.b16 %v291
    %v900 = vunpack.c.h.b16 %v291
    %v901 = vunpack.c.l.b16 %v292
    %v902 = vunpack.c.h.b16 %v292
    %v903 = vunpack.c.l.b16 %v293
    %v904 = vunpack.c.h.b16 %v293
    %v905 = vunpack.c.l.b16 %v294
    %v906 = vunpack.c.h.b16 %v294
    %v907 = vunpack.c.l.b16 %v295
    %v908 = vunpack.c.h.b16 %v295
    %v909 = vunpack.c.l.b16 %v296
    %v910 = vunpack.c.h.b16 %v296
    %v911 = vunpack.c.l.b16 %v297
    %v912 = vunpack.c.h.b16 %v297
    %v913 = vunpack.c.l.b16 %v298
    %v914 = vunpack.c.h.b16 %v298
    %v915 = vunpack.c.l.b16 %v299
    %v916 = vunpack.c.h.b16 %v299
    %v917 = vunpack.c.l.b16 %v300
    %v918 = vunpack.c.h.b16 %v300
    %v919 = vunpack.c.l.b16 %v301
    %v920 = vunpack.c.h.b16 %v301
    %v921 = vunpack.c.l.b16 %v302
    %v922 = vunpack.c.h.b16 %v302
    %v923 = vunpack.c.l.b16 %v303
    %v924 = vunpack.c.h.b16 %v303
    %v925 = vunpack.c.l.b16 %v304
    %v926 = vunpack.c.h.b16 %v304
    %v927 = vunpack.c.l.b16 %v305
    %v928 = vunpack.c.h.b16 %v305
    %v929 = vunpack.c.l.b16 %v306
    %v930 = vunpack.c.h.b16 %v306
    %v931 = vunpack.c.l.b16 %v307
    %v932 = vunpack.c.h.b16 %v307
    %v933 = vunpack.c.l.b16 %v308
    %v934 = vunpack.c.h.b16 %v308
    %v935 = vunpack.c.l.b16 %v309
    %v936 = vunpack.c.h.b16 %v309
    %v937 = vunpack.c.l.b16 %v310
    %v938 = vunpack.c.h.b16 %v310
    %v939 = vunpack.c.l.b16 %v311
    %v940 = vunpack.c.h.b16 %v311
    %v941 = vunpack.c.l.b16 %v312
    %v942 = vunpack.c.h.b16 %v312
    %v943 = vunpack.c.l.b16 %v313
    %v944 = vunpack.c.h.b16 %v313
    %v945 = vunpack.c.l.b16 %v314
    %v946 = vunpack.c.h.b16 %v314
    %v947 = vunpack.c.l.b16 %v315
    %v948 = vunpack.c.h.b16 %v315
    %v949 = vunpack.c.l.b16 %v316
    %v950 = vunpack.c.h.b16 %v316
    %v951 = vunpack.c.l.b16 %v317
    %v952 = vunpack.c.h.b16 %v317
    %v953 = vunpack.c.l.b16 %v318
    %v954 = vunpack.c.h.b16 %v318
    %v955 = vunpack.c.l.b16 %v319
    %v956 = vunpack.c.h.b16 %v319
    %v957 = vunpack.c.l.b16 %v320
    %v958 = vunpack.c.h.b16 %v320
    %v959 = vunpack.c.l.b16 %v321
    %v960 = vunpack.c.h.b16 %v321
    %v961 = vunpack.c.l.b16 %v322
    %v962 = vunpack.c.h.b16 %v322
    %v963 = vunpack.c.l.b16 %v323
    %v964 = vunpack.c.h.b16 %v323
    %v965 = vunpack.c.l.b16 %v324
    %v966 = vunpack.c.h.b16 %v324
    %v967 = vunpack.c.l.b16 %v325
    %v968 = vunpack.c.h.b16 %v325
    %v969 = vunpack.c.l.b16 %v326
    %v970 = vunpack.c.h.b16 %v326
    %v971 = vunpack.c.l.b16 %v327
    %v972 = vunpack.c.h.b16 %v327
    %v973 = vunpack.c.l.b16 %v328
    %v974 = vunpack.c.h.b16 %v328
    %v975 = vunpack.c.l.b16 %v329
    %v976 = vunpack.c.h.b16 %v329
    %v977 = vunpack.c.l.b16 %v330
    %v978 = vunpack.c.h.b16 %v330
    %v979 = vunpack.c.l.b16 %v331
    %v980 = vunpack.c.h.b16 %v331
    %v981 = vunpack.c.l.b16 %v332
    %v982 = vunpack.c.h.b16 %v332
    %v983 = vunpack.c.l.b16 %v333
    %v984 = vunpack.c.h.b16 %v333
    %v985 = vunpack.c.l.b16 %v334
    %v986 = vunpack.c.h.b16 %v334
    %v987 = vunpack.c.l.b16 %v335
    %v988 = vunpack.c.h.b16 %v335
    %v989 = vunpack.c.l.b16 %v336
    %v990 = vunpack.c.h.b16 %v336
    %v991 = vunpack.c.l.b16 %v337
    %v992 = vunpack.c.h.b16 %v337
    %v993 = vunpack.c.l.b16 %v338
    %v994 = vunpack.c.h.b16 %v338
    %v995 = vunpack.c.l.b16 %v339
    %v996 = vunpack.c.h.b16 %v339
    %v997 = vunpack.c.l.b16 %v340
    %v998 = vunpack.c.h.b16 %v340
    %v999 = vunpack.c.l.b16 %v341
    %v1000 = vunpack.c.h.b16 %v341
    %v1001 = vunpack.c.l.b16 %v342
    %v1002 = vunpack.c.h.b16 %v342
    %v1003 = vunpack.c.l.b16 %v343
    %v1004 = vunpack.c.h.b16 %v343
    %v1005 = vunpack.c.l.b16 %v344
    %v1006 = vunpack.c.h.b16 %v344
    %v1007 = vunpack.c.l.b16 %v345
    %v1008 = vunpack.c.h.b16 %v345
    %v1009 = vunpack.c.l.b16 %v346
    %v1010 = vunpack.c.h.b16 %v346
    %v1011 = vunpack.c.l.b16 %v347
    %v1012 = vunpack.c.h.b16 %v347
    %v1013 = vunpack.c.l.b16 %v348
    %v1014 = vunpack.c.h.b16 %v348
    %v1015 = vunpack.c.l.b16 %v349
    %v1016 = vunpack.c.h.b16 %v349
    %v1017 = vunpack.c.l.b16 %v350
    %v1018 = vunpack.c.h.b16 %v350
    %v1019 = vunpack.c.l.b16 %v351
    %v1020 = vunpack.c.h.b16 %v351
    %v1021 = vunpack.c.l.b16 %v352
    %v1022 = vunpack.c.h.b16 %v352
    %v1023 = vunpack.c.l.b16 %v353
    %v1024 = vunpack.c.h.b16 %v353
    %v1025 = vunpack.c.l.b16 %v354
    %v1026 = vunpack.c.h.b16 %v354
    %v1027 = vunpack.c.l.b16 %v355
    %v1028 = vunpack.c.h.b16 %v355
    %v1029 = vunpack.c.l.b16 %v356
    %v1030 = vunpack.c.h.b16 %v356
    %v1031 = vunpack.c.l.b16 %v357
    %v1032 = vunpack.c.h.b16 %v357
    %v1033 = vunpack.c.l.b16 %v358
    %v1034 = vunpack.c.h.b16 %v358
    %v1035 = vunpack.c.l.b16 %v359
    %v1036 = vunpack.c.h.b16 %v359
    %v1037 = vunpack.c.l.b16 %v360
    %v1038 = vunpack.c.h.b16 %v360
    %v1039 = vunpack.c.l.b16 %v361
    %v1040 = vunpack.c.h.b16 %v361
    %v1041 = vunpack.c.l.b16 %v362
    %v1042 = vunpack.c.h.b16 %v362
    %v1043 = vunpack.c.l.b16 %v363
    %v1044 = vunpack.c.h.b16 %v363
    %v1045 = vunpack.c.l.b16 %v364
    %v1046 = vunpack.c.h.b16 %v364
    %v1047 = vpack.c.b16 %v603, %v599
    %v1048 = vpack.c.b16 %v604, %v600
    %v1049 = vpack.c.b16 %v605, %v601
    %v1050 = vpack.c.b16 %v606, %v602
    %v1051 = vpack.c.b16 %v611, %v607
    %v1052 = vpack.c.b16 %v612, %v608
    %v1053 = vpack.c.b16 %v613, %v609
    %v1054 = vpack.c.b16 %v614, %v610
    %v1055 = vpack.c.b16 %v619, %v615
    %v1056 = vpack.c.b16 %v620, %v616
    %v1057 = vpack.c.b16 %v621, %v617
    %v1058 = vpack.c.b16 %v622, %v618
    %v1059 = vpack.c.b16 %v627, %v623
    %v1060 = vpack.c.b16 %v628, %v624
    %v1061 = vpack.c.b16 %v629, %v625
    %v1062 = vpack.c.b16 %v630, %v626
    %v1063 = vpack.c.b16 %v635, %v631
    %v1064 = vpack.c.b16 %v636, %v632
    %v1065 = vpack.c.b16 %v637, %v633
    %v1066 = vpack.c.b16 %v638, %v634
    %v1067 = vpack.c.b16 %v643, %v639
    %v1068 = vpack.c.b16 %v644, %v640
    %v1069 = vpack.c.b16 %v645, %v641
    %v1070 = vpack.c.b16 %v646, %v642
    %v1071 = vpack.c.b16 %v651, %v647
    %v1072 = vpack.c.b16 %v652, %v648
    %v1073 = vpack.c.b16 %v653, %v649
    %v1074 = vpack.c.b16 %v654, %v650
    %v1075 = vpack.c.b16 %v659, %v655
    %v1076 = vpack.c.b16 %v660, %v656
    %v1077 = vpack.c.b16 %v661, %v657
    %v1078 = vpack.c.b16 %v662, %v658
    %v1079 = vpack.c.b16 %v667, %v663
    %v1080 = vpack.c.b16 %v668, %v664
    %v1081 = vpack.c.b16 %v669, %v665
    %v1082 = vpack.c.b16 %v670, %v666
    %v1083 = vpack.c.b16 %v675, %v671
    %v1084 = vpack.c.b16 %v676, %v672
    %v1085 = vpack.c.b16 %v677, %v673
    %v1086 = vpack.c.b16 %v678, %v674
    %v1087 = vpack.c.b16 %v683, %v679
    %v1088 = vpack.c.b16 %v684, %v680
    %v1089 = vpack.c.b16 %v685, %v681
    %v1090 = vpack.c.b16 %v686, %v682
    %v1091 = vpack.c.b16 %v691, %v687
    %v1092 = vpack.c.b16 %v692, %v688
    %v1093 = vpack.c.b16 %v693, %v689
    %v1094 = vpack.c.b16 %v694, %v690
    %v1095 = vpack.c.b16 %v699, %v695
    %v1096 = vpack.c.b16 %v700, %v696
    %v1097 = vpack.c.b16 %v701, %v697
    %v1098 = vpack.c.b16 %v702, %v698
    %v1099 = vpack.c.b16 %v707, %v703
    %v1100 = vpack.c.b16 %v708, %v704
    %v1101 = vpack.c.b16 %v709, %v705
    %v1102 = vpack.c.b16 %v710, %v706
    %v1103 = vpack.c.b16 %v715, %v711
    %v1104 = vpack.c.b16 %v716, %v712
    %v1105 = vpack.c.b16 %v717, %v713
    %v1106 = vpack.c.b16 %v718, %v714
    %v1107 = vpack.c.b16 %v723, %v719
    %v1108 = vpack.c.b16 %v724, %v720
    %v1109 = vpack.c.b16 %v725, %v721
    %v1110 = vpack.c.b16 %v726, %v722
    %v1111 = vpack.c.b16 %v731, %v727
    %v1112 = vpack.c.b16 %v732, %v728
    %v1113 = vpack.c.b16 %v733, %v729
    %v1114 = vpack.c.b16 %v734, %v730
    %v1115 = vpack.c.b16 %v739, %v735
    %v1116 = vpack.c.b16 %v740, %v736
    %v1117 = vpack.c.b16 %v741, %v737
    %v1118 = vpack.c.b16 %v742, %v738
    %v1119 = vpack.c.b16 %v747, %v743
    %v1120 = vpack.c.b16 %v748, %v744
    %v1121 = vpack.c.b16 %v749, %v745
    %v1122 = vpack.c.b16 %v750, %v746
    %v1123 = vpack.c.b16 %v755, %v751
    %v1124 = vpack.c.b16 %v756, %v752
    %v1125 = vpack.c.b16 %v757, %v753
    %v1126 = vpack.c.b16 %v758, %v754
    %v1127 = vpack.c.b16 %v763, %v759
    %v1128 = vpack.c.b16 %v764, %v760
    %v1129 = vpack.c.b16 %v765, %v761
    %v1130 = vpack.c.b16 %v766, %v762
    %v1131 = vpack.c.b16 %v771, %v767
    %v1132 = vpack.c.b16 %v772, %v768
    %v1133 = vpack.c.b16 %v773, %v769
    %v1134 = vpack.c.b16 %v774, %v770
    %v1135 = vpack.c.b16 %v779, %v775
    %v1136 = vpack.c.b16 %v780, %v776
    %v1137 = vpack.c.b16 %v781, %v777
    %v1138 = vpack.c.b16 %v782, %v778
    %v1139 = vpack.c.b16 %v787, %v783
    %v1140 = vpack.c.b16 %v788, %v784
    %v1141 = vpack.c.b16 %v789, %v785
    %v1142 = vpack.c.b16 %v790, %v786
    %v1143 = vpack.c.b16 %v795, %v791
    %v1144 = vpack.c.b16 %v796, %v792
    %v1145 = vpack.c.b16 %v797, %v793
    %v1146 = vpack.c.b16 %v798, %v794
    %v1147 = vpack.c.b16 %v803, %v799
    %v1148 = vpack.c.b16 %v804, %v800
    %v1149 = vpack.c.b16 %v805, %v801
    %v1150 = vpack.c.b16 %v806, %v802
    %v1151 = vpack.c.b16 %v811, %v807
    %v1152 = vpack.c.b16 %v812, %v808
    %v1153 = vpack.c.b16 %v813, %v809
    %v1154 = vpack.c.b16 %v814, %v810
    %v1155 = vpack.c.b16 %v819, %v815
    %v1156 = vpack.c.b16 %v820, %v816
    %v1157 = vpack.c.b16 %v821, %v817
    %v1158 = vpack.c.b16 %v822, %v818
    %v1159 = vpack.c.b16 %v827, %v823
    %v1160 = vpack.c.b16 %v828, %v824
    %v1161 = vpack.c.b16 %v829, %v825
    %v1162 = vpack.c.b16 %v830, %v826
    %v1163 = vpack.c.b16 %v835, %v831
    %v1164 = vpack.c.b16 %v836, %v832
    %v1165 = vpack.c.b16 %v837, %v833
    %v1166 = vpack.c.b16 %v838, %v834
    %v1167 = vpack.c.b16 %v843, %v839
    %v1168 = vpack.c.b16 %v844, %v840
    %v1169 = vpack.c.b16 %v845, %v841
    %v1170 = vpack.c.b16 %v846, %v842
    %v1171 = vpack.c.b16 %v851, %v847
    %v1172 = vpack.c.b16 %v852, %v848
    %v1173 = vpack.c.b16 %v853, %v849
    %v1174 = vpack.c.b16 %v854, %v850
    %v1175 = vpack.c.b16 %v859, %v855
    %v1176 = vpack.c.b16 %v860, %v856
    %v1177 = vpack.c.b16 %v861, %v857
    %v1178 = vpack.c.b16 %v862, %v858
    %v1179 = vpack.c.b16 %v867, %v863
    %v1180 = vpack.c.b16 %v868, %v864
    %v1181 = vpack.c.b16 %v869, %v865
    %v1182 = vpack.c.b16 %v870, %v866
    %v1183 = vpack.c.b16 %v875, %v871
    %v1184 = vpack.c.b16 %v876, %v872
    %v1185 = vpack.c.b16 %v877, %v873
    %v1186 = vpack.c.b16 %v878, %v874
    %v1187 = vpack.c.b16 %v883, %v879
    %v1188 = vpack.c.b16 %v884, %v880
    %v1189 = vpack.c.b16 %v885, %v881
    %v1190 = vpack.c.b16 %v886, %v882
    %v1191 = vpack.c.b16 %v891, %v887
    %v1192 = vpack.c.b16 %v892, %v888
    %v1193 = vpack.c.b16 %v893, %v889
    %v1194 = vpack.c.b16 %v894, %v890
    %v1195 = vpack.c.b16 %v899, %v895
    %v1196 = vpack.c.b16 %v900, %v896
    %v1197 = vpack.c.b16 %v901, %v897
    %v1198 = vpack.c.b16 %v902, %v898
    %v1199 = vpack.c.b16 %v907, %v903
    %v1200 = vpack.c.b16 %v908, %v904
    %v1201 = vpack.c.b16 %v909, %v905
    %v1202 = vpack.c.b16 %v910, %v906
    %v1203 = vpack.c.b16 %v915, %v911
    %v1204 = vpack.c.b16 %v916, %v912
    %v1205 = vpack.c.b16 %v917, %v913
    %v1206 = vpack.c.b16 %v918, %v914
    %v1207 = vpack.c.b16 %v923, %v919
    %v1208 = vpack.c.b16 %v924, %v920
    %v1209 = vpack.c.b16 %v925, %v921
    %v1210 = vpack.c.b16 %v926, %v922
    %v1211 = vpack.c.b16 %v931, %v927
    %v1212 = vpack.c.b16 %v932, %v928
    %v1213 = vpack.c.b16 %v933, %v929
    %v1214 = vpack.c.b16 %v934, %v930
    %v1215 = vpack.c.b16 %v939, %v935
    %v1216 = vpack.c.b16 %v940, %v936
    %v1217 = vpack.c.b16 %v941, %v937
    %v1218 = vpack.c.b16 %v942, %v938
    %v1219 = vpack.c.b16 %v947, %v943
    %v1220 = vpack.c.b16 %v948, %v944
    %v1221 = vpack.c.b16 %v949, %v945
    %v1222 = vpack.c.b16 %v950, %v946
    %v1223 = vpack.c.b16 %v955, %v951
    %v1224 = vpack.c.b16 %v956, %v952
    %v1225 = vpack.c.b16 %v957, %v953
    %v1226 = vpack.c.b16 %v958, %v954
    %v1227 = vpack.c.b16 %v963, %v959
    %v1228 = vpack.c.b16 %v964, %v960
    %v1229 = vpack.c.b16 %v965, %v961
    %v1230 = vpack.c.b16 %v966, %v962
    %v1231 = vpack.c.b16 %v971, %v967
    %v1232 = vpack.c.b16 %v972, %v968
    %v1233 = vpack.c.b16 %v973, %v969
    %v1234 = vpack.c.b16 %v974, %v970
    %v1235 = vpack.c.b16 %v979, %v975
    %v1236 = vpack.c.b16 %v980, %v976
    %v1237 = vpack.c.b16 %v981, %v977
    %v1238 = vpack.c.b16 %v982, %v978
    %v1239 = vpack.c.b16 %v987, %v983
    %v1240 = vpack.c.b16 %v988, %v984
    %v1241 = vpack.c.b16 %v989, %v985
    %v1242 = vpack.c.b16 %v990, %v986
    %v1243 = vpack.c.b16 %v995, %v991
    %v1244 = vpack.c.b16 %v996, %v992
    %v1245 = vpack.c.b16 %v997, %v993
    %v1246 = vpack.c.b16 %v998, %v994
    %v1247 = vpack.c.b16 %v1003, %v999
    %v1248 = vpack.c.b16 %v1004, %v1000
    %v1249 = vpack.c.b16 %v1005, %v1001
    %v1250 = vpack.c.b16 %v1006, %v1002
    %v1251 = vpack.c.b16 %v1011, %v1007
    %v1252 = vpack.c.b16 %v1012, %v1008
    %v1253 = vpack.c.b16 %v1013, %v1009
    %v1254 = vpack.c.b16 %v1014, %v1010
    %v1255 = vpack.c.b16 %v1019, %v1015
    %v1256 = vpack.c.b16 %v1020, %v1016
    %v1257 = vpack.c.b16 %v1021, %v1017
    %v1258 = vpack.c.b16 %v1022, %v1018
    %v1259 = vpack.c.b16 %v1027, %v1023
    %v1260 = vpack.c.b16 %v1028, %v1024
    %v1261 = vpack.c.b16 %v1029, %v1025
    %v1262 = vpack.c.b16 %v1030, %v1026
    %v1263 = vpack.c.b16 %v1035, %v1031
    %v1264 = vpack.c.b16 %v1036, %v1032
    %v1265 = vpack.c.b16 %v1037, %v1033
    %v1266 = vpack.c.b16 %v1038, %v1034
    %v1267 = vpack.c.b16 %v1043, %v1039
    %v1268 = vpack.c.b16 %v1044, %v1040
    %v1269 = vpack.c.b16 %v1045, %v1041
    %v1270 = vpack.c.b16 %v1046, %v1042
    %1495 = vmatpush.bf16.msra.mxu0 %v1075
    %1496 = vmatpush.bf16.msra.mxu0 %v1071
    %1497 = vmatpush.bf16.msra.mxu0 %v1067
    %1498 = vmatpush.bf16.msra.mxu0 %v1063
    %1499 = vmatpush.bf16.msra.mxu0 %v1059
    %1500 = vmatpush.bf16.msra.mxu0 %v1055
    %1501 = vmatpush.bf16.msra.mxu0 %v1051
    %1502 = vmatpush.bf16.msra.mxu0 %v1047
    %1503 = vmatmul.bf16.gmra.mxu0 %v134
    %v1504 = vpop.f32.mrf.mxu0
    %v1505 = vadd.f32 %v367, %v1504
    %v1506 = vpop.f32.mrf.mxu0
    %1507 = vdwg.mxu0
    %1508 = vmatpush.bf16.msra.mxu0 %v1107
    %1509 = vmatpush.bf16.msra.mxu0 %v1103
    %1510 = vmatpush.bf16.msra.mxu0 %v1099
    %1511 = vmatpush.bf16.msra.mxu0 %v1095
    %1512 = vmatpush.bf16.msra.mxu0 %v1091
    %1513 = vmatpush.bf16.msra.mxu0 %v1087
    %1514 = vmatpush.bf16.msra.mxu0 %v1083
    %1515 = vmatpush.bf16.msra.mxu0 %v1079
    %1516 = vmatmul.bf16.gmra.mxu0 %v135
    %v1517 = vpop.f32.mrf.mxu0
    %v1518 = vadd.f32 %v1505, %v1517
    %v1519 = vpop.f32.mrf.mxu0
    %1520 = vdwg.mxu0
    %1521 = vmatpush.bf16.msra.mxu0 %v1139
    %1522 = vmatpush.bf16.msra.mxu0 %v1135
    %1523 = vmatpush.bf16.msra.mxu0 %v1131
    %1524 = vmatpush.bf16.msra.mxu0 %v1127
    %1525 = vmatpush.bf16.msra.mxu0 %v1123
    %1526 = vmatpush.bf16.msra.mxu0 %v1119
    %1527 = vmatpush.bf16.msra.mxu0 %v1115
    %1528 = vmatpush.bf16.msra.mxu0 %v1111
    %1529 = vmatmul.bf16.gmra.mxu0 %v136
    %v1530 = vpop.f32.mrf.mxu0
    %v1531 = vadd.f32 %v1518, %v1530
    %v1532 = vpop.f32.mrf.mxu0
    %1533 = vdwg.mxu0
    %1534 = vmatpush.bf16.msra.mxu0 %v1171
    %1535 = vmatpush.bf16.msra.mxu0 %v1167
    %1536 = vmatpush.bf16.msra.mxu0 %v1163
    %1537 = vmatpush.bf16.msra.mxu0 %v1159
    %1538 = vmatpush.bf16.msra.mxu0 %v1155
    %1539 = vmatpush.bf16.msra.mxu0 %v1151
    %1540 = vmatpush.bf16.msra.mxu0 %v1147
    %1541 = vmatpush.bf16.msra.mxu0 %v1143
    %1542 = vmatmul.bf16.gmra.mxu0 %v137
    %v1543 = vpop.f32.mrf.mxu0
    %v1544 = vadd.f32 %v1531, %v1543
    %v1545 = vpop.f32.mrf.mxu0
    %1546 = vdwg.mxu0
    %1547 = vmatpush.bf16.msra.mxu0 %v1203
    %1548 = vmatpush.bf16.msra.mxu0 %v1199
    %1549 = vmatpush.bf16.msra.mxu0 %v1195
    %1550 = vmatpush.bf16.msra.mxu0 %v1191
    %1551 = vmatpush.bf16.msra.mxu0 %v1187
    %1552 = vmatpush.bf16.msra.mxu0 %v1183
    %1553 = vmatpush.bf16.msra.mxu0 %v1179
    %1554 = vmatpush.bf16.msra.mxu0 %v1175
    %1555 = vmatmul.bf16.gmra.mxu0 %v138
    %v1556 = vpop.f32.mrf.mxu0
    %v1557 = vadd.f32 %v1544, %v1556
    %v1558 = vpop.f32.mrf.mxu0
    %1559 = vdwg.mxu0
    %1560 = vmatpush.bf16.msra.mxu0 %v1235
    %1561 = vmatpush.bf16.msra.mxu0 %v1231
    %1562 = vmatpush.bf16.msra.mxu0 %v1227
    %1563 = vmatpush.bf16.msra.mxu0 %v1223
    %1564 = vmatpush.bf16.msra.mxu0 %v1219
    %1565 = vmatpush.bf16.msra.mxu0 %v1215
    %1566 = vmatpush.bf16.msra.mxu0 %v1211
    %1567 = vmatpush.bf16.msra.mxu0 %v1207
    %1568 = vmatmul.bf16.gmra.mxu0 %v139
    %v1569 = vpop.f32.mrf.mxu0
    %v1570 = vadd.f32 %v1557, %v1569
    %v1571 = vpop.f32.mrf.mxu0
    %1572 = vdwg.mxu0
    %1573 = vmatpush.bf16.msra.mxu0 %v1267
    %1574 = vmatpush.bf16.msra.mxu0 %v1263
    %1575 = vmatpush.bf16.msra.mxu0 %v1259
    %1576 = vmatpush.bf16.msra.mxu0 %v1255
    %1577 = vmatpush.bf16.msra.mxu0 %v1251
    %1578 = vmatpush.bf16.msra.mxu0 %v1247
    %1579 = vmatpush.bf16.msra.mxu0 %v1243
    %1580 = vmatpush.bf16.msra.mxu0 %v1239
    %1581 = vmatmul.bf16.gmra.mxu0 %v140
    %v1582 = vpop.f32.mrf.mxu0
    %v1583 = vadd.f32 %v1570, %v1582
    %v1584 = vpop.f32.mrf.mxu0
    %1585 = vdwg.mxu0
    %1586 = vmatpush.bf16.msra.mxu0 %v1076
    %1587 = vmatpush.bf16.msra.mxu0 %v1072
    %1588 = vmatpush.bf16.msra.mxu0 %v1068
    %1589 = vmatpush.bf16.msra.mxu0 %v1064
    %1590 = vmatpush.bf16.msra.mxu0 %v1060
    %1591 = vmatpush.bf16.msra.mxu0 %v1056
    %1592 = vmatpush.bf16.msra.mxu0 %v1052
    %1593 = vmatpush.bf16.msra.mxu0 %v1048
    %1594 = vmatmul.bf16.gmra.mxu0 %v134
    %v1595 = vpop.f32.mrf.mxu0
    %v1596 = vadd.f32 %v368, %v1595
    %v1597 = vpop.f32.mrf.mxu0
    %1598 = vdwg.mxu0
    %1599 = vmatpush.bf16.msra.mxu0 %v1108
    %1600 = vmatpush.bf16.msra.mxu0 %v1104
    %1601 = vmatpush.bf16.msra.mxu0 %v1100
    %1602 = vmatpush.bf16.msra.mxu0 %v1096
    %1603 = vmatpush.bf16.msra.mxu0 %v1092
    %1604 = vmatpush.bf16.msra.mxu0 %v1088
    %1605 = vmatpush.bf16.msra.mxu0 %v1084
    %1606 = vmatpush.bf16.msra.mxu0 %v1080
    %1607 = vmatmul.bf16.gmra.mxu0 %v135
    %v1608 = vpop.f32.mrf.mxu0
    %v1609 = vadd.f32 %v1596, %v1608
    %v1610 = vpop.f32.mrf.mxu0
    %1611 = vdwg.mxu0
    %1612 = vmatpush.bf16.msra.mxu0 %v1140
    %1613 = vmatpush.bf16.msra.mxu0 %v1136
    %1614 = vmatpush.bf16.msra.mxu0 %v1132
    %1615 = vmatpush.bf16.msra.mxu0 %v1128
    %1616 = vmatpush.bf16.msra.mxu0 %v1124
    %1617 = vmatpush.bf16.msra.mxu0 %v1120
    %1618 = vmatpush.bf16.msra.mxu0 %v1116
    %1619 = vmatpush.bf16.msra.mxu0 %v1112
    %1620 = vmatmul.bf16.gmra.mxu0 %v136
    %v1621 = vpop.f32.mrf.mxu0
    %v1622 = vadd.f32 %v1609, %v1621
    %v1623 = vpop.f32.mrf.mxu0
    %1624 = vdwg.mxu0
    %1625 = vmatpush.bf16.msra.mxu0 %v1172
    %1626 = vmatpush.bf16.msra.mxu0 %v1168
    %1627 = vmatpush.bf16.msra.mxu0 %v1164
    %1628 = vmatpush.bf16.msra.mxu0 %v1160
    %1629 = vmatpush.bf16.msra.mxu0 %v1156
    %1630 = vmatpush.bf16.msra.mxu0 %v1152
    %1631 = vmatpush.bf16.msra.mxu0 %v1148
    %1632 = vmatpush.bf16.msra.mxu0 %v1144
    %1633 = vmatmul.bf16.gmra.mxu0 %v137
    %v1634 = vpop.f32.mrf.mxu0
    %v1635 = vadd.f32 %v1622, %v1634
    %v1636 = vpop.f32.mrf.mxu0
    %1637 = vdwg.mxu0
    %1638 = vmatpush.bf16.msra.mxu0 %v1204
    %1639 = vmatpush.bf16.msra.mxu0 %v1200
    %1640 = vmatpush.bf16.msra.mxu0 %v1196
    %1641 = vmatpush.bf16.msra.mxu0 %v1192
    %1642 = vmatpush.bf16.msra.mxu0 %v1188
    %1643 = vmatpush.bf16.msra.mxu0 %v1184
    %1644 = vmatpush.bf16.msra.mxu0 %v1180
    %1645 = vmatpush.bf16.msra.mxu0 %v1176
    %1646 = vmatmul.bf16.gmra.mxu0 %v138
    %v1647 = vpop.f32.mrf.mxu0
    %v1648 = vadd.f32 %v1635, %v1647
    %v1649 = vpop.f32.mrf.mxu0
    %1650 = vdwg.mxu0
    %1651 = vmatpush.bf16.msra.mxu0 %v1236
    %1652 = vmatpush.bf16.msra.mxu0 %v1232
    %1653 = vmatpush.bf16.msra.mxu0 %v1228
    %1654 = vmatpush.bf16.msra.mxu0 %v1224
    %1655 = vmatpush.bf16.msra.mxu0 %v1220
    %1656 = vmatpush.bf16.msra.mxu0 %v1216
    %1657 = vmatpush.bf16.msra.mxu0 %v1212
    %1658 = vmatpush.bf16.msra.mxu0 %v1208
    %1659 = vmatmul.bf16.gmra.mxu0 %v139
    %v1660 = vpop.f32.mrf.mxu0
    %v1661 = vadd.f32 %v1648, %v1660
    %v1662 = vpop.f32.mrf.mxu0
    %1663 = vdwg.mxu0
    %1664 = vmatpush.bf16.msra.mxu0 %v1268
    %1665 = vmatpush.bf16.msra.mxu0 %v1264
    %1666 = vmatpush.bf16.msra.mxu0 %v1260
    %1667 = vmatpush.bf16.msra.mxu0 %v1256
    %1668 = vmatpush.bf16.msra.mxu0 %v1252
    %1669 = vmatpush.bf16.msra.mxu0 %v1248
    %1670 = vmatpush.bf16.msra.mxu0 %v1244
    %1671 = vmatpush.bf16.msra.mxu0 %v1240
    %1672 = vmatmul.bf16.gmra.mxu0 %v140
    %v1673 = vpop.f32.mrf.mxu0
    %v1674 = vadd.f32 %v1661, %v1673
    %v1675 = vpop.f32.mrf.mxu0
    %1676 = vdwg.mxu0
    %1677 = vmatpush.bf16.msra.mxu0 %v1077
    %1678 = vmatpush.bf16.msra.mxu0 %v1073
    %1679 = vmatpush.bf16.msra.mxu0 %v1069
    %1680 = vmatpush.bf16.msra.mxu0 %v1065
    %1681 = vmatpush.bf16.msra.mxu0 %v1061
    %1682 = vmatpush.bf16.msra.mxu0 %v1057
    %1683 = vmatpush.bf16.msra.mxu0 %v1053
    %1684 = vmatpush.bf16.msra.mxu0 %v1049
    %1685 = vmatmul.bf16.gmra.mxu0 %v134
    %v1686 = vpop.f32.mrf.mxu0
    %v1687 = vadd.f32 %v369, %v1686
    %v1688 = vpop.f32.mrf.mxu0
    %1689 = vdwg.mxu0
    %1690 = vmatpush.bf16.msra.mxu0 %v1109
    %1691 = vmatpush.bf16.msra.mxu0 %v1105
    %1692 = vmatpush.bf16.msra.mxu0 %v1101
    %1693 = vmatpush.bf16.msra.mxu0 %v1097
    %1694 = vmatpush.bf16.msra.mxu0 %v1093
    %1695 = vmatpush.bf16.msra.mxu0 %v1089
    %1696 = vmatpush.bf16.msra.mxu0 %v1085
    %1697 = vmatpush.bf16.msra.mxu0 %v1081
    %1698 = vmatmul.bf16.gmra.mxu0 %v135
    %v1699 = vpop.f32.mrf.mxu0
    %v1700 = vadd.f32 %v1687, %v1699
    %v1701 = vpop.f32.mrf.mxu0
    %1702 = vdwg.mxu0
    %1703 = vmatpush.bf16.msra.mxu0 %v1141
    %1704 = vmatpush.bf16.msra.mxu0 %v1137
    %1705 = vmatpush.bf16.msra.mxu0 %v1133
    %1706 = vmatpush.bf16.msra.mxu0 %v1129
    %1707 = vmatpush.bf16.msra.mxu0 %v1125
    %1708 = vmatpush.bf16.msra.mxu0 %v1121
    %1709 = vmatpush.bf16.msra.mxu0 %v1117
    %1710 = vmatpush.bf16.msra.mxu0 %v1113
    %1711 = vmatmul.bf16.gmra.mxu0 %v136
    %v1712 = vpop.f32.mrf.mxu0
    %v1713 = vadd.f32 %v1700, %v1712
    %v1714 = vpop.f32.mrf.mxu0
    %1715 = vdwg.mxu0
    %1716 = vmatpush.bf16.msra.mxu0 %v1173
    %1717 = vmatpush.bf16.msra.mxu0 %v1169
    %1718 = vmatpush.bf16.msra.mxu0 %v1165
    %1719 = vmatpush.bf16.msra.mxu0 %v1161
    %1720 = vmatpush.bf16.msra.mxu0 %v1157
    %1721 = vmatpush.bf16.msra.mxu0 %v1153
    %1722 = vmatpush.bf16.msra.mxu0 %v1149
    %1723 = vmatpush.bf16.msra.mxu0 %v1145
    %1724 = vmatmul.bf16.gmra.mxu0 %v137
    %v1725 = vpop.f32.mrf.mxu0
    %v1726 = vadd.f32 %v1713, %v1725
    %v1727 = vpop.f32.mrf.mxu0
    %1728 = vdwg.mxu0
    %1729 = vmatpush.bf16.msra.mxu0 %v1205
    %1730 = vmatpush.bf16.msra.mxu0 %v1201
    %1731 = vmatpush.bf16.msra.mxu0 %v1197
    %1732 = vmatpush.bf16.msra.mxu0 %v1193
    %1733 = vmatpush.bf16.msra.mxu0 %v1189
    %1734 = vmatpush.bf16.msra.mxu0 %v1185
    %1735 = vmatpush.bf16.msra.mxu0 %v1181
    %1736 = vmatpush.bf16.msra.mxu0 %v1177
    %1737 = vmatmul.bf16.gmra.mxu0 %v138
    %v1738 = vpop.f32.mrf.mxu0
    %v1739 = vadd.f32 %v1726, %v1738
    %v1740 = vpop.f32.mrf.mxu0
    %1741 = vdwg.mxu0
    %1742 = vmatpush.bf16.msra.mxu0 %v1237
    %1743 = vmatpush.bf16.msra.mxu0 %v1233
    %1744 = vmatpush.bf16.msra.mxu0 %v1229
    %1745 = vmatpush.bf16.msra.mxu0 %v1225
    %1746 = vmatpush.bf16.msra.mxu0 %v1221
    %1747 = vmatpush.bf16.msra.mxu0 %v1217
    %1748 = vmatpush.bf16.msra.mxu0 %v1213
    %1749 = vmatpush.bf16.msra.mxu0 %v1209
    %1750 = vmatmul.bf16.gmra.mxu0 %v139
    %v1751 = vpop.f32.mrf.mxu0
    %v1752 = vadd.f32 %v1739, %v1751
    %v1753 = vpop.f32.mrf.mxu0
    %1754 = vdwg.mxu0
    %1755 = vmatpush.bf16.msra.mxu0 %v1269
    %1756 = vmatpush.bf16.msra.mxu0 %v1265
    %1757 = vmatpush.bf16.msra.mxu0 %v1261
    %1758 = vmatpush.bf16.msra.mxu0 %v1257
    %1759 = vmatpush.bf16.msra.mxu0 %v1253
    %1760 = vmatpush.bf16.msra.mxu0 %v1249
    %1761 = vmatpush.bf16.msra.mxu0 %v1245
    %1762 = vmatpush.bf16.msra.mxu0 %v1241
    %1763 = vmatmul.bf16.gmra.mxu0 %v140
    %v1764 = vpop.f32.mrf.mxu0
    %v1765 = vadd.f32 %v1752, %v1764
    %v1766 = vpop.f32.mrf.mxu0
    %1767 = vdwg.mxu0
    %1768 = vmatpush.bf16.msra.mxu0 %v1078
    %1769 = vmatpush.bf16.msra.mxu0 %v1074
    %1770 = vmatpush.bf16.msra.mxu0 %v1070
    %1771 = vmatpush.bf16.msra.mxu0 %v1066
    %1772 = vmatpush.bf16.msra.mxu0 %v1062
    %1773 = vmatpush.bf16.msra.mxu0 %v1058
    %1774 = vmatpush.bf16.msra.mxu0 %v1054
    %1775 = vmatpush.bf16.msra.mxu0 %v1050
    %1776 = vmatmul.bf16.gmra.mxu0 %v134
    %v1777 = vpop.f32.mrf.mxu0
    %v1778 = vadd.f32 %v370, %v1777
    %v1779 = vpop.f32.mrf.mxu0
    %1780 = vdwg.mxu0
    %1781 = vmatpush.bf16.msra.mxu0 %v1110
    %1782 = vmatpush.bf16.msra.mxu0 %v1106
    %1783 = vmatpush.bf16.msra.mxu0 %v1102
    %1784 = vmatpush.bf16.msra.mxu0 %v1098
    %1785 = vmatpush.bf16.msra.mxu0 %v1094
    %1786 = vmatpush.bf16.msra.mxu0 %v1090
    %1787 = vmatpush.bf16.msra.mxu0 %v1086
    %1788 = vmatpush.bf16.msra.mxu0 %v1082
    %1789 = vmatmul.bf16.gmra.mxu0 %v135
    %v1790 = vpop.f32.mrf.mxu0
    %v1791 = vadd.f32 %v1778, %v1790
    %v1792 = vpop.f32.mrf.mxu0
    %1793 = vdwg.mxu0
    %1794 = vmatpush.bf16.msra.mxu0 %v1142
    %1795 = vmatpush.bf16.msra.mxu0 %v1138
    %1796 = vmatpush.bf16.msra.mxu0 %v1134
    %1797 = vmatpush.bf16.msra.mxu0 %v1130
    %1798 = vmatpush.bf16.msra.mxu0 %v1126
    %1799 = vmatpush.bf16.msra.mxu0 %v1122
    %1800 = vmatpush.bf16.msra.mxu0 %v1118
    %1801 = vmatpush.bf16.msra.mxu0 %v1114
    %1802 = vmatmul.bf16.gmra.mxu0 %v136
    %v1803 = vpop.f32.mrf.mxu0
    %v1804 = vadd.f32 %v1791, %v1803
    %v1805 = vpop.f32.mrf.mxu0
    %1806 = vdwg.mxu0
    %1807 = vmatpush.bf16.msra.mxu0 %v1174
    %1808 = vmatpush.bf16.msra.mxu0 %v1170
    %1809 = vmatpush.bf16.msra.mxu0 %v1166
    %1810 = vmatpush.bf16.msra.mxu0 %v1162
    %1811 = vmatpush.bf16.msra.mxu0 %v1158
    %1812 = vmatpush.bf16.msra.mxu0 %v1154
    %1813 = vmatpush.bf16.msra.mxu0 %v1150
    %1814 = vmatpush.bf16.msra.mxu0 %v1146
    %1815 = vmatmul.bf16.gmra.mxu0 %v137
    %v1816 = vpop.f32.mrf.mxu0
    %v1817 = vadd.f32 %v1804, %v1816
    %v1818 = vpop.f32.mrf.mxu0
    %1819 = vdwg.mxu0
    %1820 = vmatpush.bf16.msra.mxu0 %v1206
    %1821 = vmatpush.bf16.msra.mxu0 %v1202
    %1822 = vmatpush.bf16.msra.mxu0 %v1198
    %1823 = vmatpush.bf16.msra.mxu0 %v1194
    %1824 = vmatpush.bf16.msra.mxu0 %v1190
    %1825 = vmatpush.bf16.msra.mxu0 %v1186
    %1826 = vmatpush.bf16.msra.mxu0 %v1182
    %1827 = vmatpush.bf16.msra.mxu0 %v1178
    %1828 = vmatmul.bf16.gmra.mxu0 %v138
    %v1829 = vpop.f32.mrf.mxu0
    %v1830 = vadd.f32 %v1817, %v1829
    %v1831 = vpop.f32.mrf.mxu0
    %1832 = vdwg.mxu0
    %1833 = vmatpush.bf16.msra.mxu0 %v1238
    %1834 = vmatpush.bf16.msra.mxu0 %v1234
    %1835 = vmatpush.bf16.msra.mxu0 %v1230
    %1836 = vmatpush.bf16.msra.mxu0 %v1226
    %1837 = vmatpush.bf16.msra.mxu0 %v1222
    %1838 = vmatpush.bf16.msra.mxu0 %v1218
    %1839 = vmatpush.bf16.msra.mxu0 %v1214
    %1840 = vmatpush.bf16.msra.mxu0 %v1210
    %1841 = vmatmul.bf16.gmra.mxu0 %v139
    %v1842 = vpop.f32.mrf.mxu0
    %v1843 = vadd.f32 %v1830, %v1842
    %v1844 = vpop.f32.mrf.mxu0
    %1845 = vdwg.mxu0
    %1846 = vmatpush.bf16.msra.mxu0 %v1270
    %1847 = vmatpush.bf16.msra.mxu0 %v1266
    %1848 = vmatpush.bf16.msra.mxu0 %v1262
    %1849 = vmatpush.bf16.msra.mxu0 %v1258
    %1850 = vmatpush.bf16.msra.mxu0 %v1254
    %1851 = vmatpush.bf16.msra.mxu0 %v1250
    %1852 = vmatpush.bf16.msra.mxu0 %v1246
    %1853 = vmatpush.bf16.msra.mxu0 %v1242
    %1854 = vmatmul.bf16.gmra.mxu0 %v140
    %v1855 = vpop.f32.mrf.mxu0
    %v1856 = vadd.f32 %v1843, %v1855
    %v1857 = vpop.f32.mrf.mxu0
    %1858 = vdwg.mxu0
    %v1859 = vmax.f32 %v1583, 0.0
    %v1860 = vmax.f32 %v1674, 0.0
    %v1861 = vmax.f32 %v1765, 0.0
    %v1862 = vmax.f32 %v1856, 0.0
    %v1863 = vpack.c.bf16 %v1859, %v1859
    %v1864 = vpack.c.bf16 %v1860, %v1860
    %v1865 = vpack.c.bf16 %v1861, %v1861
    %v1866 = vpack.c.bf16 %v1862, %v1862
    %v1867 = vld [vmem:[#allocation4] sm:$0xff]
    %v1868 = vld [vmem:[#allocation4 + $0x8] sm:$0xff]
    %v1869 = vld [vmem:[#allocation4 + $0x10] sm:$0xff]
    %v1870 = vld [vmem:[#allocation4 + $0x18] sm:$0xff]
    %v1871 = vld [vmem:[#allocation4 + $0x20] sm:$0xff]
    %v1872 = vld [vmem:[#allocation4 + $0x28] sm:$0xff]
    %v1873 = vld [vmem:[#allocation4 + $0x30] sm:$0xff]
    %v1874 = vld [vmem:[#allocation4 + $0x38] sm:$0xff]
    %v1875 = vld [vmem:[#allocation4 + $0x40] sm:$0xff]
    %v1876 = vld [vmem:[#allocation4 + $0x48] sm:$0xff]
    %v1877 = vld [vmem:[#allocation4 + $0x50] sm:$0xff]
    %v1878 = vld [vmem:[#allocation4 + $0x58] sm:$0xff]
    %v1879 = vld [vmem:[#allocation4 + $0x60] sm:$0xff]
    %v1880 = vld [vmem:[#allocation4 + $0x68] sm:$0xff]
    %v1881 = vld [vmem:[#allocation4 + $0x70] sm:$0xff]
    %v1882 = vld [vmem:[#allocation4 + $0x78] sm:$0xff]
    %v1883 = vld [vmem:[#allocation4 + $0x80] sm:$0xff]
    %v1884 = vld [vmem:[#allocation4 + $0x88] sm:$0xff]
    %v1885 = vld [vmem:[#allocation4 + $0x90] sm:$0xff]
    %v1886 = vld [vmem:[#allocation4 + $0x98] sm:$0xff]
    %v1887 = vld [vmem:[#allocation4 + $0xa0] sm:$0xff]
    %v1888 = vld [vmem:[#allocation4 + $0xa8] sm:$0xff]
    %v1889 = vld [vmem:[#allocation4 + $0xb0] sm:$0xff]
    %v1890 = vld [vmem:[#allocation4 + $0xb8] sm:$0xff]
    %v1891 = vld [vmem:[#allocation4 + $0xc0] sm:$0xff]
    %v1892 = vld [vmem:[#allocation4 + $0xc8] sm:$0xff]
    %v1893 = vld [vmem:[#allocation4 + $0xd0] sm:$0xff]
    %v1894 = vld [vmem:[#allocation4 + $0xd8] sm:$0xff]
    %v1895 = vld [vmem:[#allocation4 + $0xe0] sm:$0xff]
    %v1896 = vld [vmem:[#allocation4 + $0xe8] sm:$0xff]
    %v1897 = vld [vmem:[#allocation4 + $0xf0] sm:$0xff]
    %v1898 = vld [vmem:[#allocation4 + $0xf8] sm:$0xff]
    %v1899 = vld [vmem:[#allocation4 + $0x100] sm:$0xff]
    %v1900 = vld [vmem:[#allocation4 + $0x108] sm:$0xff]
    %v1901 = vld [vmem:[#allocation4 + $0x110] sm:$0xff]
    %v1902 = vld [vmem:[#allocation4 + $0x118] sm:$0xff]
    %v1903 = vld [vmem:[#allocation4 + $0x120] sm:$0xff]
    %v1904 = vld [vmem:[#allocation4 + $0x128] sm:$0xff]
    %v1905 = vld [vmem:[#allocation4 + $0x130] sm:$0xff]
    %v1906 = vld [vmem:[#allocation4 + $0x138] sm:$0xff]
    %v1907 = vld [vmem:[#allocation4 + $0x140] sm:$0xff]
    %v1908 = vld [vmem:[#allocation4 + $0x148] sm:$0xff]
    %v1909 = vld [vmem:[#allocation4 + $0x150] sm:$0xff]
    %v1910 = vld [vmem:[#allocation4 + $0x158] sm:$0xff]
    %v1911 = vld [vmem:[#allocation4 + $0x160] sm:$0xff]
    %v1912 = vld [vmem:[#allocation4 + $0x168] sm:$0xff]
    %v1913 = vld [vmem:[#allocation4 + $0x170] sm:$0xff]
    %v1914 = vld [vmem:[#allocation4 + $0x178] sm:$0xff]
    %v1915 = vld [vmem:[#allocation4 + $0x180] sm:$0xff]
    %v1916 = vld [vmem:[#allocation4 + $0x188] sm:$0xff]
    %v1917 = vld [vmem:[#allocation4 + $0x190] sm:$0xff]
    %v1918 = vld [vmem:[#allocation4 + $0x198] sm:$0xff]
    %v1919 = vld [vmem:[#allocation4 + $0x1a0] sm:$0xff]
    %v1920 = vld [vmem:[#allocation4 + $0x1a8] sm:$0xff]
    %v1921 = vld [vmem:[#allocation4 + $0x1b0] sm:$0xff]
    %v1922 = vld [vmem:[#allocation4 + $0x1b8] sm:$0xff]
    %v1923 = vld [vmem:[#allocation4 + $0x1c0] sm:$0xff]
    %v1924 = vld [vmem:[#allocation4 + $0x1c8] sm:$0xff]
    %v1925 = vld [vmem:[#allocation4 + $0x1d0] sm:$0xff]
    %v1926 = vld [vmem:[#allocation4 + $0x1d8] sm:$0xff]
    %v1927 = vld [vmem:[#allocation4 + $0x1e0] sm:$0xff]
    %v1928 = vld [vmem:[#allocation4 + $0x1e8] sm:$0xff]
    %v1929 = vld [vmem:[#allocation4 + $0x1f0] sm:$0xff]
    %v1930 = vld [vmem:[#allocation4 + $0x1f8] sm:$0xff]
    %v1931 = vld [vmem:[%s5] sm:$0x3]
    %v1933 = vperm.slane %v1931, 0
    %v1934 = vperm.slane %v1931, 1
    %v2001 = vunpack.c.l.b16 %v1867
    %v2002 = vunpack.c.h.b16 %v1867
    %v2003 = vunpack.c.l.b16 %v1868
    %v2004 = vunpack.c.h.b16 %v1868
    %v2005 = vunpack.c.l.b16 %v1869
    %v2006 = vunpack.c.h.b16 %v1869
    %v2007 = vunpack.c.l.b16 %v1870
    %v2008 = vunpack.c.h.b16 %v1870
    %v2009 = vunpack.c.l.b16 %v1871
    %v2010 = vunpack.c.h.b16 %v1871
    %v2011 = vunpack.c.l.b16 %v1872
    %v2012 = vunpack.c.h.b16 %v1872
    %v2013 = vunpack.c.l.b16 %v1873
    %v2014 = vunpack.c.h.b16 %v1873
    %v2015 = vunpack.c.l.b16 %v1874
    %v2016 = vunpack.c.h.b16 %v1874
    %v2017 = vunpack.c.l.b16 %v1875
    %v2018 = vunpack.c.h.b16 %v1875
    %v2019 = vunpack.c.l.b16 %v1876
    %v2020 = vunpack.c.h.b16 %v1876
    %v2021 = vunpack.c.l.b16 %v1877
    %v2022 = vunpack.c.h.b16 %v1877
    %v2023 = vunpack.c.l.b16 %v1878
    %v2024 = vunpack.c.h.b16 %v1878
    %v2025 = vunpack.c.l.b16 %v1879
    %v2026 = vunpack.c.h.b16 %v1879
    %v2027 = vunpack.c.l.b16 %v1880
    %v2028 = vunpack.c.h.b16 %v1880
    %v2029 = vunpack.c.l.b16 %v1881
    %v2030 = vunpack.c.h.b16 %v1881
    %v2031 = vunpack.c.l.b16 %v1882
    %v2032 = vunpack.c.h.b16 %v1882
    %v2033 = vunpack.c.l.b16 %v1883
    %v2034 = vunpack.c.h.b16 %v1883
    %v2035 = vunpack.c.l.b16 %v1884
    %v2036 = vunpack.c.h.b16 %v1884
    %v2037 = vunpack.c.l.b16 %v1885
    %v2038 = vunpack.c.h.b16 %v1885
    %v2039 = vunpack.c.l.b16 %v1886
    %v2040 = vunpack.c.h.b16 %v1886
    %v2041 = vunpack.c.l.b16 %v1887
    %v2042 = vunpack.c.h.b16 %v1887
    %v2043 = vunpack.c.l.b16 %v1888
    %v2044 = vunpack.c.h.b16 %v1888
    %v2045 = vunpack.c.l.b16 %v1889
    %v2046 = vunpack.c.h.b16 %v1889
    %v2047 = vunpack.c.l.b16 %v1890
    %v2048 = vunpack.c.h.b16 %v1890
    %v2049 = vunpack.c.l.b16 %v1891
    %v2050 = vunpack.c.h.b16 %v1891
    %v2051 = vunpack.c.l.b16 %v1892
    %v2052 = vunpack.c.h.b16 %v1892
    %v2053 = vunpack.c.l.b16 %v1893
    %v2054 = vunpack.c.h.b16 %v1893
    %v2055 = vunpack.c.l.b16 %v1894
    %v2056 = vunpack.c.h.b16 %v1894
    %v2057 = vunpack.c.l.b16 %v1895
    %v2058 = vunpack.c.h.b16 %v1895
    %v2059 = vunpack.c.l.b16 %v1896
    %v2060 = vunpack.c.h.b16 %v1896
    %v2061 = vunpack.c.l.b16 %v1897
    %v2062 = vunpack.c.h.b16 %v1897
    %v2063 = vunpack.c.l.b16 %v1898
    %v2064 = vunpack.c.h.b16 %v1898
    %v2065 = vunpack.c.l.b16 %v1899
    %v2066 = vunpack.c.h.b16 %v1899
    %v2067 = vunpack.c.l.b16 %v1900
    %v2068 = vunpack.c.h.b16 %v1900
    %v2069 = vunpack.c.l.b16 %v1901
    %v2070 = vunpack.c.h.b16 %v1901
    %v2071 = vunpack.c.l.b16 %v1902
    %v2072 = vunpack.c.h.b16 %v1902
    %v2073 = vunpack.c.l.b16 %v1903
    %v2074 = vunpack.c.h.b16 %v1903
    %v2075 = vunpack.c.l.b16 %v1904
    %v2076 = vunpack.c.h.b16 %v1904
    %v2077 = vunpack.c.l.b16 %v1905
    %v2078 = vunpack.c.h.b16 %v1905
    %v2079 = vunpack.c.l.b16 %v1906
    %v2080 = vunpack.c.h.b16 %v1906
    %v2081 = vunpack.c.l.b16 %v1907
    %v2082 = vunpack.c.h.b16 %v1907
    %v2083 = vunpack.c.l.b16 %v1908
    %v2084 = vunpack.c.h.b16 %v1908
    %v2085 = vunpack.c.l.b16 %v1909
    %v2086 = vunpack.c.h.b16 %v1909
    %v2087 = vunpack.c.l.b16 %v1910
    %v2088 = vunpack.c.h.b16 %v1910
    %v2089 = vunpack.c.l.b16 %v1911
    %v2090 = vunpack.c.h.b16 %v1911
    %v2091 = vunpack.c.l.b16 %v1912
    %v2092 = vunpack.c.h.b16 %v1912
    %v2093 = vunpack.c.l.b16 %v1913
    %v2094 = vunpack.c.h.b16 %v1913
    %v2095 = vunpack.c.l.b16 %v1914
    %v2096 = vunpack.c.h.b16 %v1914
    %v2097 = vunpack.c.l.b16 %v1915
    %v2098 = vunpack.c.h.b16 %v1915
    %v2099 = vunpack.c.l.b16 %v1916
    %v2100 = vunpack.c.h.b16 %v1916
    %v2101 = vunpack.c.l.b16 %v1917
    %v2102 = vunpack.c.h.b16 %v1917
    %v2103 = vunpack.c.l.b16 %v1918
    %v2104 = vunpack.c.h.b16 %v1918
    %v2105 = vunpack.c.l.b16 %v1919
    %v2106 = vunpack.c.h.b16 %v1919
    %v2107 = vunpack.c.l.b16 %v1920
    %v2108 = vunpack.c.h.b16 %v1920
    %v2109 = vunpack.c.l.b16 %v1921
    %v2110 = vunpack.c.h.b16 %v1921
    %v2111 = vunpack.c.l.b16 %v1922
    %v2112 = vunpack.c.h.b16 %v1922
    %v2113 = vunpack.c.l.b16 %v1923
    %v2114 = vunpack.c.h.b16 %v1923
    %v2115 = vunpack.c.l.b16 %v1924
    %v2116 = vunpack.c.h.b16 %v1924
    %v2117 = vunpack.c.l.b16 %v1925
    %v2118 = vunpack.c.h.b16 %v1925
    %v2119 = vunpack.c.l.b16 %v1926
    %v2120 = vunpack.c.h.b16 %v1926
    %v2121 = vunpack.c.l.b16 %v1927
    %v2122 = vunpack.c.h.b16 %v1927
    %v2123 = vunpack.c.l.b16 %v1928
    %v2124 = vunpack.c.h.b16 %v1928
    %v2125 = vunpack.c.l.b16 %v1929
    %v2126 = vunpack.c.h.b16 %v1929
    %v2127 = vunpack.c.l.b16 %v1930
    %v2128 = vunpack.c.h.b16 %v1930
    %v2129 = vpack.c.b16 %v2003, %v2001
    %v2130 = vpack.c.b16 %v2004, %v2002
    %v2131 = vpack.c.b16 %v2007, %v2005
    %v2132 = vpack.c.b16 %v2008, %v2006
    %v2133 = vpack.c.b16 %v2011, %v2009
    %v2134 = vpack.c.b16 %v2012, %v2010
    %v2135 = vpack.c.b16 %v2015, %v2013
    %v2136 = vpack.c.b16 %v2016, %v2014
    %v2137 = vpack.c.b16 %v2019, %v2017
    %v2138 = vpack.c.b16 %v2020, %v2018
    %v2139 = vpack.c.b16 %v2023, %v2021
    %v2140 = vpack.c.b16 %v2024, %v2022
    %v2141 = vpack.c.b16 %v2027, %v2025
    %v2142 = vpack.c.b16 %v2028, %v2026
    %v2143 = vpack.c.b16 %v2031, %v2029
    %v2144 = vpack.c.b16 %v2032, %v2030
    %v2145 = vpack.c.b16 %v2035, %v2033
    %v2146 = vpack.c.b16 %v2036, %v2034
    %v2147 = vpack.c.b16 %v2039, %v2037
    %v2148 = vpack.c.b16 %v2040, %v2038
    %v2149 = vpack.c.b16 %v2043, %v2041
    %v2150 = vpack.c.b16 %v2044, %v2042
    %v2151 = vpack.c.b16 %v2047, %v2045
    %v2152 = vpack.c.b16 %v2048, %v2046
    %v2153 = vpack.c.b16 %v2051, %v2049
    %v2154 = vpack.c.b16 %v2052, %v2050
    %v2155 = vpack.c.b16 %v2055, %v2053
    %v2156 = vpack.c.b16 %v2056, %v2054
    %v2157 = vpack.c.b16 %v2059, %v2057
    %v2158 = vpack.c.b16 %v2060, %v2058
    %v2159 = vpack.c.b16 %v2063, %v2061
    %v2160 = vpack.c.b16 %v2064, %v2062
    %v2161 = vpack.c.b16 %v2067, %v2065
    %v2162 = vpack.c.b16 %v2068, %v2066
    %v2163 = vpack.c.b16 %v2071, %v2069
    %v2164 = vpack.c.b16 %v2072, %v2070
    %v2165 = vpack.c.b16 %v2075, %v2073
    %v2166 = vpack.c.b16 %v2076, %v2074
    %v2167 = vpack.c.b16 %v2079, %v2077
    %v2168 = vpack.c.b16 %v2080, %v2078
    %v2169 = vpack.c.b16 %v2083, %v2081
    %v2170 = vpack.c.b16 %v2084, %v2082
    %v2171 = vpack.c.b16 %v2087, %v2085
    %v2172 = vpack.c.b16 %v2088, %v2086
    %v2173 = vpack.c.b16 %v2091, %v2089
    %v2174 = vpack.c.b16 %v2092, %v2090
    %v2175 = vpack.c.b16 %v2095, %v2093
    %v2176 = vpack.c.b16 %v2096, %v2094
    %v2177 = vpack.c.b16 %v2099, %v2097
    %v2178 = vpack.c.b16 %v2100, %v2098
    %v2179 = vpack.c.b16 %v2103, %v2101
    %v2180 = vpack.c.b16 %v2104, %v2102
    %v2181 = vpack.c.b16 %v2107, %v2105
    %v2182 = vpack.c.b16 %v2108, %v2106
    %v2183 = vpack.c.b16 %v2111, %v2109
    %v2184 = vpack.c.b16 %v2112, %v2110
    %v2185 = vpack.c.b16 %v2115, %v2113
    %v2186 = vpack.c.b16 %v2116, %v2114
    %v2187 = vpack.c.b16 %v2119, %v2117
    %v2188 = vpack.c.b16 %v2120, %v2118
    %v2189 = vpack.c.b16 %v2123, %v2121
    %v2190 = vpack.c.b16 %v2124, %v2122
    %v2191 = vpack.c.b16 %v2127, %v2125
    %v2192 = vpack.c.b16 %v2128, %v2126
    %2257 = vmatpush.bf16.msra.mxu0 %v2143
    %2258 = vmatpush.bf16.msra.mxu0 %v2141
    %2259 = vmatpush.bf16.msra.mxu0 %v2139
    %2260 = vmatpush.bf16.msra.mxu0 %v2137
    %2261 = vmatpush.bf16.msra.mxu0 %v2135
    %2262 = vmatpush.bf16.msra.mxu0 %v2133
    %2263 = vmatpush.bf16.msra.mxu0 %v2131
    %2264 = vmatpush.bf16.msra.mxu0 %v2129
    %2265 = vmatmul.bf16.gmra.mxu0 %v1863
    %v2266 = vpop.f32.mrf.mxu0
    %v2267 = vadd.f32 %v1933, %v2266
    %v2268 = vpop.f32.mrf.mxu0
    %2269 = vdwg.mxu0
    %2270 = vmatpush.bf16.msra.mxu0 %v2159
    %2271 = vmatpush.bf16.msra.mxu0 %v2157
    %2272 = vmatpush.bf16.msra.mxu0 %v2155
    %2273 = vmatpush.bf16.msra.mxu0 %v2153
    %2274 = vmatpush.bf16.msra.mxu0 %v2151
    %2275 = vmatpush.bf16.msra.mxu0 %v2149
    %2276 = vmatpush.bf16.msra.mxu0 %v2147
    %2277 = vmatpush.bf16.msra.mxu0 %v2145
    %2278 = vmatmul.bf16.gmra.mxu0 %v1864
    %v2279 = vpop.f32.mrf.mxu0
    %v2280 = vadd.f32 %v2267, %v2279
    %v2281 = vpop.f32.mrf.mxu0
    %2282 = vdwg.mxu0
    %2283 = vmatpush.bf16.msra.mxu0 %v2175
    %2284 = vmatpush.bf16.msra.mxu0 %v2173
    %2285 = vmatpush.bf16.msra.mxu0 %v2171
    %2286 = vmatpush.bf16.msra.mxu0 %v2169
    %2287 = vmatpush.bf16.msra.mxu0 %v2167
    %2288 = vmatpush.bf16.msra.mxu0 %v2165
    %2289 = vmatpush.bf16.msra.mxu0 %v2163
    %2290 = vmatpush.bf16.msra.mxu0 %v2161
    %2291 = vmatmul.bf16.gmra.mxu0 %v1865
    %v2292 = vpop.f32.mrf.mxu0
    %v2293 = vadd.f32 %v2280, %v2292
    %v2294 = vpop.f32.mrf.mxu0
    %2295 = vdwg.mxu0
    %2296 = vmatpush.bf16.msra.mxu0 %v2191
    %2297 = vmatpush.bf16.msra.mxu0 %v2189
    %2298 = vmatpush.bf16.msra.mxu0 %v2187
    %2299 = vmatpush.bf16.msra.mxu0 %v2185
    %2300 = vmatpush.bf16.msra.mxu0 %v2183
    %2301 = vmatpush.bf16.msra.mxu0 %v2181
    %2302 = vmatpush.bf16.msra.mxu0 %v2179
    %2303 = vmatpush.bf16.msra.mxu0 %v2177
    %2304 = vmatmul.bf16.gmra.mxu0 %v1866
    %v2305 = vpop.f32.mrf.mxu0
    %v2306 = vadd.f32 %v2293, %v2305
    %v2307 = vpop.f32.mrf.mxu0
    %2308 = vdwg.mxu0
    %2309 = vmatpush.bf16.msra.mxu0 %v2144
    %2310 = vmatpush.bf16.msra.mxu0 %v2142
    %2311 = vmatpush.bf16.msra.mxu0 %v2140
    %2312 = vmatpush.bf16.msra.mxu0 %v2138
    %2313 = vmatpush.bf16.msra.mxu0 %v2136
    %2314 = vmatpush.bf16.msra.mxu0 %v2134
    %2315 = vmatpush.bf16.msra.mxu0 %v2132
    %2316 = vmatpush.bf16.msra.mxu0 %v2130
    %2317 = vmatmul.bf16.gmra.mxu0 %v1863
    %v2318 = vpop.f32.mrf.mxu0
    %v2319 = vadd.f32 %v1934, %v2318
    %v2320 = vpop.f32.mrf.mxu0
    %2321 = vdwg.mxu0
    %2322 = vmatpush.bf16.msra.mxu0 %v2160
    %2323 = vmatpush.bf16.msra.mxu0 %v2158
    %2324 = vmatpush.bf16.msra.mxu0 %v2156
    %2325 = vmatpush.bf16.msra.mxu0 %v2154
    %2326 = vmatpush.bf16.msra.mxu0 %v2152
    %2327 = vmatpush.bf16.msra.mxu0 %v2150
    %2328 = vmatpush.bf16.msra.mxu0 %v2148
    %2329 = vmatpush.bf16.msra.mxu0 %v2146
    %2330 = vmatmul.bf16.gmra.mxu0 %v1864
    %v2331 = vpop.f32.mrf.mxu0
    %v2332 = vadd.f32 %v2319, %v2331
    %v2333 = vpop.f32.mrf.mxu0
    %2334 = vdwg.mxu0
    %2335 = vmatpush.bf16.msra.mxu0 %v2176
    %2336 = vmatpush.bf16.msra.mxu0 %v2174
    %2337 = vmatpush.bf16.msra.mxu0 %v2172
    %2338 = vmatpush.bf16.msra.mxu0 %v2170
    %2339 = vmatpush.bf16.msra.mxu0 %v2168
    %2340 = vmatpush.bf16.msra.mxu0 %v2166
    %2341 = vmatpush.bf16.msra.mxu0 %v2164
    %2342 = vmatpush.bf16.msra.mxu0 %v2162
    %2343 = vmatmul.bf16.gmra.mxu0 %v1865
    %v2344 = vpop.f32.mrf.mxu0
    %v2345 = vadd.f32 %v2332, %v2344
    %v2346 = vpop.f32.mrf.mxu0
    %2347 = vdwg.mxu0
    %2348 = vmatpush.bf16.msra.mxu0 %v2192
    %2349 = vmatpush.bf16.msra.mxu0 %v2190
    %2350 = vmatpush.bf16.msra.mxu0 %v2188
    %2351 = vmatpush.bf16.msra.mxu0 %v2186
    %2352 = vmatpush.bf16.msra.mxu0 %v2184
    %2353 = vmatpush.bf16.msra.mxu0 %v2182
    %2354 = vmatpush.bf16.msra.mxu0 %v2180
    %2355 = vmatpush.bf16.msra.mxu0 %v2178
    %2356 = vmatmul.bf16.gmra.mxu0 %v1866
    %v2357 = vpop.f32.mrf.mxu0
    %v2358 = vadd.f32 %v2345, %v2357
    %v2359 = vpop.f32.mrf.mxu0
    %2360 = vdwg.mxu0
    %v2361 = vmax.f32 %v2306, 0.0
    %v2362 = vmax.f32 %v2358, 0.0
    %v2363 = vpack.c.bf16 %v2361, %v2361
    %v2364 = vpack.c.bf16 %v2362, %v2362
    %v2365 = vld [vmem:[%s6] sm:$0xff]
    %v2366 = vld [vmem:[%s6 + $0x8] sm:$0xff]
    %v2367 = vld [vmem:[%s6 + $0x10] sm:$0xff]
    %v2368 = vld [vmem:[%s6 + $0x18] sm:$0xff]
    %v2369 = vld [vmem:[%s6 + $0x20] sm:$0xff]
    %v2370 = vld [vmem:[%s6 + $0x28] sm:$0xff]
    %v2371 = vld [vmem:[%s6 + $0x30] sm:$0xff]
    %v2372 = vld [vmem:[%s6 + $0x38] sm:$0xff]
    %v2373 = vld [vmem:[%s6 + $0x40] sm:$0xff]
    %v2374 = vld [vmem:[%s6 + $0x48] sm:$0xff]
    %v2375 = vld [vmem:[%s6 + $0x50] sm:$0xff]
    %v2376 = vld [vmem:[%s6 + $0x58] sm:$0xff]
    %v2377 = vld [vmem:[%s6 + $0x60] sm:$0xff]
    %v2378 = vld [vmem:[%s6 + $0x68] sm:$0xff]
    %v2379 = vld [vmem:[%s6 + $0x70] sm:$0xff]
    %v2380 = vld [vmem:[%s6 + $0x78] sm:$0xff]
    %v2381 = vld [vmem:[%s6 + $0x80] sm:$0xff]
    %v2382 = vld [vmem:[%s6 + $0x88] sm:$0xff]
    %v2383 = vld [vmem:[%s6 + $0x90] sm:$0xff]
    %v2384 = vld [vmem:[%s6 + $0x98] sm:$0xff]
    %v2385 = vld [vmem:[%s6 + $0xa0] sm:$0xff]
    %v2386 = vld [vmem:[%s6 + $0xa8] sm:$0xff]
    %v2387 = vld [vmem:[%s6 + $0xb0] sm:$0xff]
    %v2388 = vld [vmem:[%s6 + $0xb8] sm:$0xff]
    %v2389 = vld [vmem:[%s6 + $0xc0] sm:$0xff]
    %v2390 = vld [vmem:[%s6 + $0xc8] sm:$0xff]
    %v2391 = vld [vmem:[%s6 + $0xd0] sm:$0xff]
    %v2392 = vld [vmem:[%s6 + $0xd8] sm:$0xff]
    %v2393 = vld [vmem:[%s6 + $0xe0] sm:$0xff]
    %v2394 = vld [vmem:[%s6 + $0xe8] sm:$0xff]
    %v2395 = vld [vmem:[%s6 + $0xf0] sm:$0xff]
    %v2396 = vld [vmem:[%s6 + $0xf8] sm:$0xff]
    %v2397 = vld [vmem:[%s7] sm:$0x3]
    %v2399 = vperm.slane %v2397, 0
    %v2400 = vperm.slane %v2397, 1
    %v2435 = vunpack.c.l.b16 %v2365
    %v2436 = vunpack.c.h.b16 %v2365
    %v2437 = vunpack.c.l.b16 %v2366
    %v2438 = vunpack.c.h.b16 %v2366
    %v2439 = vunpack.c.l.b16 %v2367
    %v2440 = vunpack.c.h.b16 %v2367
    %v2441 = vunpack.c.l.b16 %v2368
    %v2442 = vunpack.c.h.b16 %v2368
    %v2443 = vunpack.c.l.b16 %v2369
    %v2444 = vunpack.c.h.b16 %v2369
    %v2445 = vunpack.c.l.b16 %v2370
    %v2446 = vunpack.c.h.b16 %v2370
    %v2447 = vunpack.c.l.b16 %v2371
    %v2448 = vunpack.c.h.b16 %v2371
    %v2449 = vunpack.c.l.b16 %v2372
    %v2450 = vunpack.c.h.b16 %v2372
    %v2451 = vunpack.c.l.b16 %v2373
    %v2452 = vunpack.c.h.b16 %v2373
    %v2453 = vunpack.c.l.b16 %v2374
    %v2454 = vunpack.c.h.b16 %v2374
    %v2455 = vunpack.c.l.b16 %v2375
    %v2456 = vunpack.c.h.b16 %v2375
    %v2457 = vunpack.c.l.b16 %v2376
    %v2458 = vunpack.c.h.b16 %v2376
    %v2459 = vunpack.c.l.b16 %v2377
    %v2460 = vunpack.c.h.b16 %v2377
    %v2461 = vunpack.c.l.b16 %v2378
    %v2462 = vunpack.c.h.b16 %v2378
    %v2463 = vunpack.c.l.b16 %v2379
    %v2464 = vunpack.c.h.b16 %v2379
    %v2465 = vunpack.c.l.b16 %v2380
    %v2466 = vunpack.c.h.b16 %v2380
    %v2467 = vunpack.c.l.b16 %v2381
    %v2468 = vunpack.c.h.b16 %v2381
    %v2469 = vunpack.c.l.b16 %v2382
    %v2470 = vunpack.c.h.b16 %v2382
    %v2471 = vunpack.c.l.b16 %v2383
    %v2472 = vunpack.c.h.b16 %v2383
    %v2473 = vunpack.c.l.b16 %v2384
    %v2474 = vunpack.c.h.b16 %v2384
    %v2475 = vunpack.c.l.b16 %v2385
    %v2476 = vunpack.c.h.b16 %v2385
    %v2477 = vunpack.c.l.b16 %v2386
    %v2478 = vunpack.c.h.b16 %v2386
    %v2479 = vunpack.c.l.b16 %v2387
    %v2480 = vunpack.c.h.b16 %v2387
    %v2481 = vunpack.c.l.b16 %v2388
    %v2482 = vunpack.c.h.b16 %v2388
    %v2483 = vunpack.c.l.b16 %v2389
    %v2484 = vunpack.c.h.b16 %v2389
    %v2485 = vunpack.c.l.b16 %v2390
    %v2486 = vunpack.c.h.b16 %v2390
    %v2487 = vunpack.c.l.b16 %v2391
    %v2488 = vunpack.c.h.b16 %v2391
    %v2489 = vunpack.c.l.b16 %v2392
    %v2490 = vunpack.c.h.b16 %v2392
    %v2491 = vunpack.c.l.b16 %v2393
    %v2492 = vunpack.c.h.b16 %v2393
    %v2493 = vunpack.c.l.b16 %v2394
    %v2494 = vunpack.c.h.b16 %v2394
    %v2495 = vunpack.c.l.b16 %v2395
    %v2496 = vunpack.c.h.b16 %v2395
    %v2497 = vunpack.c.l.b16 %v2396
    %v2498 = vunpack.c.h.b16 %v2396
    %v2499 = vpack.c.b16 %v2437, %v2435
    %v2500 = vpack.c.b16 %v2438, %v2436
    %v2501 = vpack.c.b16 %v2441, %v2439
    %v2502 = vpack.c.b16 %v2442, %v2440
    %v2503 = vpack.c.b16 %v2445, %v2443
    %v2504 = vpack.c.b16 %v2446, %v2444
    %v2505 = vpack.c.b16 %v2449, %v2447
    %v2506 = vpack.c.b16 %v2450, %v2448
    %v2507 = vpack.c.b16 %v2453, %v2451
    %v2508 = vpack.c.b16 %v2454, %v2452
    %v2509 = vpack.c.b16 %v2457, %v2455
    %v2510 = vpack.c.b16 %v2458, %v2456
    %v2511 = vpack.c.b16 %v2461, %v2459
    %v2512 = vpack.c.b16 %v2462, %v2460
    %v2513 = vpack.c.b16 %v2465, %v2463
    %v2514 = vpack.c.b16 %v2466, %v2464
    %v2515 = vpack.c.b16 %v2469, %v2467
    %v2516 = vpack.c.b16 %v2470, %v2468
    %v2517 = vpack.c.b16 %v2473, %v2471
    %v2518 = vpack.c.b16 %v2474, %v2472
    %v2519 = vpack.c.b16 %v2477, %v2475
    %v2520 = vpack.c.b16 %v2478, %v2476
    %v2521 = vpack.c.b16 %v2481, %v2479
    %v2522 = vpack.c.b16 %v2482, %v2480
    %v2523 = vpack.c.b16 %v2485, %v2483
    %v2524 = vpack.c.b16 %v2486, %v2484
    %v2525 = vpack.c.b16 %v2489, %v2487
    %v2526 = vpack.c.b16 %v2490, %v2488
    %v2527 = vpack.c.b16 %v2493, %v2491
    %v2528 = vpack.c.b16 %v2494, %v2492
    %v2529 = vpack.c.b16 %v2497, %v2495
    %v2530 = vpack.c.b16 %v2498, %v2496
    %2563 = vmatpush.bf16.msra.mxu0 %v2513
    %2564 = vmatpush.bf16.msra.mxu0 %v2511
    %2565 = vmatpush.bf16.msra.mxu0 %v2509
    %2566 = vmatpush.bf16.msra.mxu0 %v2507
    %2567 = vmatpush.bf16.msra.mxu0 %v2505
    %2568 = vmatpush.bf16.msra.mxu0 %v2503
    %2569 = vmatpush.bf16.msra.mxu0 %v2501
    %2570 = vmatpush.bf16.msra.mxu0 %v2499
    %2571 = vmatmul.bf16.gmra.mxu0 %v2363
    %v2572 = vpop.f32.mrf.mxu0
    %v2573 = vadd.f32 %v2399, %v2572
    %v2574 = vpop.f32.mrf.mxu0
    %2575 = vdwg.mxu0
    %2576 = vmatpush.bf16.msra.mxu0 %v2529
    %2577 = vmatpush.bf16.msra.mxu0 %v2527
    %2578 = vmatpush.bf16.msra.mxu0 %v2525
    %2579 = vmatpush.bf16.msra.mxu0 %v2523
    %2580 = vmatpush.bf16.msra.mxu0 %v2521
    %2581 = vmatpush.bf16.msra.mxu0 %v2519
    %2582 = vmatpush.bf16.msra.mxu0 %v2517
    %2583 = vmatpush.bf16.msra.mxu0 %v2515
    %2584 = vmatmul.bf16.gmra.mxu0 %v2364
    %v2585 = vpop.f32.mrf.mxu0
    %v2586 = vadd.f32 %v2573, %v2585
    %v2587 = vpop.f32.mrf.mxu0
    %2588 = vdwg.mxu0
    %2589 = vmatpush.bf16.msra.mxu0 %v2514
    %2590 = vmatpush.bf16.msra.mxu0 %v2512
    %2591 = vmatpush.bf16.msra.mxu0 %v2510
    %2592 = vmatpush.bf16.msra.mxu0 %v2508
    %2593 = vmatpush.bf16.msra.mxu0 %v2506
    %2594 = vmatpush.bf16.msra.mxu0 %v2504
    %2595 = vmatpush.bf16.msra.mxu0 %v2502
    %2596 = vmatpush.bf16.msra.mxu0 %v2500
    %2597 = vmatmul.bf16.gmra.mxu0 %v2363
    %v2598 = vpop.f32.mrf.mxu0
    %v2599 = vadd.f32 %v2400, %v2598
    %v2600 = vpop.f32.mrf.mxu0
    %2601 = vdwg.mxu0
    %2602 = vmatpush.bf16.msra.mxu0 %v2530
    %2603 = vmatpush.bf16.msra.mxu0 %v2528
    %2604 = vmatpush.bf16.msra.mxu0 %v2526
    %2605 = vmatpush.bf16.msra.mxu0 %v2524
    %2606 = vmatpush.bf16.msra.mxu0 %v2522
    %2607 = vmatpush.bf16.msra.mxu0 %v2520
    %2608 = vmatpush.bf16.msra.mxu0 %v2518
    %2609 = vmatpush.bf16.msra.mxu0 %v2516
    %2610 = vmatmul.bf16.gmra.mxu0 %v2364
    %v2611 = vpop.f32.mrf.mxu0
    %v2612 = vadd.f32 %v2599, %v2611
    %v2613 = vpop.f32.mrf.mxu0
    %2614 = vdwg.mxu0
    %2615 = vst [vmem:[%s15] sm:$0xff] %v2586
    %2616 = vst [vmem:[%s15 + $0x8] sm:$0xff] %v2612
    %v2617 = vld [vmem:[%s1] sm:$0xff]
    %v2618 = vmul.f32 %v2612, 0.5
    %v2619 = vmul.f32 %v2618, 1.442695
    %v2620 = vpow.pop %v2619
    %v2621 = vmul.f32 %v2617, %v2620
    %v2622 = vadd.f32 %v2586, %v2621
    %v2623 = vpack.c.bf16 %v2622, %v2622
    %v2624 = vld [vmem:[#allocation6] sm:$0xff]
    %v2625 = vld [vmem:[#allocation6 + $0x8] sm:$0xff]
    %v2626 = vld [vmem:[#allocation6 + $0x10] sm:$0xff]
    %v2627 = vld [vmem:[#allocation6 + $0x18] sm:$0xff]
    %v2628 = vld [vmem:[#allocation6 + $0x20] sm:$0xff]
    %v2629 = vld [vmem:[#allocation6 + $0x28] sm:$0xff]
    %v2630 = vld [vmem:[#allocation6 + $0x30] sm:$0xff]
    %v2631 = vld [vmem:[#allocation6 + $0x38] sm:$0xff]
    %v2632 = vld [vmem:[#allocation6 + $0x40] sm:$0xff]
    %v2633 = vld [vmem:[#allocation6 + $0x48] sm:$0xff]
    %v2634 = vld [vmem:[#allocation6 + $0x50] sm:$0xff]
    %v2635 = vld [vmem:[#allocation6 + $0x58] sm:$0xff]
    %v2636 = vld [vmem:[#allocation6 + $0x60] sm:$0xff]
    %v2637 = vld [vmem:[#allocation6 + $0x68] sm:$0xff]
    %v2638 = vld [vmem:[#allocation6 + $0x70] sm:$0xff]
    %v2639 = vld [vmem:[#allocation6 + $0x78] sm:$0xff]
    %v2640 = vld [vmem:[%s9] sm:$0x3]
    %v2642 = vperm.slane %v2640, 0
    %v2643 = vperm.slane %v2640, 1
    %v2662 = vunpack.c.l.b16 %v2624
    %v2663 = vunpack.c.h.b16 %v2624
    %v2664 = vunpack.c.l.b16 %v2625
    %v2665 = vunpack.c.h.b16 %v2625
    %v2666 = vunpack.c.l.b16 %v2626
    %v2667 = vunpack.c.h.b16 %v2626
    %v2668 = vunpack.c.l.b16 %v2627
    %v2669 = vunpack.c.h.b16 %v2627
    %v2670 = vunpack.c.l.b16 %v2628
    %v2671 = vunpack.c.h.b16 %v2628
    %v2672 = vunpack.c.l.b16 %v2629
    %v2673 = vunpack.c.h.b16 %v2629
    %v2674 = vunpack.c.l.b16 %v2630
    %v2675 = vunpack.c.h.b16 %v2630
    %v2676 = vunpack.c.l.b16 %v2631
    %v2677 = vunpack.c.h.b16 %v2631
    %v2678 = vunpack.c.l.b16 %v2632
    %v2679 = vunpack.c.h.b16 %v2632
    %v2680 = vunpack.c.l.b16 %v2633
    %v2681 = vunpack.c.h.b16 %v2633
    %v2682 = vunpack.c.l.b16 %v2634
    %v2683 = vunpack.c.h.b16 %v2634
    %v2684 = vunpack.c.l.b16 %v2635
    %v2685 = vunpack.c.h.b16 %v2635
    %v2686 = vunpack.c.l.b16 %v2636
    %v2687 = vunpack.c.h.b16 %v2636
    %v2688 = vunpack.c.l.b16 %v2637
    %v2689 = vunpack.c.h.b16 %v2637
    %v2690 = vunpack.c.l.b16 %v2638
    %v2691 = vunpack.c.h.b16 %v2638
    %v2692 = vunpack.c.l.b16 %v2639
    %v2693 = vunpack.c.h.b16 %v2639
    %v2694 = vpack.c.b16 %v2664, %v2662
    %v2695 = vpack.c.b16 %v2665, %v2663
    %v2696 = vpack.c.b16 %v2668, %v2666
    %v2697 = vpack.c.b16 %v2669, %v2667
    %v2698 = vpack.c.b16 %v2672, %v2670
    %v2699 = vpack.c.b16 %v2673, %v2671
    %v2700 = vpack.c.b16 %v2676, %v2674
    %v2701 = vpack.c.b16 %v2677, %v2675
    %v2702 = vpack.c.b16 %v2680, %v2678
    %v2703 = vpack.c.b16 %v2681, %v2679
    %v2704 = vpack.c.b16 %v2684, %v2682
    %v2705 = vpack.c.b16 %v2685, %v2683
    %v2706 = vpack.c.b16 %v2688, %v2686
    %v2707 = vpack.c.b16 %v2689, %v2687
    %v2708 = vpack.c.b16 %v2692, %v2690
    %v2709 = vpack.c.b16 %v2693, %v2691
    %2726 = vmatpush.bf16.msra.mxu0 %v2708
    %2727 = vmatpush.bf16.msra.mxu0 %v2706
    %2728 = vmatpush.bf16.msra.mxu0 %v2704
    %2729 = vmatpush.bf16.msra.mxu0 %v2702
    %2730 = vmatpush.bf16.msra.mxu0 %v2700
    %2731 = vmatpush.bf16.msra.mxu0 %v2698
    %2732 = vmatpush.bf16.msra.mxu0 %v2696
    %2733 = vmatpush.bf16.msra.mxu0 %v2694
    %2734 = vmatmul.bf16.gmra.mxu0 %v2623
    %v2735 = vpop.f32.mrf.mxu0
    %v2736 = vadd.f32 %v2642, %v2735
    %v2737 = vpop.f32.mrf.mxu0
    %2738 = vdwg.mxu0
    %2739 = vmatpush.bf16.msra.mxu0 %v2709
    %2740 = vmatpush.bf16.msra.mxu0 %v2707
    %2741 = vmatpush.bf16.msra.mxu0 %v2705
    %2742 = vmatpush.bf16.msra.mxu0 %v2703
    %2743 = vmatpush.bf16.msra.mxu0 %v2701
    %2744 = vmatpush.bf16.msra.mxu0 %v2699
    %2745 = vmatpush.bf16.msra.mxu0 %v2697
    %2746 = vmatpush.bf16.msra.mxu0 %v2695
    %2747 = vmatmul.bf16.gmra.mxu0 %v2623
    %v2748 = vpop.f32.mrf.mxu0
    %v2749 = vadd.f32 %v2643, %v2748
    %v2750 = vpop.f32.mrf.mxu0
    %2751 = vdwg.mxu0
    %v2752 = vmax.f32 %v2736, 0.0
    %v2753 = vmax.f32 %v2749, 0.0
    %v2754 = vpack.c.bf16 %v2752, %v2752
    %v2755 = vpack.c.bf16 %v2753, %v2753
    %v2756 = vld [vmem:[#allocation7] sm:$0xff]
    %v2757 = vld [vmem:[#allocation7 + $0x8] sm:$0xff]
    %v2758 = vld [vmem:[#allocation7 + $0x10] sm:$0xff]
    %v2759 = vld [vmem:[#allocation7 + $0x18] sm:$0xff]
    %v2760 = vld [vmem:[#allocation7 + $0x20] sm:$0xff]
    %v2761 = vld [vmem:[#allocation7 + $0x28] sm:$0xff]
    %v2762 = vld [vmem:[#allocation7 + $0x30] sm:$0xff]
    %v2763 = vld [vmem:[#allocation7 + $0x38] sm:$0xff]
    %v2764 = vld [vmem:[#allocation7 + $0x40] sm:$0xff]
    %v2765 = vld [vmem:[#allocation7 + $0x48] sm:$0xff]
    %v2766 = vld [vmem:[#allocation7 + $0x50] sm:$0xff]
    %v2767 = vld [vmem:[#allocation7 + $0x58] sm:$0xff]
    %v2768 = vld [vmem:[#allocation7 + $0x60] sm:$0xff]
    %v2769 = vld [vmem:[#allocation7 + $0x68] sm:$0xff]
    %v2770 = vld [vmem:[#allocation7 + $0x70] sm:$0xff]
    %v2771 = vld [vmem:[#allocation7 + $0x78] sm:$0xff]
    %v2772 = vld [vmem:[#allocation7 + $0x80] sm:$0xff]
    %v2773 = vld [vmem:[#allocation7 + $0x88] sm:$0xff]
    %v2774 = vld [vmem:[#allocation7 + $0x90] sm:$0xff]
    %v2775 = vld [vmem:[#allocation7 + $0x98] sm:$0xff]
    %v2776 = vld [vmem:[#allocation7 + $0xa0] sm:$0xff]
    %v2777 = vld [vmem:[#allocation7 + $0xa8] sm:$0xff]
    %v2778 = vld [vmem:[#allocation7 + $0xb0] sm:$0xff]
    %v2779 = vld [vmem:[#allocation7 + $0xb8] sm:$0xff]
    %v2780 = vld [vmem:[#allocation7 + $0xc0] sm:$0xff]
    %v2781 = vld [vmem:[#allocation7 + $0xc8] sm:$0xff]
    %v2782 = vld [vmem:[#allocation7 + $0xd0] sm:$0xff]
    %v2783 = vld [vmem:[#allocation7 + $0xd8] sm:$0xff]
    %v2784 = vld [vmem:[#allocation7 + $0xe0] sm:$0xff]
    %v2785 = vld [vmem:[#allocation7 + $0xe8] sm:$0xff]
    %v2786 = vld [vmem:[#allocation7 + $0xf0] sm:$0xff]
    %v2787 = vld [vmem:[#allocation7 + $0xf8] sm:$0xff]
    %v2788 = vld [vmem:[#allocation7 + $0x100] sm:$0xff]
    %v2789 = vld [vmem:[#allocation7 + $0x108] sm:$0xff]
    %v2790 = vld [vmem:[#allocation7 + $0x110] sm:$0xff]
    %v2791 = vld [vmem:[#allocation7 + $0x118] sm:$0xff]
    %v2792 = vld [vmem:[#allocation7 + $0x120] sm:$0xff]
    %v2793 = vld [vmem:[#allocation7 + $0x128] sm:$0xff]
    %v2794 = vld [vmem:[#allocation7 + $0x130] sm:$0xff]
    %v2795 = vld [vmem:[#allocation7 + $0x138] sm:$0xff]
    %v2796 = vld [vmem:[#allocation7 + $0x140] sm:$0xff]
    %v2797 = vld [vmem:[#allocation7 + $0x148] sm:$0xff]
    %v2798 = vld [vmem:[#allocation7 + $0x150] sm:$0xff]
    %v2799 = vld [vmem:[#allocation7 + $0x158] sm:$0xff]
    %v2800 = vld [vmem:[#allocation7 + $0x160] sm:$0xff]
    %v2801 = vld [vmem:[#allocation7 + $0x168] sm:$0xff]
    %v2802 = vld [vmem:[#allocation7 + $0x170] sm:$0xff]
    %v2803 = vld [vmem:[#allocation7 + $0x178] sm:$0xff]
    %v2804 = vld [vmem:[#allocation7 + $0x180] sm:$0xff]
    %v2805 = vld [vmem:[#allocation7 + $0x188] sm:$0xff]
    %v2806 = vld [vmem:[#allocation7 + $0x190] sm:$0xff]
    %v2807 = vld [vmem:[#allocation7 + $0x198] sm:$0xff]
    %v2808 = vld [vmem:[#allocation7 + $0x1a0] sm:$0xff]
    %v2809 = vld [vmem:[#allocation7 + $0x1a8] sm:$0xff]
    %v2810 = vld [vmem:[#allocation7 + $0x1b0] sm:$0xff]
    %v2811 = vld [vmem:[#allocation7 + $0x1b8] sm:$0xff]
    %v2812 = vld [vmem:[#allocation7 + $0x1c0] sm:$0xff]
    %v2813 = vld [vmem:[#allocation7 + $0x1c8] sm:$0xff]
    %v2814 = vld [vmem:[#allocation7 + $0x1d0] sm:$0xff]
    %v2815 = vld [vmem:[#allocation7 + $0x1d8] sm:$0xff]
    %v2816 = vld [vmem:[#allocation7 + $0x1e0] sm:$0xff]
    %v2817 = vld [vmem:[#allocation7 + $0x1e8] sm:$0xff]
    %v2818 = vld [vmem:[#allocation7 + $0x1f0] sm:$0xff]
    %v2819 = vld [vmem:[#allocation7 + $0x1f8] sm:$0xff]
    %v2820 = vld [vmem:[%s11] sm:$0xf]
    %v2822 = vperm.slane %v2820, 0
    %v2823 = vperm.slane %v2820, 1
    %v2824 = vperm.slane %v2820, 2
    %v2825 = vperm.slane %v2820, 3
    %v2894 = vunpack.c.l.b16 %v2756
    %v2895 = vunpack.c.h.b16 %v2756
    %v2896 = vunpack.c.l.b16 %v2757
    %v2897 = vunpack.c.h.b16 %v2757
    %v2898 = vunpack.c.l.b16 %v2758
    %v2899 = vunpack.c.h.b16 %v2758
    %v2900 = vunpack.c.l.b16 %v2759
    %v2901 = vunpack.c.h.b16 %v2759
    %v2902 = vunpack.c.l.b16 %v2760
    %v2903 = vunpack.c.h.b16 %v2760
    %v2904 = vunpack.c.l.b16 %v2761
    %v2905 = vunpack.c.h.b16 %v2761
    %v2906 = vunpack.c.l.b16 %v2762
    %v2907 = vunpack.c.h.b16 %v2762
    %v2908 = vunpack.c.l.b16 %v2763
    %v2909 = vunpack.c.h.b16 %v2763
    %v2910 = vunpack.c.l.b16 %v2764
    %v2911 = vunpack.c.h.b16 %v2764
    %v2912 = vunpack.c.l.b16 %v2765
    %v2913 = vunpack.c.h.b16 %v2765
    %v2914 = vunpack.c.l.b16 %v2766
    %v2915 = vunpack.c.h.b16 %v2766
    %v2916 = vunpack.c.l.b16 %v2767
    %v2917 = vunpack.c.h.b16 %v2767
    %v2918 = vunpack.c.l.b16 %v2768
    %v2919 = vunpack.c.h.b16 %v2768
    %v2920 = vunpack.c.l.b16 %v2769
    %v2921 = vunpack.c.h.b16 %v2769
    %v2922 = vunpack.c.l.b16 %v2770
    %v2923 = vunpack.c.h.b16 %v2770
    %v2924 = vunpack.c.l.b16 %v2771
    %v2925 = vunpack.c.h.b16 %v2771
    %v2926 = vunpack.c.l.b16 %v2772
    %v2927 = vunpack.c.h.b16 %v2772
    %v2928 = vunpack.c.l.b16 %v2773
    %v2929 = vunpack.c.h.b16 %v2773
    %v2930 = vunpack.c.l.b16 %v2774
    %v2931 = vunpack.c.h.b16 %v2774
    %v2932 = vunpack.c.l.b16 %v2775
    %v2933 = vunpack.c.h.b16 %v2775
    %v2934 = vunpack.c.l.b16 %v2776
    %v2935 = vunpack.c.h.b16 %v2776
    %v2936 = vunpack.c.l.b16 %v2777
    %v2937 = vunpack.c.h.b16 %v2777
    %v2938 = vunpack.c.l.b16 %v2778
    %v2939 = vunpack.c.h.b16 %v2778
    %v2940 = vunpack.c.l.b16 %v2779
    %v2941 = vunpack.c.h.b16 %v2779
    %v2942 = vunpack.c.l.b16 %v2780
    %v2943 = vunpack.c.h.b16 %v2780
    %v2944 = vunpack.c.l.b16 %v2781
    %v2945 = vunpack.c.h.b16 %v2781
    %v2946 = vunpack.c.l.b16 %v2782
    %v2947 = vunpack.c.h.b16 %v2782
    %v2948 = vunpack.c.l.b16 %v2783
    %v2949 = vunpack.c.h.b16 %v2783
    %v2950 = vunpack.c.l.b16 %v2784
    %v2951 = vunpack.c.h.b16 %v2784
    %v2952 = vunpack.c.l.b16 %v2785
    %v2953 = vunpack.c.h.b16 %v2785
    %v2954 = vunpack.c.l.b16 %v2786
    %v2955 = vunpack.c.h.b16 %v2786
    %v2956 = vunpack.c.l.b16 %v2787
    %v2957 = vunpack.c.h.b16 %v2787
    %v2958 = vunpack.c.l.b16 %v2788
    %v2959 = vunpack.c.h.b16 %v2788
    %v2960 = vunpack.c.l.b16 %v2789
    %v2961 = vunpack.c.h.b16 %v2789
    %v2962 = vunpack.c.l.b16 %v2790
    %v2963 = vunpack.c.h.b16 %v2790
    %v2964 = vunpack.c.l.b16 %v2791
    %v2965 = vunpack.c.h.b16 %v2791
    %v2966 = vunpack.c.l.b16 %v2792
    %v2967 = vunpack.c.h.b16 %v2792
    %v2968 = vunpack.c.l.b16 %v2793
    %v2969 = vunpack.c.h.b16 %v2793
    %v2970 = vunpack.c.l.b16 %v2794
    %v2971 = vunpack.c.h.b16 %v2794
    %v2972 = vunpack.c.l.b16 %v2795
    %v2973 = vunpack.c.h.b16 %v2795
    %v2974 = vunpack.c.l.b16 %v2796
    %v2975 = vunpack.c.h.b16 %v2796
    %v2976 = vunpack.c.l.b16 %v2797
    %v2977 = vunpack.c.h.b16 %v2797
    %v2978 = vunpack.c.l.b16 %v2798
    %v2979 = vunpack.c.h.b16 %v2798
    %v2980 = vunpack.c.l.b16 %v2799
    %v2981 = vunpack.c.h.b16 %v2799
    %v2982 = vunpack.c.l.b16 %v2800
    %v2983 = vunpack.c.h.b16 %v2800
    %v2984 = vunpack.c.l.b16 %v2801
    %v2985 = vunpack.c.h.b16 %v2801
    %v2986 = vunpack.c.l.b16 %v2802
    %v2987 = vunpack.c.h.b16 %v2802
    %v2988 = vunpack.c.l.b16 %v2803
    %v2989 = vunpack.c.h.b16 %v2803
    %v2990 = vunpack.c.l.b16 %v2804
    %v2991 = vunpack.c.h.b16 %v2804
    %v2992 = vunpack.c.l.b16 %v2805
    %v2993 = vunpack.c.h.b16 %v2805
    %v2994 = vunpack.c.l.b16 %v2806
    %v2995 = vunpack.c.h.b16 %v2806
    %v2996 = vunpack.c.l.b16 %v2807
    %v2997 = vunpack.c.h.b16 %v2807
    %v2998 = vunpack.c.l.b16 %v2808
    %v2999 = vunpack.c.h.b16 %v2808
    %v3000 = vunpack.c.l.b16 %v2809
    %v3001 = vunpack.c.h.b16 %v2809
    %v3002 = vunpack.c.l.b16 %v2810
    %v3003 = vunpack.c.h.b16 %v2810
    %v3004 = vunpack.c.l.b16 %v2811
    %v3005 = vunpack.c.h.b16 %v2811
    %v3006 = vunpack.c.l.b16 %v2812
    %v3007 = vunpack.c.h.b16 %v2812
    %v3008 = vunpack.c.l.b16 %v2813
    %v3009 = vunpack.c.h.b16 %v2813
    %v3010 = vunpack.c.l.b16 %v2814
    %v3011 = vunpack.c.h.b16 %v2814
    %v3012 = vunpack.c.l.b16 %v2815
    %v3013 = vunpack.c.h.b16 %v2815
    %v3014 = vunpack.c.l.b16 %v2816
    %v3015 = vunpack.c.h.b16 %v2816
    %v3016 = vunpack.c.l.b16 %v2817
    %v3017 = vunpack.c.h.b16 %v2817
    %v3018 = vunpack.c.l.b16 %v2818
    %v3019 = vunpack.c.h.b16 %v2818
    %v3020 = vunpack.c.l.b16 %v2819
    %v3021 = vunpack.c.h.b16 %v2819
    %v3022 = vpack.c.b16 %v2898, %v2894
    %v3023 = vpack.c.b16 %v2899, %v2895
    %v3024 = vpack.c.b16 %v2900, %v2896
    %v3025 = vpack.c.b16 %v2901, %v2897
    %v3026 = vpack.c.b16 %v2906, %v2902
    %v3027 = vpack.c.b16 %v2907, %v2903
    %v3028 = vpack.c.b16 %v2908, %v2904
    %v3029 = vpack.c.b16 %v2909, %v2905
    %v3030 = vpack.c.b16 %v2914, %v2910
    %v3031 = vpack.c.b16 %v2915, %v2911
    %v3032 = vpack.c.b16 %v2916, %v2912
    %v3033 = vpack.c.b16 %v2917, %v2913
    %v3034 = vpack.c.b16 %v2922, %v2918
    %v3035 = vpack.c.b16 %v2923, %v2919
    %v3036 = vpack.c.b16 %v2924, %v2920
    %v3037 = vpack.c.b16 %v2925, %v2921
    %v3038 = vpack.c.b16 %v2930, %v2926
    %v3039 = vpack.c.b16 %v2931, %v2927
    %v3040 = vpack.c.b16 %v2932, %v2928
    %v3041 = vpack.c.b16 %v2933, %v2929
    %v3042 = vpack.c.b16 %v2938, %v2934
    %v3043 = vpack.c.b16 %v2939, %v2935
    %v3044 = vpack.c.b16 %v2940, %v2936
    %v3045 = vpack.c.b16 %v2941, %v2937
    %v3046 = vpack.c.b16 %v2946, %v2942
    %v3047 = vpack.c.b16 %v2947, %v2943
    %v3048 = vpack.c.b16 %v2948, %v2944
    %v3049 = vpack.c.b16 %v2949, %v2945
    %v3050 = vpack.c.b16 %v2954, %v2950
    %v3051 = vpack.c.b16 %v2955, %v2951
    %v3052 = vpack.c.b16 %v2956, %v2952
    %v3053 = vpack.c.b16 %v2957, %v2953
    %v3054 = vpack.c.b16 %v2962, %v2958
    %v3055 = vpack.c.b16 %v2963, %v2959
    %v3056 = vpack.c.b16 %v2964, %v2960
    %v3057 = vpack.c.b16 %v2965, %v2961
    %v3058 = vpack.c.b16 %v2970, %v2966
    %v3059 = vpack.c.b16 %v2971, %v2967
    %v3060 = vpack.c.b16 %v2972, %v2968
    %v3061 = vpack.c.b16 %v2973, %v2969
    %v3062 = vpack.c.b16 %v2978, %v2974
    %v3063 = vpack.c.b16 %v2979, %v2975
    %v3064 = vpack.c.b16 %v2980, %v2976
    %v3065 = vpack.c.b16 %v2981, %v2977
    %v3066 = vpack.c.b16 %v2986, %v2982
    %v3067 = vpack.c.b16 %v2987, %v2983
    %v3068 = vpack.c.b16 %v2988, %v2984
    %v3069 = vpack.c.b16 %v2989, %v2985
    %v3070 = vpack.c.b16 %v2994, %v2990
    %v3071 = vpack.c.b16 %v2995, %v2991
    %v3072 = vpack.c.b16 %v2996, %v2992
    %v3073 = vpack.c.b16 %v2997, %v2993
    %v3074 = vpack.c.b16 %v3002, %v2998
    %v3075 = vpack.c.b16 %v3003, %v2999
    %v3076 = vpack.c.b16 %v3004, %v3000
    %v3077 = vpack.c.b16 %v3005, %v3001
    %v3078 = vpack.c.b16 %v3010, %v3006
    %v3079 = vpack.c.b16 %v3011, %v3007
    %v3080 = vpack.c.b16 %v3012, %v3008
    %v3081 = vpack.c.b16 %v3013, %v3009
    %v3082 = vpack.c.b16 %v3018, %v3014
    %v3083 = vpack.c.b16 %v3019, %v3015
    %v3084 = vpack.c.b16 %v3020, %v3016
    %v3085 = vpack.c.b16 %v3021, %v3017
    %3150 = vmatpush.bf16.msra.mxu0 %v3050
    %3151 = vmatpush.bf16.msra.mxu0 %v3046
    %3152 = vmatpush.bf16.msra.mxu0 %v3042
    %3153 = vmatpush.bf16.msra.mxu0 %v3038
    %3154 = vmatpush.bf16.msra.mxu0 %v3034
    %3155 = vmatpush.bf16.msra.mxu0 %v3030
    %3156 = vmatpush.bf16.msra.mxu0 %v3026
    %3157 = vmatpush.bf16.msra.mxu0 %v3022
    %3158 = vmatmul.bf16.gmra.mxu0 %v2754
    %v3159 = vpop.f32.mrf.mxu0
    %v3160 = vadd.f32 %v2822, %v3159
    %v3161 = vpop.f32.mrf.mxu0
    %3162 = vdwg.mxu0
    %3163 = vmatpush.bf16.msra.mxu0 %v3082
    %3164 = vmatpush.bf16.msra.mxu0 %v3078
    %3165 = vmatpush.bf16.msra.mxu0 %v3074
    %3166 = vmatpush.bf16.msra.mxu0 %v3070
    %3167 = vmatpush.bf16.msra.mxu0 %v3066
    %3168 = vmatpush.bf16.msra.mxu0 %v3062
    %3169 = vmatpush.bf16.msra.mxu0 %v3058
    %3170 = vmatpush.bf16.msra.mxu0 %v3054
    %3171 = vmatmul.bf16.gmra.mxu0 %v2755
    %v3172 = vpop.f32.mrf.mxu0
    %v3173 = vadd.f32 %v3160, %v3172
    %v3174 = vpop.f32.mrf.mxu0
    %3175 = vdwg.mxu0
    %3176 = vmatpush.bf16.msra.mxu0 %v3051
    %3177 = vmatpush.bf16.msra.mxu0 %v3047
    %3178 = vmatpush.bf16.msra.mxu0 %v3043
    %3179 = vmatpush.bf16.msra.mxu0 %v3039
    %3180 = vmatpush.bf16.msra.mxu0 %v3035
    %3181 = vmatpush.bf16.msra.mxu0 %v3031
    %3182 = vmatpush.bf16.msra.mxu0 %v3027
    %3183 = vmatpush.bf16.msra.mxu0 %v3023
    %3184 = vmatmul.bf16.gmra.mxu0 %v2754
    %v3185 = vpop.f32.mrf.mxu0
    %v3186 = vadd.f32 %v2823, %v3185
    %v3187 = vpop.f32.mrf.mxu0
    %3188 = vdwg.mxu0
    %3189 = vmatpush.bf16.msra.mxu0 %v3083
    %3190 = vmatpush.bf16.msra.mxu0 %v3079
    %3191 = vmatpush.bf16.msra.mxu0 %v3075
    %3192 = vmatpush.bf16.msra.mxu0 %v3071
    %3193 = vmatpush.bf16.msra.mxu0 %v3067
    %3194 = vmatpush.bf16.msra.mxu0 %v3063
    %3195 = vmatpush.bf16.msra.mxu0 %v3059
    %3196 = vmatpush.bf16.msra.mxu0 %v3055
    %3197 = vmatmul.bf16.gmra.mxu0 %v2755
    %v3198 = vpop.f32.mrf.mxu0
    %v3199 = vadd.f32 %v3186, %v3198
    %v3200 = vpop.f32.mrf.mxu0
    %3201 = vdwg.mxu0
    %3202 = vmatpush.bf16.msra.mxu0 %v3052
    %3203 = vmatpush.bf16.msra.mxu0 %v3048
    %3204 = vmatpush.bf16.msra.mxu0 %v3044
    %3205 = vmatpush.bf16.msra.mxu0 %v3040
    %3206 = vmatpush.bf16.msra.mxu0 %v3036
    %3207 = vmatpush.bf16.msra.mxu0 %v3032
    %3208 = vmatpush.bf16.msra.mxu0 %v3028
    %3209 = vmatpush.bf16.msra.mxu0 %v3024
    %3210 = vmatmul.bf16.gmra.mxu0 %v2754
    %v3211 = vpop.f32.mrf.mxu0
    %v3212 = vadd.f32 %v2824, %v3211
    %v3213 = vpop.f32.mrf.mxu0
    %3214 = vdwg.mxu0
    %3215 = vmatpush.bf16.msra.mxu0 %v3084
    %3216 = vmatpush.bf16.msra.mxu0 %v3080
    %3217 = vmatpush.bf16.msra.mxu0 %v3076
    %3218 = vmatpush.bf16.msra.mxu0 %v3072
    %3219 = vmatpush.bf16.msra.mxu0 %v3068
    %3220 = vmatpush.bf16.msra.mxu0 %v3064
    %3221 = vmatpush.bf16.msra.mxu0 %v3060
    %3222 = vmatpush.bf16.msra.mxu0 %v3056
    %3223 = vmatmul.bf16.gmra.mxu0 %v2755
    %v3224 = vpop.f32.mrf.mxu0
    %v3225 = vadd.f32 %v3212, %v3224
    %v3226 = vpop.f32.mrf.mxu0
    %3227 = vdwg.mxu0
    %3228 = vmatpush.bf16.msra.mxu0 %v3053
    %3229 = vmatpush.bf16.msra.mxu0 %v3049
    %3230 = vmatpush.bf16.msra.mxu0 %v3045
    %3231 = vmatpush.bf16.msra.mxu0 %v3041
    %3232 = vmatpush.bf16.msra.mxu0 %v3037
    %3233 = vmatpush.bf16.msra.mxu0 %v3033
    %3234 = vmatpush.bf16.msra.mxu0 %v3029
    %3235 = vmatpush.bf16.msra.mxu0 %v3025
    %3236 = vmatmul.bf16.gmra.mxu0 %v2754
    %v3237 = vpop.f32.mrf.mxu0
    %v3238 = vadd.f32 %v2825, %v3237
    %v3239 = vpop.f32.mrf.mxu0
    %3240 = vdwg.mxu0
    %3241 = vmatpush.bf16.msra.mxu0 %v3085
    %3242 = vmatpush.bf16.msra.mxu0 %v3081
    %3243 = vmatpush.bf16.msra.mxu0 %v3077
    %3244 = vmatpush.bf16.msra.mxu0 %v3073
    %3245 = vmatpush.bf16.msra.mxu0 %v3069
    %3246 = vmatpush.bf16.msra.mxu0 %v3065
    %3247 = vmatpush.bf16.msra.mxu0 %v3061
    %3248 = vmatpush.bf16.msra.mxu0 %v3057
    %3249 = vmatmul.bf16.gmra.mxu0 %v2755
    %v3250 = vpop.f32.mrf.mxu0
    %v3251 = vadd.f32 %v3238, %v3250
    %v3252 = vpop.f32.mrf.mxu0
    %3253 = vdwg.mxu0
    %v3254 = vmax.f32 %v3173, 0.0
    %v3255 = vmax.f32 %v3199, 0.0
    %v3256 = vmax.f32 %v3225, 0.0
    %v3257 = vmax.f32 %v3251, 0.0
    %v3258 = vpack.c.bf16 %v3254, %v3254
    %v3259 = vpack.c.bf16 %v3255, %v3255
    %v3260 = vpack.c.bf16 %v3256, %v3256
    %v3261 = vpack.c.bf16 %v3257, %v3257
    %v3262 = vld [vmem:[#allocation9] sm:$0xff]
    %v3263 = vld [vmem:[#allocation9 + $0x8] sm:$0xff]
    %v3264 = vld [vmem:[#allocation9 + $0x10] sm:$0xff]
    %v3265 = vld [vmem:[#allocation9 + $0x18] sm:$0xf]
    %v3266 = vld [vmem:[#allocation9 + $0x1c] sm:$0xff]
    %v3267 = vld [vmem:[#allocation9 + $0x24] sm:$0xff]
    %v3268 = vld [vmem:[#allocation9 + $0x2c] sm:$0xff]
    %v3269 = vld [vmem:[#allocation9 + $0x34] sm:$0xf]
    %v3270 = vld [vmem:[#allocation9 + $0x38] sm:$0xff]
    %v3271 = vld [vmem:[#allocation9 + $0x40] sm:$0xff]
    %v3272 = vld [vmem:[#allocation9 + $0x48] sm:$0xff]
    %v3273 = vld [vmem:[#allocation9 + $0x50] sm:$0xf]
    %v3274 = vld [vmem:[#allocation9 + $0x54] sm:$0xff]
    %v3275 = vld [vmem:[#allocation9 + $0x5c] sm:$0xff]
    %v3276 = vld [vmem:[#allocation9 + $0x64] sm:$0xff]
    %v3277 = vld [vmem:[#allocation9 + $0x6c] sm:$0xf]
    %v3278 = vld [vmem:[#allocation9 + $0x70] sm:$0xff]
    %v3279 = vld [vmem:[#allocation9 + $0x78] sm:$0xff]
    %v3280 = vld [vmem:[#allocation9 + $0x80] sm:$0xff]
    %v3281 = vld [vmem:[#allocation9 + $0x88] sm:$0xf]
    %v3282 = vld [vmem:[#allocation9 + $0x8c] sm:$0xff]
    %v3283 = vld [vmem:[#allocation9 + $0x94] sm:$0xff]
    %v3284 = vld [vmem:[#allocation9 + $0x9c] sm:$0xff]
    %v3285 = vld [vmem:[#allocation9 + $0xa4] sm:$0xf]
    %v3286 = vld [vmem:[#allocation9 + $0xa8] sm:$0xff]
    %v3287 = vld [vmem:[#allocation9 + $0xb0] sm:$0xff]
    %v3288 = vld [vmem:[#allocation9 + $0xb8] sm:$0xff]
    %v3289 = vld [vmem:[#allocation9 + $0xc0] sm:$0xf]
    %v3290 = vld [vmem:[#allocation9 + $0xc4] sm:$0xff]
    %v3291 = vld [vmem:[#allocation9 + $0xcc] sm:$0xff]
    %v3292 = vld [vmem:[#allocation9 + $0xd4] sm:$0xff]
    %v3293 = vld [vmem:[#allocation9 + $0xdc] sm:$0xf]
    %v3294 = vld [vmem:[#allocation9 + $0xe0] sm:$0xff]
    %v3295 = vld [vmem:[#allocation9 + $0xe8] sm:$0xff]
    %v3296 = vld [vmem:[#allocation9 + $0xf0] sm:$0xff]
    %v3297 = vld [vmem:[#allocation9 + $0xf8] sm:$0xf]
    %v3298 = vld [vmem:[#allocation9 + $0xfc] sm:$0xff]
    %v3299 = vld [vmem:[#allocation9 + $0x104] sm:$0xff]
    %v3300 = vld [vmem:[#allocation9 + $0x10c] sm:$0xff]
    %v3301 = vld [vmem:[#allocation9 + $0x114] sm:$0xf]
    %v3302 = vld [vmem:[#allocation9 + $0x118] sm:$0xff]
    %v3303 = vld [vmem:[#allocation9 + $0x120] sm:$0xff]
    %v3304 = vld [vmem:[#allocation9 + $0x128] sm:$0xff]
    %v3305 = vld [vmem:[#allocation9 + $0x130] sm:$0xf]
    %v3306 = vld [vmem:[#allocation9 + $0x134] sm:$0xff]
    %v3307 = vld [vmem:[#allocation9 + $0x13c] sm:$0xff]
    %v3308 = vld [vmem:[#allocation9 + $0x144] sm:$0xff]
    %v3309 = vld [vmem:[#allocation9 + $0x14c] sm:$0xf]
    %v3310 = vld [vmem:[#allocation9 + $0x150] sm:$0xff]
    %v3311 = vld [vmem:[#allocation9 + $0x158] sm:$0xff]
    %v3312 = vld [vmem:[#allocation9 + $0x160] sm:$0xff]
    %v3313 = vld [vmem:[#allocation9 + $0x168] sm:$0xf]
    %v3314 = vld [vmem:[#allocation9 + $0x16c] sm:$0xff]
    %v3315 = vld [vmem:[#allocation9 + $0x174] sm:$0xff]
    %v3316 = vld [vmem:[#allocation9 + $0x17c] sm:$0xff]
    %v3317 = vld [vmem:[#allocation9 + $0x184] sm:$0xf]
    %v3318 = vld [vmem:[#allocation9 + $0x188] sm:$0xff]
    %v3319 = vld [vmem:[#allocation9 + $0x190] sm:$0xff]
    %v3320 = vld [vmem:[#allocation9 + $0x198] sm:$0xff]
    %v3321 = vld [vmem:[#allocation9 + $0x1a0] sm:$0xf]
    %v3322 = vld [vmem:[#allocation9 + $0x1a4] sm:$0xff]
    %v3323 = vld [vmem:[#allocation9 + $0x1ac] sm:$0xff]
    %v3324 = vld [vmem:[#allocation9 + $0x1b4] sm:$0xff]
    %v3325 = vld [vmem:[#allocation9 + $0x1bc] sm:$0xf]
    %v3326 = vld [vmem:[#allocation9 + $0x1c0] sm:$0xff]
    %v3327 = vld [vmem:[#allocation9 + $0x1c8] sm:$0xff]
    %v3328 = vld [vmem:[#allocation9 + $0x1d0] sm:$0xff]
    %v3329 = vld [vmem:[#allocation9 + $0x1d8] sm:$0xf]
    %v3330 = vld [vmem:[#allocation9 + $0x1dc] sm:$0xff]
    %v3331 = vld [vmem:[#allocation9 + $0x1e4] sm:$0xff]
    %v3332 = vld [vmem:[#allocation9 + $0x1ec] sm:$0xff]
    %v3333 = vld [vmem:[#allocation9 + $0x1f4] sm:$0xf]
    %v3334 = vld [vmem:[#allocation9 + $0x1f8] sm:$0xff]
    %v3335 = vld [vmem:[#allocation9 + $0x200] sm:$0xff]
    %v3336 = vld [vmem:[#allocation9 + $0x208] sm:$0xff]
    %v3337 = vld [vmem:[#allocation9 + $0x210] sm:$0xf]
    %v3338 = vld [vmem:[#allocation9 + $0x214] sm:$0xff]
    %v3339 = vld [vmem:[#allocation9 + $0x21c] sm:$0xff]
    %v3340 = vld [vmem:[#allocation9 + $0x224] sm:$0xff]
    %v3341 = vld [vmem:[#allocation9 + $0x22c] sm:$0xf]
    %v3342 = vld [vmem:[#allocation9 + $0x230] sm:$0xff]
    %v3343 = vld [vmem:[#allocation9 + $0x238] sm:$0xff]
    %v3344 = vld [vmem:[#allocation9 + $0x240] sm:$0xff]
    %v3345 = vld [vmem:[#allocation9 + $0x248] sm:$0xf]
    %v3346 = vld [vmem:[#allocation9 + $0x24c] sm:$0xff]
    %v3347 = vld [vmem:[#allocation9 + $0x254] sm:$0xff]
    %v3348 = vld [vmem:[#allocation9 + $0x25c] sm:$0xff]
    %v3349 = vld [vmem:[#allocation9 + $0x264] sm:$0xf]
    %v3350 = vld [vmem:[#allocation9 + $0x268] sm:$0xff]
    %v3351 = vld [vmem:[#allocation9 + $0x270] sm:$0xff]
    %v3352 = vld [vmem:[#allocation9 + $0x278] sm:$0xff]
    %v3353 = vld [vmem:[#allocation9 + $0x280] sm:$0xf]
    %v3354 = vld [vmem:[#allocation9 + $0x284] sm:$0xff]
    %v3355 = vld [vmem:[#allocation9 + $0x28c] sm:$0xff]
    %v3356 = vld [vmem:[#allocation9 + $0x294] sm:$0xff]
    %v3357 = vld [vmem:[#allocation9 + $0x29c] sm:$0xf]
    %v3358 = vld [vmem:[#allocation9 + $0x2a0] sm:$0xff]
    %v3359 = vld [vmem:[#allocation9 + $0x2a8] sm:$0xff]
    %v3360 = vld [vmem:[#allocation9 + $0x2b0] sm:$0xff]
    %v3361 = vld [vmem:[#allocation9 + $0x2b8] sm:$0xf]
    %v3362 = vld [vmem:[#allocation9 + $0x2bc] sm:$0xff]
    %v3363 = vld [vmem:[#allocation9 + $0x2c4] sm:$0xff]
    %v3364 = vld [vmem:[#allocation9 + $0x2cc] sm:$0xff]
    %v3365 = vld [vmem:[#allocation9 + $0x2d4] sm:$0xf]
    %v3366 = vld [vmem:[#allocation9 + $0x2d8] sm:$0xff]
    %v3367 = vld [vmem:[#allocation9 + $0x2e0] sm:$0xff]
    %v3368 = vld [vmem:[#allocation9 + $0x2e8] sm:$0xff]
    %v3369 = vld [vmem:[#allocation9 + $0x2f0] sm:$0xf]
    %v3370 = vld [vmem:[#allocation9 + $0x2f4] sm:$0xff]
    %v3371 = vld [vmem:[#allocation9 + $0x2fc] sm:$0xff]
    %v3372 = vld [vmem:[#allocation9 + $0x304] sm:$0xff]
    %v3373 = vld [vmem:[#allocation9 + $0x30c] sm:$0xf]
    %v3374 = vld [vmem:[#allocation9 + $0x310] sm:$0xff]
    %v3375 = vld [vmem:[#allocation9 + $0x318] sm:$0xff]
    %v3376 = vld [vmem:[#allocation9 + $0x320] sm:$0xff]
    %v3377 = vld [vmem:[#allocation9 + $0x328] sm:$0xf]
    %v3378 = vld [vmem:[#allocation9 + $0x32c] sm:$0xff]
    %v3379 = vld [vmem:[#allocation9 + $0x334] sm:$0xff]
    %v3380 = vld [vmem:[#allocation9 + $0x33c] sm:$0xff]
    %v3381 = vld [vmem:[#allocation9 + $0x344] sm:$0xf]
    %v3382 = vld [vmem:[#allocation9 + $0x348] sm:$0xff]
    %v3383 = vld [vmem:[#allocation9 + $0x350] sm:$0xff]
    %v3384 = vld [vmem:[#allocation9 + $0x358] sm:$0xff]
    %v3385 = vld [vmem:[#allocation9 + $0x360] sm:$0xf]
    %v3386 = vld [vmem:[#allocation9 + $0x364] sm:$0xff]
    %v3387 = vld [vmem:[#allocation9 + $0x36c] sm:$0xff]
    %v3388 = vld [vmem:[#allocation9 + $0x374] sm:$0xff]
    %v3389 = vld [vmem:[#allocation9 + $0x37c] sm:$0xf]
    %v3390 = vld [vmem:[#allocation9 + $0x380] sm:$0xff]
    %v3391 = vld [vmem:[#allocation9 + $0x388] sm:$0xff]
    %v3392 = vld [vmem:[#allocation9 + $0x390] sm:$0xff]
    %v3393 = vld [vmem:[#allocation9 + $0x398] sm:$0xf]
    %v3394 = vld [vmem:[#allocation9 + $0x39c] sm:$0xff]
    %v3395 = vld [vmem:[#allocation9 + $0x3a4] sm:$0xff]
    %v3396 = vld [vmem:[#allocation9 + $0x3ac] sm:$0xff]
    %v3397 = vld [vmem:[#allocation9 + $0x3b4] sm:$0xf]
    %v3398 = vld [vmem:[#allocation9 + $0x3b8] sm:$0xff]
    %v3399 = vld [vmem:[#allocation9 + $0x3c0] sm:$0xff]
    %v3400 = vld [vmem:[#allocation9 + $0x3c8] sm:$0xff]
    %v3401 = vld [vmem:[#allocation9 + $0x3d0] sm:$0xf]
    %v3402 = vld [vmem:[#allocation9 + $0x3d4] sm:$0xff]
    %v3403 = vld [vmem:[#allocation9 + $0x3dc] sm:$0xff]
    %v3404 = vld [vmem:[#allocation9 + $0x3e4] sm:$0xff]
    %v3405 = vld [vmem:[#allocation9 + $0x3ec] sm:$0xf]
    %v3406 = vld [vmem:[#allocation9 + $0x3f0] sm:$0xff]
    %v3407 = vld [vmem:[#allocation9 + $0x3f8] sm:$0xff]
    %v3408 = vld [vmem:[#allocation9 + $0x400] sm:$0xff]
    %v3409 = vld [vmem:[#allocation9 + $0x408] sm:$0xf]
    %v3410 = vld [vmem:[#allocation9 + $0x40c] sm:$0xff]
    %v3411 = vld [vmem:[#allocation9 + $0x414] sm:$0xff]
    %v3412 = vld [vmem:[#allocation9 + $0x41c] sm:$0xff]
    %v3413 = vld [vmem:[#allocation9 + $0x424] sm:$0xf]
    %v3414 = vld [vmem:[#allocation9 + $0x428] sm:$0xff]
    %v3415 = vld [vmem:[#allocation9 + $0x430] sm:$0xff]
    %v3416 = vld [vmem:[#allocation9 + $0x438] sm:$0xff]
    %v3417 = vld [vmem:[#allocation9 + $0x440] sm:$0xf]
    %v3418 = vld [vmem:[#allocation9 + $0x444] sm:$0xff]
    %v3419 = vld [vmem:[#allocation9 + $0x44c] sm:$0xff]
    %v3420 = vld [vmem:[#allocation9 + $0x454] sm:$0xff]
    %v3421 = vld [vmem:[#allocation9 + $0x45c] sm:$0xf]
    %v3422 = vld [vmem:[#allocation9 + $0x460] sm:$0xff]
    %v3423 = vld [vmem:[#allocation9 + $0x468] sm:$0xff]
    %v3424 = vld [vmem:[#allocation9 + $0x470] sm:$0xff]
    %v3425 = vld [vmem:[#allocation9 + $0x478] sm:$0xf]
    %v3426 = vld [vmem:[#allocation9 + $0x47c] sm:$0xff]
    %v3427 = vld [vmem:[#allocation9 + $0x484] sm:$0xff]
    %v3428 = vld [vmem:[#allocation9 + $0x48c] sm:$0xff]
    %v3429 = vld [vmem:[#allocation9 + $0x494] sm:$0xf]
    %v3430 = vld [vmem:[#allocation9 + $0x498] sm:$0xff]
    %v3431 = vld [vmem:[#allocation9 + $0x4a0] sm:$0xff]
    %v3432 = vld [vmem:[#allocation9 + $0x4a8] sm:$0xff]
    %v3433 = vld [vmem:[#allocation9 + $0x4b0] sm:$0xf]
    %v3434 = vld [vmem:[#allocation9 + $0x4b4] sm:$0xff]
    %v3435 = vld [vmem:[#allocation9 + $0x4bc] sm:$0xff]
    %v3436 = vld [vmem:[#allocation9 + $0x4c4] sm:$0xff]
    %v3437 = vld [vmem:[#allocation9 + $0x4cc] sm:$0xf]
    %v3438 = vld [vmem:[#allocation9 + $0x4d0] sm:$0xff]
    %v3439 = vld [vmem:[#allocation9 + $0x4d8] sm:$0xff]
    %v3440 = vld [vmem:[#allocation9 + $0x4e0] sm:$0xff]
    %v3441 = vld [vmem:[#allocation9 + $0x4e8] sm:$0xf]
    %v3442 = vld [vmem:[#allocation9 + $0x4ec] sm:$0xff]
    %v3443 = vld [vmem:[#allocation9 + $0x4f4] sm:$0xff]
    %v3444 = vld [vmem:[#allocation9 + $0x4fc] sm:$0xff]
    %v3445 = vld [vmem:[#allocation9 + $0x504] sm:$0xf]
    %v3446 = vld [vmem:[#allocation9 + $0x508] sm:$0xff]
    %v3447 = vld [vmem:[#allocation9 + $0x510] sm:$0xff]
    %v3448 = vld [vmem:[#allocation9 + $0x518] sm:$0xff]
    %v3449 = vld [vmem:[#allocation9 + $0x520] sm:$0xf]
    %v3450 = vld [vmem:[#allocation9 + $0x524] sm:$0xff]
    %v3451 = vld [vmem:[#allocation9 + $0x52c] sm:$0xff]
    %v3452 = vld [vmem:[#allocation9 + $0x534] sm:$0xff]
    %v3453 = vld [vmem:[#allocation9 + $0x53c] sm:$0xf]
    %v3454 = vld [vmem:[#allocation9 + $0x540] sm:$0xff]
    %v3455 = vld [vmem:[#allocation9 + $0x548] sm:$0xff]
    %v3456 = vld [vmem:[#allocation9 + $0x550] sm:$0xff]
    %v3457 = vld [vmem:[#allocation9 + $0x558] sm:$0xf]
    %v3458 = vld [vmem:[#allocation9 + $0x55c] sm:$0xff]
    %v3459 = vld [vmem:[#allocation9 + $0x564] sm:$0xff]
    %v3460 = vld [vmem:[#allocation9 + $0x56c] sm:$0xff]
    %v3461 = vld [vmem:[#allocation9 + $0x574] sm:$0xf]
    %v3462 = vld [vmem:[#allocation9 + $0x578] sm:$0xff]
    %v3463 = vld [vmem:[#allocation9 + $0x580] sm:$0xff]
    %v3464 = vld [vmem:[#allocation9 + $0x588] sm:$0xff]
    %v3465 = vld [vmem:[#allocation9 + $0x590] sm:$0xf]
    %v3466 = vld [vmem:[#allocation9 + $0x594] sm:$0xff]
    %v3467 = vld [vmem:[#allocation9 + $0x59c] sm:$0xff]
    %v3468 = vld [vmem:[#allocation9 + $0x5a4] sm:$0xff]
    %v3469 = vld [vmem:[#allocation9 + $0x5ac] sm:$0xf]
    %v3470 = vld [vmem:[#allocation9 + $0x5b0] sm:$0xff]
    %v3471 = vld [vmem:[#allocation9 + $0x5b8] sm:$0xff]
    %v3472 = vld [vmem:[#allocation9 + $0x5c0] sm:$0xff]
    %v3473 = vld [vmem:[#allocation9 + $0x5c8] sm:$0xf]
    %v3474 = vld [vmem:[#allocation9 + $0x5cc] sm:$0xff]
    %v3475 = vld [vmem:[#allocation9 + $0x5d4] sm:$0xff]
    %v3476 = vld [vmem:[#allocation9 + $0x5dc] sm:$0xff]
    %v3477 = vld [vmem:[#allocation9 + $0x5e4] sm:$0xf]
    %v3478 = vld [vmem:[#allocation9 + $0x5e8] sm:$0xff]
    %v3479 = vld [vmem:[#allocation9 + $0x5f0] sm:$0xff]
    %v3480 = vld [vmem:[#allocation9 + $0x5f8] sm:$0xff]
    %v3481 = vld [vmem:[#allocation9 + $0x600] sm:$0xf]
    %v3482 = vld [vmem:[#allocation9 + $0x604] sm:$0xff]
    %v3483 = vld [vmem:[#allocation9 + $0x60c] sm:$0xff]
    %v3484 = vld [vmem:[#allocation9 + $0x614] sm:$0xff]
    %v3485 = vld [vmem:[#allocation9 + $0x61c] sm:$0xf]
    %v3486 = vld [vmem:[#allocation9 + $0x620] sm:$0xff]
    %v3487 = vld [vmem:[#allocation9 + $0x628] sm:$0xff]
    %v3488 = vld [vmem:[#allocation9 + $0x630] sm:$0xff]
    %v3489 = vld [vmem:[#allocation9 + $0x638] sm:$0xf]
    %v3490 = vld [vmem:[#allocation9 + $0x63c] sm:$0xff]
    %v3491 = vld [vmem:[#allocation9 + $0x644] sm:$0xff]
    %v3492 = vld [vmem:[#allocation9 + $0x64c] sm:$0xff]
    %v3493 = vld [vmem:[#allocation9 + $0x654] sm:$0xf]
    %v3494 = vld [vmem:[#allocation9 + $0x658] sm:$0xff]
    %v3495 = vld [vmem:[#allocation9 + $0x660] sm:$0xff]
    %v3496 = vld [vmem:[#allocation9 + $0x668] sm:$0xff]
    %v3497 = vld [vmem:[#allocation9 + $0x670] sm:$0xf]
    %v3498 = vld [vmem:[#allocation9 + $0x674] sm:$0xff]
    %v3499 = vld [vmem:[#allocation9 + $0x67c] sm:$0xff]
    %v3500 = vld [vmem:[#allocation9 + $0x684] sm:$0xff]
    %v3501 = vld [vmem:[#allocation9 + $0x68c] sm:$0xf]
    %v3502 = vld [vmem:[#allocation9 + $0x690] sm:$0xff]
    %v3503 = vld [vmem:[#allocation9 + $0x698] sm:$0xff]
    %v3504 = vld [vmem:[#allocation9 + $0x6a0] sm:$0xff]
    %v3505 = vld [vmem:[#allocation9 + $0x6a8] sm:$0xf]
    %v3506 = vld [vmem:[#allocation9 + $0x6ac] sm:$0xff]
    %v3507 = vld [vmem:[#allocation9 + $0x6b4] sm:$0xff]
    %v3508 = vld [vmem:[#allocation9 + $0x6bc] sm:$0xff]
    %v3509 = vld [vmem:[#allocation9 + $0x6c4] sm:$0xf]
    %v3510 = vld [vmem:[#allocation9 + $0x6c8] sm:$0xff]
    %v3511 = vld [vmem:[#allocation9 + $0x6d0] sm:$0xff]
    %v3512 = vld [vmem:[#allocation9 + $0x6d8] sm:$0xff]
    %v3513 = vld [vmem:[#allocation9 + $0x6e0] sm:$0xf]
    %v3514 = vld [vmem:[#allocation9 + $0x6e4] sm:$0xff]
    %v3515 = vld [vmem:[#allocation9 + $0x6ec] sm:$0xff]
    %v3516 = vld [vmem:[#allocation9 + $0x6f4] sm:$0xff]
    %v3517 = vld [vmem:[#allocation9 + $0x6fc] sm:$0xf]
    %v3518 = vld [vmem:[%s13] sm:$0xff]
    %v3520 = vperm.slane %v3518, 0
    %v3521 = vperm.slane %v3518, 1
    %v3522 = vperm.slane %v3518, 2
    %v3523 = vperm.slane %v3518, 3
    %v3524 = vperm.slane %v3518, 4
    %v3525 = vperm.slane %v3518, 5
    %v3526 = vperm.slane %v3518, 6
    %v3790 = vunpack.c.l.b16 %v3262
    %v3791 = vunpack.c.h.b16 %v3262
    %v3792 = vunpack.c.l.b16 %v3263
    %v3793 = vunpack.c.h.b16 %v3263
    %v3794 = vunpack.c.l.b16 %v3264
    %v3795 = vunpack.c.h.b16 %v3264
    %v3796 = vunpack.c.l.b16 %v3265
    %v3797 = vunpack.c.l.b16 %v3266
    %v3798 = vunpack.c.h.b16 %v3266
    %v3799 = vunpack.c.l.b16 %v3267
    %v3800 = vunpack.c.h.b16 %v3267
    %v3801 = vunpack.c.l.b16 %v3268
    %v3802 = vunpack.c.h.b16 %v3268
    %v3803 = vunpack.c.l.b16 %v3269
    %v3804 = vunpack.c.l.b16 %v3270
    %v3805 = vunpack.c.h.b16 %v3270
    %v3806 = vunpack.c.l.b16 %v3271
    %v3807 = vunpack.c.h.b16 %v3271
    %v3808 = vunpack.c.l.b16 %v3272
    %v3809 = vunpack.c.h.b16 %v3272
    %v3810 = vunpack.c.l.b16 %v3273
    %v3811 = vunpack.c.l.b16 %v3274
    %v3812 = vunpack.c.h.b16 %v3274
    %v3813 = vunpack.c.l.b16 %v3275
    %v3814 = vunpack.c.h.b16 %v3275
    %v3815 = vunpack.c.l.b16 %v3276
    %v3816 = vunpack.c.h.b16 %v3276
    %v3817 = vunpack.c.l.b16 %v3277
    %v3818 = vunpack.c.l.b16 %v3278
    %v3819 = vunpack.c.h.b16 %v3278
    %v3820 = vunpack.c.l.b16 %v3279
    %v3821 = vunpack.c.h.b16 %v3279
    %v3822 = vunpack.c.l.b16 %v3280
    %v3823 = vunpack.c.h.b16 %v3280
    %v3824 = vunpack.c.l.b16 %v3281
    %v3825 = vunpack.c.l.b16 %v3282
    %v3826 = vunpack.c.h.b16 %v3282
    %v3827 = vunpack.c.l.b16 %v3283
    %v3828 = vunpack.c.h.b16 %v3283
    %v3829 = vunpack.c.l.b16 %v3284
    %v3830 = vunpack.c.h.b16 %v3284
    %v3831 = vunpack.c.l.b16 %v3285
    %v3832 = vunpack.c.l.b16 %v3286
    %v3833 = vunpack.c.h.b16 %v3286
    %v3834 = vunpack.c.l.b16 %v3287
    %v3835 = vunpack.c.h.b16 %v3287
    %v3836 = vunpack.c.l.b16 %v3288
    %v3837 = vunpack.c.h.b16 %v3288
    %v3838 = vunpack.c.l.b16 %v3289
    %v3839 = vunpack.c.l.b16 %v3290
    %v3840 = vunpack.c.h.b16 %v3290
    %v3841 = vunpack.c.l.b16 %v3291
    %v3842 = vunpack.c.h.b16 %v3291
    %v3843 = vunpack.c.l.b16 %v3292
    %v3844 = vunpack.c.h.b16 %v3292
    %v3845 = vunpack.c.l.b16 %v3293
    %v3846 = vunpack.c.l.b16 %v3294
    %v3847 = vunpack.c.h.b16 %v3294
    %v3848 = vunpack.c.l.b16 %v3295
    %v3849 = vunpack.c.h.b16 %v3295
    %v3850 = vunpack.c.l.b16 %v3296
    %v3851 = vunpack.c.h.b16 %v3296
    %v3852 = vunpack.c.l.b16 %v3297
    %v3853 = vunpack.c.l.b16 %v3298
    %v3854 = vunpack.c.h.b16 %v3298
    %v3855 = vunpack.c.l.b16 %v3299
    %v3856 = vunpack.c.h.b16 %v3299
    %v3857 = vunpack.c.l.b16 %v3300
    %v3858 = vunpack.c.h.b16 %v3300
    %v3859 = vunpack.c.l.b16 %v3301
    %v3860 = vunpack.c.l.b16 %v3302
    %v3861 = vunpack.c.h.b16 %v3302
    %v3862 = vunpack.c.l.b16 %v3303
    %v3863 = vunpack.c.h.b16 %v3303
    %v3864 = vunpack.c.l.b16 %v3304
    %v3865 = vunpack.c.h.b16 %v3304
    %v3866 = vunpack.c.l.b16 %v3305
    %v3867 = vunpack.c.l.b16 %v3306
    %v3868 = vunpack.c.h.b16 %v3306
    %v3869 = vunpack.c.l.b16 %v3307
    %v3870 = vunpack.c.h.b16 %v3307
    %v3871 = vunpack.c.l.b16 %v3308
    %v3872 = vunpack.c.h.b16 %v3308
    %v3873 = vunpack.c.l.b16 %v3309
    %v3874 = vunpack.c.l.b16 %v3310
    %v3875 = vunpack.c.h.b16 %v3310
    %v3876 = vunpack.c.l.b16 %v3311
    %v3877 = vunpack.c.h.b16 %v3311
    %v3878 = vunpack.c.l.b16 %v3312
    %v3879 = vunpack.c.h.b16 %v3312
    %v3880 = vunpack.c.l.b16 %v3313
    %v3881 = vunpack.c.l.b16 %v3314
    %v3882 = vunpack.c.h.b16 %v3314
    %v3883 = vunpack.c.l.b16 %v3315
    %v3884 = vunpack.c.h.b16 %v3315
    %v3885 = vunpack.c.l.b16 %v3316
    %v3886 = vunpack.c.h.b16 %v3316
    %v3887 = vunpack.c.l.b16 %v3317
    %v3888 = vunpack.c.l.b16 %v3318
    %v3889 = vunpack.c.h.b16 %v3318
    %v3890 = vunpack.c.l.b16 %v3319
    %v3891 = vunpack.c.h.b16 %v3319
    %v3892 = vunpack.c.l.b16 %v3320
    %v3893 = vunpack.c.h.b16 %v3320
    %v3894 = vunpack.c.l.b16 %v3321
    %v3895 = vunpack.c.l.b16 %v3322
    %v3896 = vunpack.c.h.b16 %v3322
    %v3897 = vunpack.c.l.b16 %v3323
    %v3898 = vunpack.c.h.b16 %v3323
    %v3899 = vunpack.c.l.b16 %v3324
    %v3900 = vunpack.c.h.b16 %v3324
    %v3901 = vunpack.c.l.b16 %v3325
    %v3902 = vunpack.c.l.b16 %v3326
    %v3903 = vunpack.c.h.b16 %v3326
    %v3904 = vunpack.c.l.b16 %v3327
    %v3905 = vunpack.c.h.b16 %v3327
    %v3906 = vunpack.c.l.b16 %v3328
    %v3907 = vunpack.c.h.b16 %v3328
    %v3908 = vunpack.c.l.b16 %v3329
    %v3909 = vunpack.c.l.b16 %v3330
    %v3910 = vunpack.c.h.b16 %v3330
    %v3911 = vunpack.c.l.b16 %v3331
    %v3912 = vunpack.c.h.b16 %v3331
    %v3913 = vunpack.c.l.b16 %v3332
    %v3914 = vunpack.c.h.b16 %v3332
    %v3915 = vunpack.c.l.b16 %v3333
    %v3916 = vunpack.c.l.b16 %v3334
    %v3917 = vunpack.c.h.b16 %v3334
    %v3918 = vunpack.c.l.b16 %v3335
    %v3919 = vunpack.c.h.b16 %v3335
    %v3920 = vunpack.c.l.b16 %v3336
    %v3921 = vunpack.c.h.b16 %v3336
    %v3922 = vunpack.c.l.b16 %v3337
    %v3923 = vunpack.c.l.b16 %v3338
    %v3924 = vunpack.c.h.b16 %v3338
    %v3925 = vunpack.c.l.b16 %v3339
    %v3926 = vunpack.c.h.b16 %v3339
    %v3927 = vunpack.c.l.b16 %v3340
    %v3928 = vunpack.c.h.b16 %v3340
    %v3929 = vunpack.c.l.b16 %v3341
    %v3930 = vunpack.c.l.b16 %v3342
    %v3931 = vunpack.c.h.b16 %v3342
    %v3932 = vunpack.c.l.b16 %v3343
    %v3933 = vunpack.c.h.b16 %v3343
    %v3934 = vunpack.c.l.b16 %v3344
    %v3935 = vunpack.c.h.b16 %v3344
    %v3936 = vunpack.c.l.b16 %v3345
    %v3937 = vunpack.c.l.b16 %v3346
    %v3938 = vunpack.c.h.b16 %v3346
    %v3939 = vunpack.c.l.b16 %v3347
    %v3940 = vunpack.c.h.b16 %v3347
    %v3941 = vunpack.c.l.b16 %v3348
    %v3942 = vunpack.c.h.b16 %v3348
    %v3943 = vunpack.c.l.b16 %v3349
    %v3944 = vunpack.c.l.b16 %v3350
    %v3945 = vunpack.c.h.b16 %v3350
    %v3946 = vunpack.c.l.b16 %v3351
    %v3947 = vunpack.c.h.b16 %v3351
    %v3948 = vunpack.c.l.b16 %v3352
    %v3949 = vunpack.c.h.b16 %v3352
    %v3950 = vunpack.c.l.b16 %v3353
    %v3951 = vunpack.c.l.b16 %v3354
    %v3952 = vunpack.c.h.b16 %v3354
    %v3953 = vunpack.c.l.b16 %v3355
    %v3954 = vunpack.c.h.b16 %v3355
    %v3955 = vunpack.c.l.b16 %v3356
    %v3956 = vunpack.c.h.b16 %v3356
    %v3957 = vunpack.c.l.b16 %v3357
    %v3958 = vunpack.c.l.b16 %v3358
    %v3959 = vunpack.c.h.b16 %v3358
    %v3960 = vunpack.c.l.b16 %v3359
    %v3961 = vunpack.c.h.b16 %v3359
    %v3962 = vunpack.c.l.b16 %v3360
    %v3963 = vunpack.c.h.b16 %v3360
    %v3964 = vunpack.c.l.b16 %v3361
    %v3965 = vunpack.c.l.b16 %v3362
    %v3966 = vunpack.c.h.b16 %v3362
    %v3967 = vunpack.c.l.b16 %v3363
    %v3968 = vunpack.c.h.b16 %v3363
    %v3969 = vunpack.c.l.b16 %v3364
    %v3970 = vunpack.c.h.b16 %v3364
    %v3971 = vunpack.c.l.b16 %v3365
    %v3972 = vunpack.c.l.b16 %v3366
    %v3973 = vunpack.c.h.b16 %v3366
    %v3974 = vunpack.c.l.b16 %v3367
    %v3975 = vunpack.c.h.b16 %v3367
    %v3976 = vunpack.c.l.b16 %v3368
    %v3977 = vunpack.c.h.b16 %v3368
    %v3978 = vunpack.c.l.b16 %v3369
    %v3979 = vunpack.c.l.b16 %v3370
    %v3980 = vunpack.c.h.b16 %v3370
    %v3981 = vunpack.c.l.b16 %v3371
    %v3982 = vunpack.c.h.b16 %v3371
    %v3983 = vunpack.c.l.b16 %v3372
    %v3984 = vunpack.c.h.b16 %v3372
    %v3985 = vunpack.c.l.b16 %v3373
    %v3986 = vunpack.c.l.b16 %v3374
    %v3987 = vunpack.c.h.b16 %v3374
    %v3988 = vunpack.c.l.b16 %v3375
    %v3989 = vunpack.c.h.b16 %v3375
    %v3990 = vunpack.c.l.b16 %v3376
    %v3991 = vunpack.c.h.b16 %v3376
    %v3992 = vunpack.c.l.b16 %v3377
    %v3993 = vunpack.c.l.b16 %v3378
    %v3994 = vunpack.c.h.b16 %v3378
    %v3995 = vunpack.c.l.b16 %v3379
    %v3996 = vunpack.c.h.b16 %v3379
    %v3997 = vunpack.c.l.b16 %v3380
    %v3998 = vunpack.c.h.b16 %v3380
    %v3999 = vunpack.c.l.b16 %v3381
    %v4000 = vunpack.c.l.b16 %v3382
    %v4001 = vunpack.c.h.b16 %v3382
    %v4002 = vunpack.c.l.b16 %v3383
    %v4003 = vunpack.c.h.b16 %v3383
    %v4004 = vunpack.c.l.b16 %v3384
    %v4005 = vunpack.c.h.b16 %v3384
    %v4006 = vunpack.c.l.b16 %v3385
    %v4007 = vunpack.c.l.b16 %v3386
    %v4008 = vunpack.c.h.b16 %v3386
    %v4009 = vunpack.c.l.b16 %v3387
    %v4010 = vunpack.c.h.b16 %v3387
    %v4011 = vunpack.c.l.b16 %v3388
    %v4012 = vunpack.c.h.b16 %v3388
    %v4013 = vunpack.c.l.b16 %v3389
    %v4014 = vunpack.c.l.b16 %v3390
    %v4015 = vunpack.c.h.b16 %v3390
    %v4016 = vunpack.c.l.b16 %v3391
    %v4017 = vunpack.c.h.b16 %v3391
    %v4018 = vunpack.c.l.b16 %v3392
    %v4019 = vunpack.c.h.b16 %v3392
    %v4020 = vunpack.c.l.b16 %v3393
    %v4021 = vunpack.c.l.b16 %v3394
    %v4022 = vunpack.c.h.b16 %v3394
    %v4023 = vunpack.c.l.b16 %v3395
    %v4024 = vunpack.c.h.b16 %v3395
    %v4025 = vunpack.c.l.b16 %v3396
    %v4026 = vunpack.c.h.b16 %v3396
    %v4027 = vunpack.c.l.b16 %v3397
    %v4028 = vunpack.c.l.b16 %v3398
    %v4029 = vunpack.c.h.b16 %v3398
    %v4030 = vunpack.c.l.b16 %v3399
    %v4031 = vunpack.c.h.b16 %v3399
    %v4032 = vunpack.c.l.b16 %v3400
    %v4033 = vunpack.c.h.b16 %v3400
    %v4034 = vunpack.c.l.b16 %v3401
    %v4035 = vunpack.c.l.b16 %v3402
    %v4036 = vunpack.c.h.b16 %v3402
    %v4037 = vunpack.c.l.b16 %v3403
    %v4038 = vunpack.c.h.b16 %v3403
    %v4039 = vunpack.c.l.b16 %v3404
    %v4040 = vunpack.c.h.b16 %v3404
    %v4041 = vunpack.c.l.b16 %v3405
    %v4042 = vunpack.c.l.b16 %v3406
    %v4043 = vunpack.c.h.b16 %v3406
    %v4044 = vunpack.c.l.b16 %v3407
    %v4045 = vunpack.c.h.b16 %v3407
    %v4046 = vunpack.c.l.b16 %v3408
    %v4047 = vunpack.c.h.b16 %v3408
    %v4048 = vunpack.c.l.b16 %v3409
    %v4049 = vunpack.c.l.b16 %v3410
    %v4050 = vunpack.c.h.b16 %v3410
    %v4051 = vunpack.c.l.b16 %v3411
    %v4052 = vunpack.c.h.b16 %v3411
    %v4053 = vunpack.c.l.b16 %v3412
    %v4054 = vunpack.c.h.b16 %v3412
    %v4055 = vunpack.c.l.b16 %v3413
    %v4056 = vunpack.c.l.b16 %v3414
    %v4057 = vunpack.c.h.b16 %v3414
    %v4058 = vunpack.c.l.b16 %v3415
    %v4059 = vunpack.c.h.b16 %v3415
    %v4060 = vunpack.c.l.b16 %v3416
    %v4061 = vunpack.c.h.b16 %v3416
    %v4062 = vunpack.c.l.b16 %v3417
    %v4063 = vunpack.c.l.b16 %v3418
    %v4064 = vunpack.c.h.b16 %v3418
    %v4065 = vunpack.c.l.b16 %v3419
    %v4066 = vunpack.c.h.b16 %v3419
    %v4067 = vunpack.c.l.b16 %v3420
    %v4068 = vunpack.c.h.b16 %v3420
    %v4069 = vunpack.c.l.b16 %v3421
    %v4070 = vunpack.c.l.b16 %v3422
    %v4071 = vunpack.c.h.b16 %v3422
    %v4072 = vunpack.c.l.b16 %v3423
    %v4073 = vunpack.c.h.b16 %v3423
    %v4074 = vunpack.c.l.b16 %v3424
    %v4075 = vunpack.c.h.b16 %v3424
    %v4076 = vunpack.c.l.b16 %v3425
    %v4077 = vunpack.c.l.b16 %v3426
    %v4078 = vunpack.c.h.b16 %v3426
    %v4079 = vunpack.c.l.b16 %v3427
    %v4080 = vunpack.c.h.b16 %v3427
    %v4081 = vunpack.c.l.b16 %v3428
    %v4082 = vunpack.c.h.b16 %v3428
    %v4083 = vunpack.c.l.b16 %v3429
    %v4084 = vunpack.c.l.b16 %v3430
    %v4085 = vunpack.c.h.b16 %v3430
    %v4086 = vunpack.c.l.b16 %v3431
    %v4087 = vunpack.c.h.b16 %v3431
    %v4088 = vunpack.c.l.b16 %v3432
    %v4089 = vunpack.c.h.b16 %v3432
    %v4090 = vunpack.c.l.b16 %v3433
    %v4091 = vunpack.c.l.b16 %v3434
    %v4092 = vunpack.c.h.b16 %v3434
    %v4093 = vunpack.c.l.b16 %v3435
    %v4094 = vunpack.c.h.b16 %v3435
    %v4095 = vunpack.c.l.b16 %v3436
    %v4096 = vunpack.c.h.b16 %v3436
    %v4097 = vunpack.c.l.b16 %v3437
    %v4098 = vunpack.c.l.b16 %v3438
    %v4099 = vunpack.c.h.b16 %v3438
    %v4100 = vunpack.c.l.b16 %v3439
    %v4101 = vunpack.c.h.b16 %v3439
    %v4102 = vunpack.c.l.b16 %v3440
    %v4103 = vunpack.c.h.b16 %v3440
    %v4104 = vunpack.c.l.b16 %v3441
    %v4105 = vunpack.c.l.b16 %v3442
    %v4106 = vunpack.c.h.b16 %v3442
    %v4107 = vunpack.c.l.b16 %v3443
    %v4108 = vunpack.c.h.b16 %v3443
    %v4109 = vunpack.c.l.b16 %v3444
    %v4110 = vunpack.c.h.b16 %v3444
    %v4111 = vunpack.c.l.b16 %v3445
    %v4112 = vunpack.c.l.b16 %v3446
    %v4113 = vunpack.c.h.b16 %v3446
    %v4114 = vunpack.c.l.b16 %v3447
    %v4115 = vunpack.c.h.b16 %v3447
    %v4116 = vunpack.c.l.b16 %v3448
    %v4117 = vunpack.c.h.b16 %v3448
    %v4118 = vunpack.c.l.b16 %v3449
    %v4119 = vunpack.c.l.b16 %v3450
    %v4120 = vunpack.c.h.b16 %v3450
    %v4121 = vunpack.c.l.b16 %v3451
    %v4122 = vunpack.c.h.b16 %v3451
    %v4123 = vunpack.c.l.b16 %v3452
    %v4124 = vunpack.c.h.b16 %v3452
    %v4125 = vunpack.c.l.b16 %v3453
    %v4126 = vunpack.c.l.b16 %v3454
    %v4127 = vunpack.c.h.b16 %v3454
    %v4128 = vunpack.c.l.b16 %v3455
    %v4129 = vunpack.c.h.b16 %v3455
    %v4130 = vunpack.c.l.b16 %v3456
    %v4131 = vunpack.c.h.b16 %v3456
    %v4132 = vunpack.c.l.b16 %v3457
    %v4133 = vunpack.c.l.b16 %v3458
    %v4134 = vunpack.c.h.b16 %v3458
    %v4135 = vunpack.c.l.b16 %v3459
    %v4136 = vunpack.c.h.b16 %v3459
    %v4137 = vunpack.c.l.b16 %v3460
    %v4138 = vunpack.c.h.b16 %v3460
    %v4139 = vunpack.c.l.b16 %v3461
    %v4140 = vunpack.c.l.b16 %v3462
    %v4141 = vunpack.c.h.b16 %v3462
    %v4142 = vunpack.c.l.b16 %v3463
    %v4143 = vunpack.c.h.b16 %v3463
    %v4144 = vunpack.c.l.b16 %v3464
    %v4145 = vunpack.c.h.b16 %v3464
    %v4146 = vunpack.c.l.b16 %v3465
    %v4147 = vunpack.c.l.b16 %v3466
    %v4148 = vunpack.c.h.b16 %v3466
    %v4149 = vunpack.c.l.b16 %v3467
    %v4150 = vunpack.c.h.b16 %v3467
    %v4151 = vunpack.c.l.b16 %v3468
    %v4152 = vunpack.c.h.b16 %v3468
    %v4153 = vunpack.c.l.b16 %v3469
    %v4154 = vunpack.c.l.b16 %v3470
    %v4155 = vunpack.c.h.b16 %v3470
    %v4156 = vunpack.c.l.b16 %v3471
    %v4157 = vunpack.c.h.b16 %v3471
    %v4158 = vunpack.c.l.b16 %v3472
    %v4159 = vunpack.c.h.b16 %v3472
    %v4160 = vunpack.c.l.b16 %v3473
    %v4161 = vunpack.c.l.b16 %v3474
    %v4162 = vunpack.c.h.b16 %v3474
    %v4163 = vunpack.c.l.b16 %v3475
    %v4164 = vunpack.c.h.b16 %v3475
    %v4165 = vunpack.c.l.b16 %v3476
    %v4166 = vunpack.c.h.b16 %v3476
    %v4167 = vunpack.c.l.b16 %v3477
    %v4168 = vunpack.c.l.b16 %v3478
    %v4169 = vunpack.c.h.b16 %v3478
    %v4170 = vunpack.c.l.b16 %v3479
    %v4171 = vunpack.c.h.b16 %v3479
    %v4172 = vunpack.c.l.b16 %v3480
    %v4173 = vunpack.c.h.b16 %v3480
    %v4174 = vunpack.c.l.b16 %v3481
    %v4175 = vunpack.c.l.b16 %v3482
    %v4176 = vunpack.c.h.b16 %v3482
    %v4177 = vunpack.c.l.b16 %v3483
    %v4178 = vunpack.c.h.b16 %v3483
    %v4179 = vunpack.c.l.b16 %v3484
    %v4180 = vunpack.c.h.b16 %v3484
    %v4181 = vunpack.c.l.b16 %v3485
    %v4182 = vunpack.c.l.b16 %v3486
    %v4183 = vunpack.c.h.b16 %v3486
    %v4184 = vunpack.c.l.b16 %v3487
    %v4185 = vunpack.c.h.b16 %v3487
    %v4186 = vunpack.c.l.b16 %v3488
    %v4187 = vunpack.c.h.b16 %v3488
    %v4188 = vunpack.c.l.b16 %v3489
    %v4189 = vunpack.c.l.b16 %v3490
    %v4190 = vunpack.c.h.b16 %v3490
    %v4191 = vunpack.c.l.b16 %v3491
    %v4192 = vunpack.c.h.b16 %v3491
    %v4193 = vunpack.c.l.b16 %v3492
    %v4194 = vunpack.c.h.b16 %v3492
    %v4195 = vunpack.c.l.b16 %v3493
    %v4196 = vunpack.c.l.b16 %v3494
    %v4197 = vunpack.c.h.b16 %v3494
    %v4198 = vunpack.c.l.b16 %v3495
    %v4199 = vunpack.c.h.b16 %v3495
    %v4200 = vunpack.c.l.b16 %v3496
    %v4201 = vunpack.c.h.b16 %v3496
    %v4202 = vunpack.c.l.b16 %v3497
    %v4203 = vunpack.c.l.b16 %v3498
    %v4204 = vunpack.c.h.b16 %v3498
    %v4205 = vunpack.c.l.b16 %v3499
    %v4206 = vunpack.c.h.b16 %v3499
    %v4207 = vunpack.c.l.b16 %v3500
    %v4208 = vunpack.c.h.b16 %v3500
    %v4209 = vunpack.c.l.b16 %v3501
    %v4210 = vunpack.c.l.b16 %v3502
    %v4211 = vunpack.c.h.b16 %v3502
    %v4212 = vunpack.c.l.b16 %v3503
    %v4213 = vunpack.c.h.b16 %v3503
    %v4214 = vunpack.c.l.b16 %v3504
    %v4215 = vunpack.c.h.b16 %v3504
    %v4216 = vunpack.c.l.b16 %v3505
    %v4217 = vunpack.c.l.b16 %v3506
    %v4218 = vunpack.c.h.b16 %v3506
    %v4219 = vunpack.c.l.b16 %v3507
    %v4220 = vunpack.c.h.b16 %v3507
    %v4221 = vunpack.c.l.b16 %v3508
    %v4222 = vunpack.c.h.b16 %v3508
    %v4223 = vunpack.c.l.b16 %v3509
    %v4224 = vunpack.c.l.b16 %v3510
    %v4225 = vunpack.c.h.b16 %v3510
    %v4226 = vunpack.c.l.b16 %v3511
    %v4227 = vunpack.c.h.b16 %v3511
    %v4228 = vunpack.c.l.b16 %v3512
    %v4229 = vunpack.c.h.b16 %v3512
    %v4230 = vunpack.c.l.b16 %v3513
    %v4231 = vunpack.c.l.b16 %v3514
    %v4232 = vunpack.c.h.b16 %v3514
    %v4233 = vunpack.c.l.b16 %v3515
    %v4234 = vunpack.c.h.b16 %v3515
    %v4235 = vunpack.c.l.b16 %v3516
    %v4236 = vunpack.c.h.b16 %v3516
    %v4237 = vunpack.c.l.b16 %v3517
    %v4238 = vpack.c.b16 %v3797, %v3790
    %v4239 = vpack.c.b16 %v3798, %v3791
    %v4240 = vpack.c.b16 %v3799, %v3792
    %v4241 = vpack.c.b16 %v3800, %v3793
    %v4242 = vpack.c.b16 %v3801, %v3794
    %v4243 = vpack.c.b16 %v3802, %v3795
    %v4244 = vpack.c.b16 %v3803, %v3796
    %v4245 = vpack.c.b16 %v3811, %v3804
    %v4246 = vpack.c.b16 %v3812, %v3805
    %v4247 = vpack.c.b16 %v3813, %v3806
    %v4248 = vpack.c.b16 %v3814, %v3807
    %v4249 = vpack.c.b16 %v3815, %v3808
    %v4250 = vpack.c.b16 %v3816, %v3809
    %v4251 = vpack.c.b16 %v3817, %v3810
    %v4252 = vpack.c.b16 %v3825, %v3818
    %v4253 = vpack.c.b16 %v3826, %v3819
    %v4254 = vpack.c.b16 %v3827, %v3820
    %v4255 = vpack.c.b16 %v3828, %v3821
    %v4256 = vpack.c.b16 %v3829, %v3822
    %v4257 = vpack.c.b16 %v3830, %v3823
    %v4258 = vpack.c.b16 %v3831, %v3824
    %v4259 = vpack.c.b16 %v3839, %v3832
    %v4260 = vpack.c.b16 %v3840, %v3833
    %v4261 = vpack.c.b16 %v3841, %v3834
    %v4262 = vpack.c.b16 %v3842, %v3835
    %v4263 = vpack.c.b16 %v3843, %v3836
    %v4264 = vpack.c.b16 %v3844, %v3837
    %v4265 = vpack.c.b16 %v3845, %v3838
    %v4266 = vpack.c.b16 %v3853, %v3846
    %v4267 = vpack.c.b16 %v3854, %v3847
    %v4268 = vpack.c.b16 %v3855, %v3848
    %v4269 = vpack.c.b16 %v3856, %v3849
    %v4270 = vpack.c.b16 %v3857, %v3850
    %v4271 = vpack.c.b16 %v3858, %v3851
    %v4272 = vpack.c.b16 %v3859, %v3852
    %v4273 = vpack.c.b16 %v3867, %v3860
    %v4274 = vpack.c.b16 %v3868, %v3861
    %v4275 = vpack.c.b16 %v3869, %v3862
    %v4276 = vpack.c.b16 %v3870, %v3863
    %v4277 = vpack.c.b16 %v3871, %v3864
    %v4278 = vpack.c.b16 %v3872, %v3865
    %v4279 = vpack.c.b16 %v3873, %v3866
    %v4280 = vpack.c.b16 %v3881, %v3874
    %v4281 = vpack.c.b16 %v3882, %v3875
    %v4282 = vpack.c.b16 %v3883, %v3876
    %v4283 = vpack.c.b16 %v3884, %v3877
    %v4284 = vpack.c.b16 %v3885, %v3878
    %v4285 = vpack.c.b16 %v3886, %v3879
    %v4286 = vpack.c.b16 %v3887, %v3880
    %v4287 = vpack.c.b16 %v3895, %v3888
    %v4288 = vpack.c.b16 %v3896, %v3889
    %v4289 = vpack.c.b16 %v3897, %v3890
    %v4290 = vpack.c.b16 %v3898, %v3891
    %v4291 = vpack.c.b16 %v3899, %v3892
    %v4292 = vpack.c.b16 %v3900, %v3893
    %v4293 = vpack.c.b16 %v3901, %v3894
    %v4294 = vpack.c.b16 %v3909, %v3902
    %v4295 = vpack.c.b16 %v3910, %v3903
    %v4296 = vpack.c.b16 %v3911, %v3904
    %v4297 = vpack.c.b16 %v3912, %v3905
    %v4298 = vpack.c.b16 %v3913, %v3906
    %v4299 = vpack.c.b16 %v3914, %v3907
    %v4300 = vpack.c.b16 %v3915, %v3908
    %v4301 = vpack.c.b16 %v3923, %v3916
    %v4302 = vpack.c.b16 %v3924, %v3917
    %v4303 = vpack.c.b16 %v3925, %v3918
    %v4304 = vpack.c.b16 %v3926, %v3919
    %v4305 = vpack.c.b16 %v3927, %v3920
    %v4306 = vpack.c.b16 %v3928, %v3921
    %v4307 = vpack.c.b16 %v3929, %v3922
    %v4308 = vpack.c.b16 %v3937, %v3930
    %v4309 = vpack.c.b16 %v3938, %v3931
    %v4310 = vpack.c.b16 %v3939, %v3932
    %v4311 = vpack.c.b16 %v3940, %v3933
    %v4312 = vpack.c.b16 %v3941, %v3934
    %v4313 = vpack.c.b16 %v3942, %v3935
    %v4314 = vpack.c.b16 %v3943, %v3936
    %v4315 = vpack.c.b16 %v3951, %v3944
    %v4316 = vpack.c.b16 %v3952, %v3945
    %v4317 = vpack.c.b16 %v3953, %v3946
    %v4318 = vpack.c.b16 %v3954, %v3947
    %v4319 = vpack.c.b16 %v3955, %v3948
    %v4320 = vpack.c.b16 %v3956, %v3949
    %v4321 = vpack.c.b16 %v3957, %v3950
    %v4322 = vpack.c.b16 %v3965, %v3958
    %v4323 = vpack.c.b16 %v3966, %v3959
    %v4324 = vpack.c.b16 %v3967, %v3960
    %v4325 = vpack.c.b16 %v3968, %v3961
    %v4326 = vpack.c.b16 %v3969, %v3962
    %v4327 = vpack.c.b16 %v3970, %v3963
    %v4328 = vpack.c.b16 %v3971, %v3964
    %v4329 = vpack.c.b16 %v3979, %v3972
    %v4330 = vpack.c.b16 %v3980, %v3973
    %v4331 = vpack.c.b16 %v3981, %v3974
    %v4332 = vpack.c.b16 %v3982, %v3975
    %v4333 = vpack.c.b16 %v3983, %v3976
    %v4334 = vpack.c.b16 %v3984, %v3977
    %v4335 = vpack.c.b16 %v3985, %v3978
    %v4336 = vpack.c.b16 %v3993, %v3986
    %v4337 = vpack.c.b16 %v3994, %v3987
    %v4338 = vpack.c.b16 %v3995, %v3988
    %v4339 = vpack.c.b16 %v3996, %v3989
    %v4340 = vpack.c.b16 %v3997, %v3990
    %v4341 = vpack.c.b16 %v3998, %v3991
    %v4342 = vpack.c.b16 %v3999, %v3992
    %v4343 = vpack.c.b16 %v4007, %v4000
    %v4344 = vpack.c.b16 %v4008, %v4001
    %v4345 = vpack.c.b16 %v4009, %v4002
    %v4346 = vpack.c.b16 %v4010, %v4003
    %v4347 = vpack.c.b16 %v4011, %v4004
    %v4348 = vpack.c.b16 %v4012, %v4005
    %v4349 = vpack.c.b16 %v4013, %v4006
    %v4350 = vpack.c.b16 %v4021, %v4014
    %v4351 = vpack.c.b16 %v4022, %v4015
    %v4352 = vpack.c.b16 %v4023, %v4016
    %v4353 = vpack.c.b16 %v4024, %v4017
    %v4354 = vpack.c.b16 %v4025, %v4018
    %v4355 = vpack.c.b16 %v4026, %v4019
    %v4356 = vpack.c.b16 %v4027, %v4020
    %v4357 = vpack.c.b16 %v4035, %v4028
    %v4358 = vpack.c.b16 %v4036, %v4029
    %v4359 = vpack.c.b16 %v4037, %v4030
    %v4360 = vpack.c.b16 %v4038, %v4031
    %v4361 = vpack.c.b16 %v4039, %v4032
    %v4362 = vpack.c.b16 %v4040, %v4033
    %v4363 = vpack.c.b16 %v4041, %v4034
    %v4364 = vpack.c.b16 %v4049, %v4042
    %v4365 = vpack.c.b16 %v4050, %v4043
    %v4366 = vpack.c.b16 %v4051, %v4044
    %v4367 = vpack.c.b16 %v4052, %v4045
    %v4368 = vpack.c.b16 %v4053, %v4046
    %v4369 = vpack.c.b16 %v4054, %v4047
    %v4370 = vpack.c.b16 %v4055, %v4048
    %v4371 = vpack.c.b16 %v4063, %v4056
    %v4372 = vpack.c.b16 %v4064, %v4057
    %v4373 = vpack.c.b16 %v4065, %v4058
    %v4374 = vpack.c.b16 %v4066, %v4059
    %v4375 = vpack.c.b16 %v4067, %v4060
    %v4376 = vpack.c.b16 %v4068, %v4061
    %v4377 = vpack.c.b16 %v4069, %v4062
    %v4378 = vpack.c.b16 %v4077, %v4070
    %v4379 = vpack.c.b16 %v4078, %v4071
    %v4380 = vpack.c.b16 %v4079, %v4072
    %v4381 = vpack.c.b16 %v4080, %v4073
    %v4382 = vpack.c.b16 %v4081, %v4074
    %v4383 = vpack.c.b16 %v4082, %v4075
    %v4384 = vpack.c.b16 %v4083, %v4076
    %v4385 = vpack.c.b16 %v4091, %v4084
    %v4386 = vpack.c.b16 %v4092, %v4085
    %v4387 = vpack.c.b16 %v4093, %v4086
    %v4388 = vpack.c.b16 %v4094, %v4087
    %v4389 = vpack.c.b16 %v4095, %v4088
    %v4390 = vpack.c.b16 %v4096, %v4089
    %v4391 = vpack.c.b16 %v4097, %v4090
    %v4392 = vpack.c.b16 %v4105, %v4098
    %v4393 = vpack.c.b16 %v4106, %v4099
    %v4394 = vpack.c.b16 %v4107, %v4100
    %v4395 = vpack.c.b16 %v4108, %v4101
    %v4396 = vpack.c.b16 %v4109, %v4102
    %v4397 = vpack.c.b16 %v4110, %v4103
    %v4398 = vpack.c.b16 %v4111, %v4104
    %v4399 = vpack.c.b16 %v4119, %v4112
    %v4400 = vpack.c.b16 %v4120, %v4113
    %v4401 = vpack.c.b16 %v4121, %v4114
    %v4402 = vpack.c.b16 %v4122, %v4115
    %v4403 = vpack.c.b16 %v4123, %v4116
    %v4404 = vpack.c.b16 %v4124, %v4117
    %v4405 = vpack.c.b16 %v4125, %v4118
    %v4406 = vpack.c.b16 %v4133, %v4126
    %v4407 = vpack.c.b16 %v4134, %v4127
    %v4408 = vpack.c.b16 %v4135, %v4128
    %v4409 = vpack.c.b16 %v4136, %v4129
    %v4410 = vpack.c.b16 %v4137, %v4130
    %v4411 = vpack.c.b16 %v4138, %v4131
    %v4412 = vpack.c.b16 %v4139, %v4132
    %v4413 = vpack.c.b16 %v4147, %v4140
    %v4414 = vpack.c.b16 %v4148, %v4141
    %v4415 = vpack.c.b16 %v4149, %v4142
    %v4416 = vpack.c.b16 %v4150, %v4143
    %v4417 = vpack.c.b16 %v4151, %v4144
    %v4418 = vpack.c.b16 %v4152, %v4145
    %v4419 = vpack.c.b16 %v4153, %v4146
    %v4420 = vpack.c.b16 %v4161, %v4154
    %v4421 = vpack.c.b16 %v4162, %v4155
    %v4422 = vpack.c.b16 %v4163, %v4156
    %v4423 = vpack.c.b16 %v4164, %v4157
    %v4424 = vpack.c.b16 %v4165, %v4158
    %v4425 = vpack.c.b16 %v4166, %v4159
    %v4426 = vpack.c.b16 %v4167, %v4160
    %v4427 = vpack.c.b16 %v4175, %v4168
    %v4428 = vpack.c.b16 %v4176, %v4169
    %v4429 = vpack.c.b16 %v4177, %v4170
    %v4430 = vpack.c.b16 %v4178, %v4171
    %v4431 = vpack.c.b16 %v4179, %v4172
    %v4432 = vpack.c.b16 %v4180, %v4173
    %v4433 = vpack.c.b16 %v4181, %v4174
    %v4434 = vpack.c.b16 %v4189, %v4182
    %v4435 = vpack.c.b16 %v4190, %v4183
    %v4436 = vpack.c.b16 %v4191, %v4184
    %v4437 = vpack.c.b16 %v4192, %v4185
    %v4438 = vpack.c.b16 %v4193, %v4186
    %v4439 = vpack.c.b16 %v4194, %v4187
    %v4440 = vpack.c.b16 %v4195, %v4188
    %v4441 = vpack.c.b16 %v4203, %v4196
    %v4442 = vpack.c.b16 %v4204, %v4197
    %v4443 = vpack.c.b16 %v4205, %v4198
    %v4444 = vpack.c.b16 %v4206, %v4199
    %v4445 = vpack.c.b16 %v4207, %v4200
    %v4446 = vpack.c.b16 %v4208, %v4201
    %v4447 = vpack.c.b16 %v4209, %v4202
    %v4448 = vpack.c.b16 %v4217, %v4210
    %v4449 = vpack.c.b16 %v4218, %v4211
    %v4450 = vpack.c.b16 %v4219, %v4212
    %v4451 = vpack.c.b16 %v4220, %v4213
    %v4452 = vpack.c.b16 %v4221, %v4214
    %v4453 = vpack.c.b16 %v4222, %v4215
    %v4454 = vpack.c.b16 %v4223, %v4216
    %v4455 = vpack.c.b16 %v4231, %v4224
    %v4456 = vpack.c.b16 %v4232, %v4225
    %v4457 = vpack.c.b16 %v4233, %v4226
    %v4458 = vpack.c.b16 %v4234, %v4227
    %v4459 = vpack.c.b16 %v4235, %v4228
    %v4460 = vpack.c.b16 %v4236, %v4229
    %v4461 = vpack.c.b16 %v4237, %v4230
    %4686 = vmatpush.bf16.msra.mxu0 %v4287
    %4687 = vmatpush.bf16.msra.mxu0 %v4280
    %4688 = vmatpush.bf16.msra.mxu0 %v4273
    %4689 = vmatpush.bf16.msra.mxu0 %v4266
    %4690 = vmatpush.bf16.msra.mxu0 %v4259
    %4691 = vmatpush.bf16.msra.mxu0 %v4252
    %4692 = vmatpush.bf16.msra.mxu0 %v4245
    %4693 = vmatpush.bf16.msra.mxu0 %v4238
    %4694 = vmatmul.bf16.gmra.mxu0 %v3258
    %v4695 = vpop.f32.mrf.mxu0
    %v4696 = vadd.f32 %v3520, %v4695
    %v4697 = vpop.f32.mrf.mxu0
    %4698 = vdwg.mxu0
    %4699 = vmatpush.bf16.msra.mxu0 %v4343
    %4700 = vmatpush.bf16.msra.mxu0 %v4336
    %4701 = vmatpush.bf16.msra.mxu0 %v4329
    %4702 = vmatpush.bf16.msra.mxu0 %v4322
    %4703 = vmatpush.bf16.msra.mxu0 %v4315
    %4704 = vmatpush.bf16.msra.mxu0 %v4308
    %4705 = vmatpush.bf16.msra.mxu0 %v4301
    %4706 = vmatpush.bf16.msra.mxu0 %v4294
    %4707 = vmatmul.bf16.gmra.mxu0 %v3259
    %v4708 = vpop.f32.mrf.mxu0
    %v4709 = vadd.f32 %v4696, %v4708
    %v4710 = vpop.f32.mrf.mxu0
    %4711 = vdwg.mxu0
    %4712 = vmatpush.bf16.msra.mxu0 %v4399
    %4713 = vmatpush.bf16.msra.mxu0 %v4392
    %4714 = vmatpush.bf16.msra.mxu0 %v4385
    %4715 = vmatpush.bf16.msra.mxu0 %v4378
    %4716 = vmatpush.bf16.msra.mxu0 %v4371
    %4717 = vmatpush.bf16.msra.mxu0 %v4364
    %4718 = vmatpush.bf16.msra.mxu0 %v4357
    %4719 = vmatpush.bf16.msra.mxu0 %v4350
    %4720 = vmatmul.bf16.gmra.mxu0 %v3260
    %v4721 = vpop.f32.mrf.mxu0
    %v4722 = vadd.f32 %v4709, %v4721
    %v4723 = vpop.f32.mrf.mxu0
    %4724 = vdwg.mxu0
    %4725 = vmatpush.bf16.msra.mxu0 %v4455
    %4726 = vmatpush.bf16.msra.mxu0 %v4448
    %4727 = vmatpush.bf16.msra.mxu0 %v4441
    %4728 = vmatpush.bf16.msra.mxu0 %v4434
    %4729 = vmatpush.bf16.msra.mxu0 %v4427
    %4730 = vmatpush.bf16.msra.mxu0 %v4420
    %4731 = vmatpush.bf16.msra.mxu0 %v4413
    %4732 = vmatpush.bf16.msra.mxu0 %v4406
    %4733 = vmatmul.bf16.gmra.mxu0 %v3261
    %v4734 = vpop.f32.mrf.mxu0
    %v4735 = vadd.f32 %v4722, %v4734
    %v4736 = vpop.f32.mrf.mxu0
    %4737 = vdwg.mxu0
    %4738 = vmatpush.bf16.msra.mxu0 %v4288
    %4739 = vmatpush.bf16.msra.mxu0 %v4281
    %4740 = vmatpush.bf16.msra.mxu0 %v4274
    %4741 = vmatpush.bf16.msra.mxu0 %v4267
    %4742 = vmatpush.bf16.msra.mxu0 %v4260
    %4743 = vmatpush.bf16.msra.mxu0 %v4253
    %4744 = vmatpush.bf16.msra.mxu0 %v4246
    %4745 = vmatpush.bf16.msra.mxu0 %v4239
    %4746 = vmatmul.bf16.gmra.mxu0 %v3258
    %v4747 = vpop.f32.mrf.mxu0
    %v4748 = vadd.f32 %v3521, %v4747
    %v4749 = vpop.f32.mrf.mxu0
    %4750 = vdwg.mxu0
    %4751 = vmatpush.bf16.msra.mxu0 %v4344
    %4752 = vmatpush.bf16.msra.mxu0 %v4337
    %4753 = vmatpush.bf16.msra.mxu0 %v4330
    %4754 = vmatpush.bf16.msra.mxu0 %v4323
    %4755 = vmatpush.bf16.msra.mxu0 %v4316
    %4756 = vmatpush.bf16.msra.mxu0 %v4309
    %4757 = vmatpush.bf16.msra.mxu0 %v4302
    %4758 = vmatpush.bf16.msra.mxu0 %v4295
    %4759 = vmatmul.bf16.gmra.mxu0 %v3259
    %v4760 = vpop.f32.mrf.mxu0
    %v4761 = vadd.f32 %v4748, %v4760
    %v4762 = vpop.f32.mrf.mxu0
    %4763 = vdwg.mxu0
    %4764 = vmatpush.bf16.msra.mxu0 %v4400
    %4765 = vmatpush.bf16.msra.mxu0 %v4393
    %4766 = vmatpush.bf16.msra.mxu0 %v4386
    %4767 = vmatpush.bf16.msra.mxu0 %v4379
    %4768 = vmatpush.bf16.msra.mxu0 %v4372
    %4769 = vmatpush.bf16.msra.mxu0 %v4365
    %4770 = vmatpush.bf16.msra.mxu0 %v4358
    %4771 = vmatpush.bf16.msra.mxu0 %v4351
    %4772 = vmatmul.bf16.gmra.mxu0 %v3260
    %v4773 = vpop.f32.mrf.mxu0
    %v4774 = vadd.f32 %v4761, %v4773
    %v4775 = vpop.f32.mrf.mxu0
    %4776 = vdwg.mxu0
    %4777 = vmatpush.bf16.msra.mxu0 %v4456
    %4778 = vmatpush.bf16.msra.mxu0 %v4449
    %4779 = vmatpush.bf16.msra.mxu0 %v4442
    %4780 = vmatpush.bf16.msra.mxu0 %v4435
    %4781 = vmatpush.bf16.msra.mxu0 %v4428
    %4782 = vmatpush.bf16.msra.mxu0 %v4421
    %4783 = vmatpush.bf16.msra.mxu0 %v4414
    %4784 = vmatpush.bf16.msra.mxu0 %v4407
    %4785 = vmatmul.bf16.gmra.mxu0 %v3261
    %v4786 = vpop.f32.mrf.mxu0
    %v4787 = vadd.f32 %v4774, %v4786
    %v4788 = vpop.f32.mrf.mxu0
    %4789 = vdwg.mxu0
    %4790 = vmatpush.bf16.msra.mxu0 %v4289
    %4791 = vmatpush.bf16.msra.mxu0 %v4282
    %4792 = vmatpush.bf16.msra.mxu0 %v4275
    %4793 = vmatpush.bf16.msra.mxu0 %v4268
    %4794 = vmatpush.bf16.msra.mxu0 %v4261
    %4795 = vmatpush.bf16.msra.mxu0 %v4254
    %4796 = vmatpush.bf16.msra.mxu0 %v4247
    %4797 = vmatpush.bf16.msra.mxu0 %v4240
    %4798 = vmatmul.bf16.gmra.mxu0 %v3258
    %v4799 = vpop.f32.mrf.mxu0
    %v4800 = vadd.f32 %v3522, %v4799
    %v4801 = vpop.f32.mrf.mxu0
    %4802 = vdwg.mxu0
    %4803 = vmatpush.bf16.msra.mxu0 %v4345
    %4804 = vmatpush.bf16.msra.mxu0 %v4338
    %4805 = vmatpush.bf16.msra.mxu0 %v4331
    %4806 = vmatpush.bf16.msra.mxu0 %v4324
    %4807 = vmatpush.bf16.msra.mxu0 %v4317
    %4808 = vmatpush.bf16.msra.mxu0 %v4310
    %4809 = vmatpush.bf16.msra.mxu0 %v4303
    %4810 = vmatpush.bf16.msra.mxu0 %v4296
    %4811 = vmatmul.bf16.gmra.mxu0 %v3259
    %v4812 = vpop.f32.mrf.mxu0
    %v4813 = vadd.f32 %v4800, %v4812
    %v4814 = vpop.f32.mrf.mxu0
    %4815 = vdwg.mxu0
    %4816 = vmatpush.bf16.msra.mxu0 %v4401
    %4817 = vmatpush.bf16.msra.mxu0 %v4394
    %4818 = vmatpush.bf16.msra.mxu0 %v4387
    %4819 = vmatpush.bf16.msra.mxu0 %v4380
    %4820 = vmatpush.bf16.msra.mxu0 %v4373
    %4821 = vmatpush.bf16.msra.mxu0 %v4366
    %4822 = vmatpush.bf16.msra.mxu0 %v4359
    %4823 = vmatpush.bf16.msra.mxu0 %v4352
    %4824 = vmatmul.bf16.gmra.mxu0 %v3260
    %v4825 = vpop.f32.mrf.mxu0
    %v4826 = vadd.f32 %v4813, %v4825
    %v4827 = vpop.f32.mrf.mxu0
    %4828 = vdwg.mxu0
    %4829 = vmatpush.bf16.msra.mxu0 %v4457
    %4830 = vmatpush.bf16.msra.mxu0 %v4450
    %4831 = vmatpush.bf16.msra.mxu0 %v4443
    %4832 = vmatpush.bf16.msra.mxu0 %v4436
    %4833 = vmatpush.bf16.msra.mxu0 %v4429
    %4834 = vmatpush.bf16.msra.mxu0 %v4422
    %4835 = vmatpush.bf16.msra.mxu0 %v4415
    %4836 = vmatpush.bf16.msra.mxu0 %v4408
    %4837 = vmatmul.bf16.gmra.mxu0 %v3261
    %v4838 = vpop.f32.mrf.mxu0
    %v4839 = vadd.f32 %v4826, %v4838
    %v4840 = vpop.f32.mrf.mxu0
    %4841 = vdwg.mxu0
    %4842 = vmatpush.bf16.msra.mxu0 %v4290
    %4843 = vmatpush.bf16.msra.mxu0 %v4283
    %4844 = vmatpush.bf16.msra.mxu0 %v4276
    %4845 = vmatpush.bf16.msra.mxu0 %v4269
    %4846 = vmatpush.bf16.msra.mxu0 %v4262
    %4847 = vmatpush.bf16.msra.mxu0 %v4255
    %4848 = vmatpush.bf16.msra.mxu0 %v4248
    %4849 = vmatpush.bf16.msra.mxu0 %v4241
    %4850 = vmatmul.bf16.gmra.mxu0 %v3258
    %v4851 = vpop.f32.mrf.mxu0
    %v4852 = vadd.f32 %v3523, %v4851
    %v4853 = vpop.f32.mrf.mxu0
    %4854 = vdwg.mxu0
    %4855 = vmatpush.bf16.msra.mxu0 %v4346
    %4856 = vmatpush.bf16.msra.mxu0 %v4339
    %4857 = vmatpush.bf16.msra.mxu0 %v4332
    %4858 = vmatpush.bf16.msra.mxu0 %v4325
    %4859 = vmatpush.bf16.msra.mxu0 %v4318
    %4860 = vmatpush.bf16.msra.mxu0 %v4311
    %4861 = vmatpush.bf16.msra.mxu0 %v4304
    %4862 = vmatpush.bf16.msra.mxu0 %v4297
    %4863 = vmatmul.bf16.gmra.mxu0 %v3259
    %v4864 = vpop.f32.mrf.mxu0
    %v4865 = vadd.f32 %v4852, %v4864
    %v4866 = vpop.f32.mrf.mxu0
    %4867 = vdwg.mxu0
    %4868 = vmatpush.bf16.msra.mxu0 %v4402
    %4869 = vmatpush.bf16.msra.mxu0 %v4395
    %4870 = vmatpush.bf16.msra.mxu0 %v4388
    %4871 = vmatpush.bf16.msra.mxu0 %v4381
    %4872 = vmatpush.bf16.msra.mxu0 %v4374
    %4873 = vmatpush.bf16.msra.mxu0 %v4367
    %4874 = vmatpush.bf16.msra.mxu0 %v4360
    %4875 = vmatpush.bf16.msra.mxu0 %v4353
    %4876 = vmatmul.bf16.gmra.mxu0 %v3260
    %v4877 = vpop.f32.mrf.mxu0
    %v4878 = vadd.f32 %v4865, %v4877
    %v4879 = vpop.f32.mrf.mxu0
    %4880 = vdwg.mxu0
    %4881 = vmatpush.bf16.msra.mxu0 %v4458
    %4882 = vmatpush.bf16.msra.mxu0 %v4451
    %4883 = vmatpush.bf16.msra.mxu0 %v4444
    %4884 = vmatpush.bf16.msra.mxu0 %v4437
    %4885 = vmatpush.bf16.msra.mxu0 %v4430
    %4886 = vmatpush.bf16.msra.mxu0 %v4423
    %4887 = vmatpush.bf16.msra.mxu0 %v4416
    %4888 = vmatpush.bf16.msra.mxu0 %v4409
    %4889 = vmatmul.bf16.gmra.mxu0 %v3261
    %v4890 = vpop.f32.mrf.mxu0
    %v4891 = vadd.f32 %v4878, %v4890
    %v4892 = vpop.f32.mrf.mxu0
    %4893 = vdwg.mxu0
    %4894 = vmatpush.bf16.msra.mxu0 %v4291
    %4895 = vmatpush.bf16.msra.mxu0 %v4284
    %4896 = vmatpush.bf16.msra.mxu0 %v4277
    %4897 = vmatpush.bf16.msra.mxu0 %v4270
    %4898 = vmatpush.bf16.msra.mxu0 %v4263
    %4899 = vmatpush.bf16.msra.mxu0 %v4256
    %4900 = vmatpush.bf16.msra.mxu0 %v4249
    %4901 = vmatpush.bf16.msra.mxu0 %v4242
    %4902 = vmatmul.bf16.gmra.mxu0 %v3258
    %v4903 = vpop.f32.mrf.mxu0
    %v4904 = vadd.f32 %v3524, %v4903
    %v4905 = vpop.f32.mrf.mxu0
    %4906 = vdwg.mxu0
    %4907 = vmatpush.bf16.msra.mxu0 %v4347
    %4908 = vmatpush.bf16.msra.mxu0 %v4340
    %4909 = vmatpush.bf16.msra.mxu0 %v4333
    %4910 = vmatpush.bf16.msra.mxu0 %v4326
    %4911 = vmatpush.bf16.msra.mxu0 %v4319
    %4912 = vmatpush.bf16.msra.mxu0 %v4312
    %4913 = vmatpush.bf16.msra.mxu0 %v4305
    %4914 = vmatpush.bf16.msra.mxu0 %v4298
    %4915 = vmatmul.bf16.gmra.mxu0 %v3259
    %v4916 = vpop.f32.mrf.mxu0
    %v4917 = vadd.f32 %v4904, %v4916
    %v4918 = vpop.f32.mrf.mxu0
    %4919 = vdwg.mxu0
    %4920 = vmatpush.bf16.msra.mxu0 %v4403
    %4921 = vmatpush.bf16.msra.mxu0 %v4396
    %4922 = vmatpush.bf16.msra.mxu0 %v4389
    %4923 = vmatpush.bf16.msra.mxu0 %v4382
    %4924 = vmatpush.bf16.msra.mxu0 %v4375
    %4925 = vmatpush.bf16.msra.mxu0 %v4368
    %4926 = vmatpush.bf16.msra.mxu0 %v4361
    %4927 = vmatpush.bf16.msra.mxu0 %v4354
    %4928 = vmatmul.bf16.gmra.mxu0 %v3260
    %v4929 = vpop.f32.mrf.mxu0
    %v4930 = vadd.f32 %v4917, %v4929
    %v4931 = vpop.f32.mrf.mxu0
    %4932 = vdwg.mxu0
    %4933 = vmatpush.bf16.msra.mxu0 %v4459
    %4934 = vmatpush.bf16.msra.mxu0 %v4452
    %4935 = vmatpush.bf16.msra.mxu0 %v4445
    %4936 = vmatpush.bf16.msra.mxu0 %v4438
    %4937 = vmatpush.bf16.msra.mxu0 %v4431
    %4938 = vmatpush.bf16.msra.mxu0 %v4424
    %4939 = vmatpush.bf16.msra.mxu0 %v4417
    %4940 = vmatpush.bf16.msra.mxu0 %v4410
    %4941 = vmatmul.bf16.gmra.mxu0 %v3261
    %v4942 = vpop.f32.mrf.mxu0
    %v4943 = vadd.f32 %v4930, %v4942
    %v4944 = vpop.f32.mrf.mxu0
    %4945 = vdwg.mxu0
    %4946 = vmatpush.bf16.msra.mxu0 %v4292
    %4947 = vmatpush.bf16.msra.mxu0 %v4285
    %4948 = vmatpush.bf16.msra.mxu0 %v4278
    %4949 = vmatpush.bf16.msra.mxu0 %v4271
    %4950 = vmatpush.bf16.msra.mxu0 %v4264
    %4951 = vmatpush.bf16.msra.mxu0 %v4257
    %4952 = vmatpush.bf16.msra.mxu0 %v4250
    %4953 = vmatpush.bf16.msra.mxu0 %v4243
    %4954 = vmatmul.bf16.gmra.mxu0 %v3258
    %v4955 = vpop.f32.mrf.mxu0
    %v4956 = vadd.f32 %v3525, %v4955
    %v4957 = vpop.f32.mrf.mxu0
    %4958 = vdwg.mxu0
    %4959 = vmatpush.bf16.msra.mxu0 %v4348
    %4960 = vmatpush.bf16.msra.mxu0 %v4341
    %4961 = vmatpush.bf16.msra.mxu0 %v4334
    %4962 = vmatpush.bf16.msra.mxu0 %v4327
    %4963 = vmatpush.bf16.msra.mxu0 %v4320
    %4964 = vmatpush.bf16.msra.mxu0 %v4313
    %4965 = vmatpush.bf16.msra.mxu0 %v4306
    %4966 = vmatpush.bf16.msra.mxu0 %v4299
    %4967 = vmatmul.bf16.gmra.mxu0 %v3259
    %v4968 = vpop.f32.mrf.mxu0
    %v4969 = vadd.f32 %v4956, %v4968
    %v4970 = vpop.f32.mrf.mxu0
    %4971 = vdwg.mxu0
    %4972 = vmatpush.bf16.msra.mxu0 %v4404
    %4973 = vmatpush.bf16.msra.mxu0 %v4397
    %4974 = vmatpush.bf16.msra.mxu0 %v4390
    %4975 = vmatpush.bf16.msra.mxu0 %v4383
    %4976 = vmatpush.bf16.msra.mxu0 %v4376
    %4977 = vmatpush.bf16.msra.mxu0 %v4369
    %4978 = vmatpush.bf16.msra.mxu0 %v4362
    %4979 = vmatpush.bf16.msra.mxu0 %v4355
    %4980 = vmatmul.bf16.gmra.mxu0 %v3260
    %v4981 = vpop.f32.mrf.mxu0
    %v4982 = vadd.f32 %v4969, %v4981
    %v4983 = vpop.f32.mrf.mxu0
    %4984 = vdwg.mxu0
    %4985 = vmatpush.bf16.msra.mxu0 %v4460
    %4986 = vmatpush.bf16.msra.mxu0 %v4453
    %4987 = vmatpush.bf16.msra.mxu0 %v4446
    %4988 = vmatpush.bf16.msra.mxu0 %v4439
    %4989 = vmatpush.bf16.msra.mxu0 %v4432
    %4990 = vmatpush.bf16.msra.mxu0 %v4425
    %4991 = vmatpush.bf16.msra.mxu0 %v4418
    %4992 = vmatpush.bf16.msra.mxu0 %v4411
    %4993 = vmatmul.bf16.gmra.mxu0 %v3261
    %v4994 = vpop.f32.mrf.mxu0
    %v4995 = vadd.f32 %v4982, %v4994
    %v4996 = vpop.f32.mrf.mxu0
    %4997 = vdwg.mxu0
    %4998 = vmatpush.bf16.msra.mxu0 %v4293
    %4999 = vmatpush.bf16.msra.mxu0 %v4286
    %5000 = vmatpush.bf16.msra.mxu0 %v4279
    %5001 = vmatpush.bf16.msra.mxu0 %v4272
    %5002 = vmatpush.bf16.msra.mxu0 %v4265
    %5003 = vmatpush.bf16.msra.mxu0 %v4258
    %5004 = vmatpush.bf16.msra.mxu0 %v4251
    %5005 = vmatpush.bf16.msra.mxu0 %v4244
    %5006 = vmatmul.bf16.gmra.mxu0 %v3258
    %v5007 = vpop.f32.mrf.mxu0
    %v5008 = vadd.f32 %v3526, %v5007
    %v5009 = vpop.f32.mrf.mxu0
    %5010 = vdwg.mxu0
    %5011 = vmatpush.bf16.msra.mxu0 %v4349
    %5012 = vmatpush.bf16.msra.mxu0 %v4342
    %5013 = vmatpush.bf16.msra.mxu0 %v4335
    %5014 = vmatpush.bf16.msra.mxu0 %v4328
    %5015 = vmatpush.bf16.msra.mxu0 %v4321
    %5016 = vmatpush.bf16.msra.mxu0 %v4314
    %5017 = vmatpush.bf16.msra.mxu0 %v4307
    %5018 = vmatpush.bf16.msra.mxu0 %v4300
    %5019 = vmatmul.bf16.gmra.mxu0 %v3259
    %v5020 = vpop.f32.mrf.mxu0
    %v5021 = vadd.f32 %v5008, %v5020
    %v5022 = vpop.f32.mrf.mxu0
    %5023 = vdwg.mxu0
    %5024 = vmatpush.bf16.msra.mxu0 %v4405
    %5025 = vmatpush.bf16.msra.mxu0 %v4398
    %5026 = vmatpush.bf16.msra.mxu0 %v4391
    %5027 = vmatpush.bf16.msra.mxu0 %v4384
    %5028 = vmatpush.bf16.msra.mxu0 %v4377
    %5029 = vmatpush.bf16.msra.mxu0 %v4370
    %5030 = vmatpush.bf16.msra.mxu0 %v4363
    %5031 = vmatpush.bf16.msra.mxu0 %v4356
    %5032 = vmatmul.bf16.gmra.mxu0 %v3260
    %v5033 = vpop.f32.mrf.mxu0
    %v5034 = vadd.f32 %v5021, %v5033
    %v5035 = vpop.f32.mrf.mxu0
    %5036 = vdwg.mxu0
    %5037 = vmatpush.bf16.msra.mxu0 %v4461
    %5038 = vmatpush.bf16.msra.mxu0 %v4454
    %5039 = vmatpush.bf16.msra.mxu0 %v4447
    %5040 = vmatpush.bf16.msra.mxu0 %v4440
    %5041 = vmatpush.bf16.msra.mxu0 %v4433
    %5042 = vmatpush.bf16.msra.mxu0 %v4426
    %5043 = vmatpush.bf16.msra.mxu0 %v4419
    %5044 = vmatpush.bf16.msra.mxu0 %v4412
    %5045 = vmatmul.bf16.gmra.mxu0 %v3261
    %v5046 = vpop.f32.mrf.mxu0
    %v5047 = vadd.f32 %v5034, %v5046
    %v5048 = vpop.f32.mrf.mxu0
    %5049 = vdwg.mxu0
    %v5050 = vxor.u32 %v4735, 2147483648
    %v5051 = vxor.u32 %v4787, 2147483648
    %v5052 = vxor.u32 %v4839, 2147483648
    %v5053 = vxor.u32 %v4891, 2147483648
    %v5054 = vxor.u32 %v4943, 2147483648
    %v5055 = vxor.u32 %v4995, 2147483648
    %v5056 = vxor.u32 %v5047, 2147483648
    %v5057 = vmul.f32 %v5050, 1.442695
    %v5058 = vpow.pop %v5057
    %v5059 = vmul.f32 %v5051, 1.442695
    %v5060 = vpow.pop %v5059
    %v5061 = vmul.f32 %v5052, 1.442695
    %v5062 = vpow.pop %v5061
    %v5063 = vmul.f32 %v5053, 1.442695
    %v5064 = vpow.pop %v5063
    %v5065 = vmul.f32 %v5054, 1.442695
    %v5066 = vpow.pop %v5065
    %v5067 = vmul.f32 %v5055, 1.442695
    %v5068 = vpow.pop %v5067
    %v5069 = vmul.f32 %v5056, 1.442695
    %v5070 = vpow.pop %v5069
    %v5071 = vadd.f32 %v5058, 1.0
    %v5072 = vadd.f32 %v5060, 1.0
    %v5073 = vadd.f32 %v5062, 1.0
    %v5074 = vadd.f32 %v5064, 1.0
    %v5075 = vadd.f32 %v5066, 1.0
    %v5076 = vadd.f32 %v5068, 1.0
    %v5077 = vadd.f32 %v5070, 1.0
    %v5078 = vrcp.pop %v5071
    %v5079 = vmul.f32 %v5071, %v5078
    %v5080 = vsub.f32 1.0, %v5079
    %v5081 = vmul.f32 %v5078, %v5080
    %v5082 = vadd.f32 %v5078, %v5081
    %vm5083 = vweird.f32 %v5071
    %vm5084 = vweird.f32 %v5078
    %vm5085 = vmor %vm5083, %vm5084
    %v5086 = vsel %vm5085, %v5078, %v5082
    %v5087 = vand.u32 2147483647, %v5071
    %vm5088 = vcmp.eq.f32.partialorder %v5087, 8.507059e+37
    %v5089 = vand.u32 %v5071, 2147483648
    %v5090 = vor.u32 1.1754944e-38, %v5089
    %v5091 = vsel %vm5088, %v5090, %v5086
    %v5092 = vmul.f32 1.0, %v5091
    %v5093 = vrcp.pop %v5072
    %v5094 = vmul.f32 %v5072, %v5093
    %v5095 = vsub.f32 1.0, %v5094
    %v5096 = vmul.f32 %v5093, %v5095
    %v5097 = vadd.f32 %v5093, %v5096
    %vm5098 = vweird.f32 %v5072
    %vm5099 = vweird.f32 %v5093
    %vm5100 = vmor %vm5098, %vm5099
    %v5101 = vsel %vm5100, %v5093, %v5097
    %v5102 = vand.u32 2147483647, %v5072
    %vm5103 = vcmp.eq.f32.partialorder %v5102, 8.507059e+37
    %v5104 = vand.u32 %v5072, 2147483648
    %v5105 = vor.u32 1.1754944e-38, %v5104
    %v5106 = vsel %vm5103, %v5105, %v5101
    %v5107 = vmul.f32 1.0, %v5106
    %v5108 = vrcp.pop %v5073
    %v5109 = vmul.f32 %v5073, %v5108
    %v5110 = vsub.f32 1.0, %v5109
    %v5111 = vmul.f32 %v5108, %v5110
    %v5112 = vadd.f32 %v5108, %v5111
    %vm5113 = vweird.f32 %v5073
    %vm5114 = vweird.f32 %v5108
    %vm5115 = vmor %vm5113, %vm5114
    %v5116 = vsel %vm5115, %v5108, %v5112
    %v5117 = vand.u32 2147483647, %v5073
    %vm5118 = vcmp.eq.f32.partialorder %v5117, 8.507059e+37
    %v5119 = vand.u32 %v5073, 2147483648
    %v5120 = vor.u32 1.1754944e-38, %v5119
    %v5121 = vsel %vm5118, %v5120, %v5116
    %v5122 = vmul.f32 1.0, %v5121
    %v5123 = vrcp.pop %v5074
    %v5124 = vmul.f32 %v5074, %v5123
    %v5125 = vsub.f32 1.0, %v5124
    %v5126 = vmul.f32 %v5123, %v5125
    %v5127 = vadd.f32 %v5123, %v5126
    %vm5128 = vweird.f32 %v5074
    %vm5129 = vweird.f32 %v5123
    %vm5130 = vmor %vm5128, %vm5129
    %v5131 = vsel %vm5130, %v5123, %v5127
    %v5132 = vand.u32 2147483647, %v5074
    %vm5133 = vcmp.eq.f32.partialorder %v5132, 8.507059e+37
    %v5134 = vand.u32 %v5074, 2147483648
    %v5135 = vor.u32 1.1754944e-38, %v5134
    %v5136 = vsel %vm5133, %v5135, %v5131
    %v5137 = vmul.f32 1.0, %v5136
    %v5138 = vrcp.pop %v5075
    %v5139 = vmul.f32 %v5075, %v5138
    %v5140 = vsub.f32 1.0, %v5139
    %v5141 = vmul.f32 %v5138, %v5140
    %v5142 = vadd.f32 %v5138, %v5141
    %vm5143 = vweird.f32 %v5075
    %vm5144 = vweird.f32 %v5138
    %vm5145 = vmor %vm5143, %vm5144
    %v5146 = vsel %vm5145, %v5138, %v5142
    %v5147 = vand.u32 2147483647, %v5075
    %vm5148 = vcmp.eq.f32.partialorder %v5147, 8.507059e+37
    %v5149 = vand.u32 %v5075, 2147483648
    %v5150 = vor.u32 1.1754944e-38, %v5149
    %v5151 = vsel %vm5148, %v5150, %v5146
    %v5152 = vmul.f32 1.0, %v5151
    %v5153 = vrcp.pop %v5076
    %v5154 = vmul.f32 %v5076, %v5153
    %v5155 = vsub.f32 1.0, %v5154
    %v5156 = vmul.f32 %v5153, %v5155
    %v5157 = vadd.f32 %v5153, %v5156
    %vm5158 = vweird.f32 %v5076
    %vm5159 = vweird.f32 %v5153
    %vm5160 = vmor %vm5158, %vm5159
    %v5161 = vsel %vm5160, %v5153, %v5157
    %v5162 = vand.u32 2147483647, %v5076
    %vm5163 = vcmp.eq.f32.partialorder %v5162, 8.507059e+37
    %v5164 = vand.u32 %v5076, 2147483648
    %v5165 = vor.u32 1.1754944e-38, %v5164
    %v5166 = vsel %vm5163, %v5165, %v5161
    %v5167 = vmul.f32 1.0, %v5166
    %v5168 = vrcp.pop %v5077
    %v5169 = vmul.f32 %v5077, %v5168
    %v5170 = vsub.f32 1.0, %v5169
    %v5171 = vmul.f32 %v5168, %v5170
    %v5172 = vadd.f32 %v5168, %v5171
    %vm5173 = vweird.f32 %v5077
    %vm5174 = vweird.f32 %v5168
    %vm5175 = vmor %vm5173, %vm5174
    %v5176 = vsel %vm5175, %v5168, %v5172
    %v5177 = vand.u32 2147483647, %v5077
    %vm5178 = vcmp.eq.f32.partialorder %v5177, 8.507059e+37
    %v5179 = vand.u32 %v5077, 2147483648
    %v5180 = vor.u32 1.1754944e-38, %v5179
    %v5181 = vsel %vm5178, %v5180, %v5176
    %v5182 = vmul.f32 1.0, %v5181
    %5183 = vst [vmem:[%s14] sm:$0xff] %v5092
    %5184 = vst [vmem:[%s14 + $0x8] sm:$0xff] %v5107
    %5185 = vst [vmem:[%s14 + $0x10] sm:$0xff] %v5122
    %5186 = vst [vmem:[%s14 + $0x18] sm:$0xff] %v5137
    %5187 = vst [vmem:[%s14 + $0x20] sm:$0xff] %v5152
    %5188 = vst [vmem:[%s14 + $0x28] sm:$0xff] %v5167
    %5189 = vst [vmem:[%s14 + $0x30] sm:$0xff] %v5182
    // Predicated region
    $region78: #{forward.1} parent=1 // pred_check
      _
    $region79: #{forward.1} parent=1 // pred_check_branch
      %5191 = sbr.rel (0) target = $region81
    $region80: #{forward.1} parent=1 // pred_region
      _
    $region81: #{forward.1} parent=1 // pred_fallthru
      _
    // Predicated region
    $region82: #{forward.1} parent=1 // pred_check
      _
    $region83: #{forward.1} parent=1 // pred_check_branch
      %5193 = sbr.rel (0) target = $region85
    $region84: #{forward.1} parent=1 // pred_region
      _
    $region85: #{forward.1} parent=1 // pred_fallthru
      _
    // Predicated region
    $region86: #{forward.1} parent=1 // pred_check
      _
    $region87: #{forward.1} parent=1 // pred_check_branch
      %5195 = sbr.rel (0) target = $region89
    $region88: #{forward.1} parent=1 // pred_region
      _
    $region89: #{forward.1} parent=1 // pred_fallthru
      _
    // Predicated region
    $region90: #{forward.1} parent=1 // pred_check
      _
    $region91: #{forward.1} parent=1 // pred_check_branch
      %5197 = sbr.rel (0) target = $region93
    $region92: #{forward.1} parent=1 // pred_region
      _
    $region93: #{forward.1} parent=1 // pred_fallthru
      _
    %5198 = vsyncpa [#allocation3], 1
    %5199 = vsyncpa [#allocation5], 1
    %5200 = vsyncpa [#allocation8], 1

</llo_original>
